<compile_context>
chip_gen: v7x
topology: tpu7x:2x2x1
jax: 0.10.0
libtpu: 0.0.40
codegen_flags: <defaults>
</compile_context>

<pallas_src>
import functools
import math

import jax
import jax.numpy as jnp
from jax import lax
from jax.experimental import pallas as pl
from jax.experimental.pallas import tpu as pltpu


def _pos_embed_kernel(ypos_ref, xpos_ref, o_ref, *, num_pos_feats, temperature):
    # Block shapes:
    #   ypos_ref, xpos_ref : (1, TILE)                  y/x position ramps (normalize folded in)
    #   o_ref              : (1, 2*num_pos_feats, TILE) lane-dense output tile
    npf = num_pos_feats

    # Per-channel inverse frequency and phase, shape (npf, 1), built from an iota so no
    # constant tensors are shipped/pipelined through VMEM every grid step.
    j = lax.broadcasted_iota(jnp.int32, (npf, 1), 0).astype(jnp.float32)
    j2 = jnp.floor(j * 0.5) * 2.0                                    # 2 * (j // 2)
    inv_dim_t = jnp.exp(j2 * (-math.log(float(temperature)) / float(npf)))
    phase = (j - j2) * (math.pi / 2.0)                               # 0 (even j) or pi/2 (odd j)

    ypos = ypos_ref[...]                                             # (1, TILE)
    xpos = xpos_ref[...]                                             # (1, TILE)

    # Interleaved sin/cos == sin(v + phase) because dim_t[2k] == dim_t[2k+1].
    o_ref[0, :npf, :] = jnp.sin(ypos * inv_dim_t + phase).astype(o_ref.dtype)
    o_ref[0, npf:, :] = jnp.sin(xpos * inv_dim_t + phase).astype(o_ref.dtype)


_LANE = 128
_MAX_BLOCK_BYTES = 4 * 1024 * 1024   # per-buffer output block (Pallas double-buffers it)


def position_embedding_sine(x, *, num_pos_feats=64, temperature=10000,
                            normalize=False, scale=None):
    """Pallas equivalent of PositionEmbeddingSine.forward(x) for a plain tensor x.

    x: (B, C, H, W) — only its shape is used (the mask is all-False on this path).
    returns: (B, 2*num_pos_feats, H, W) float32, matching the PyTorch module.
    """
    # TODO(synk): NestedTensor inputs with a real padding mask (data-dependent cumsum)
    # are not implemented; this covers the plain-Tensor (mask all-False) path only.
    if scale is not None and not normalize:
        raise ValueError("normalize should be True if scale is passed")
    if scale is None:
        scale = 2 * math.pi

    B, _, H, W = x.shape
    npf = num_pos_feats
    C2 = 2 * npf
    HW = H * W

    # Per-pixel (flattened h*W + w) position ramps with the normalization constants folded
    # in, so the kernel only does multiply-add + sine (no divides, no index math).
    y_ramp = jnp.arange(1, H + 1, dtype=jnp.float32)     # y_embed values (cumsum of ones)
    x_ramp = jnp.arange(1, W + 1, dtype=jnp.float32)     # x_embed values
    if normalize:
        eps = 1e-6
        y_ramp = y_ramp * (float(scale) / (H + eps))
        x_ramp = x_ramp * (float(scale) / (W + eps))
    ypos = jnp.broadcast_to(y_ramp[:, None], (H, W)).reshape(1, HW)
    xpos = jnp.broadcast_to(x_ramp[None, :], (H, W)).reshape(1, HW)

    # Lane tile: a multiple of 128 keeping the output block <= _MAX_BLOCK_BYTES,
    # or the full HW extent if it already fits (also handles HW not divisible by 128).
    cap = max(_LANE, (_MAX_BLOCK_BYTES // (C2 * 4)) // _LANE * _LANE)
    tile = HW if HW <= cap else cap
    n_tiles = pl.cdiv(HW, tile)

    kernel = functools.partial(_pos_embed_kernel,
                               num_pos_feats=npf, temperature=temperature)

    out_flat = pl.pallas_call(
        kernel,
        out_shape=jax.ShapeDtypeStruct((B, C2, HW), jnp.float32),
        grid=(B, n_tiles),
        in_specs=[
            pl.BlockSpec((1, tile), lambda b, t: (0, t)),
            pl.BlockSpec((1, tile), lambda b, t: (0, t)),
        ],
        out_specs=pl.BlockSpec((1, C2, tile), lambda b, t: (b, 0, t)),
        compiler_params=pltpu.CompilerParams(
            dimension_semantics=("parallel", "parallel")),
    )(ypos, xpos)

    # (B, C2, H*W) -> (B, C2, H, W): free minor-dim split, NOT a transpose.
    return out_flat.reshape(B, C2, H, W)


def _reference(x, *, num_pos_feats=64, temperature=10000, normalize=False, scale=None):
    """Pure-JAX reference mirroring the PyTorch code line by line (mask = zeros)."""
    if scale is None:
        scale = 2 * math.pi
    B, _, H, W = x.shape
    not_mask = jnp.ones((B, H, W), dtype=jnp.float32)
    y_embed = jnp.cumsum(not_mask, axis=1)
    x_embed = jnp.cumsum(not_mask, axis=2)
    if normalize:
        eps = 1e-6
        y_embed = y_embed / (y_embed[:, -1:, :] + eps) * scale
        x_embed = x_embed / (x_embed[:, :, -1:] + eps) * scale
    i = jnp.arange(num_pos_feats, dtype=jnp.float32)
    dim_t = float(temperature) ** (2.0 * jnp.floor(i / 2.0) / float(num_pos_feats))
    pos_x = x_embed[:, :, :, None] / dim_t
    pos_y = y_embed[:, :, :, None] / dim_t
    pos_x = jnp.stack((jnp.sin(pos_x[:, :, :, 0::2]), jnp.cos(pos_x[:, :, :, 1::2])),
                      axis=4).reshape(B, H, W, -1)
    pos_y = jnp.stack((jnp.sin(pos_y[:, :, :, 0::2]), jnp.cos(pos_y[:, :, :, 1::2])),
                      axis=4).reshape(B, H, W, -1)
    return jnp.transpose(jnp.concatenate((pos_y, pos_x), axis=3), (0, 3, 1, 2))


if __name__ == "__main__":
    key = jax.random.PRNGKey(0)
    # x values are irrelevant to the output (mask is all False) — only shape matters.
    x = jax.random.normal(key, (2, 4, 16, 16), dtype=jnp.float32)

    kwargs = dict(num_pos_feats=64, temperature=10000, normalize=True, scale=2 * math.pi)

    out = position_embedding_sine(x, **kwargs)
    out = jax.block_until_ready(out)

    ref = _reference(x, **kwargs)
    assert out.shape == (2, 128, 16, 16), out.shape
    max_err = float(jnp.max(jnp.abs(out - ref)))
    assert jnp.allclose(out, ref, atol=2e-5, rtol=1e-5), max_err

    print("KERNEL_OK")
</pallas_src>

<mosaic_0001>
module attributes {stable_mosaic.version = 11 : i64} {
  func.func @_pos_embed_kernel(%arg0: i32, %arg1: i32, %arg2: memref<1x256xf32, #tpu.memory_space<vmem>>, %arg3: memref<1x256xf32, #tpu.memory_space<vmem>>, %arg4: memref<1x128x256xf32, #tpu.memory_space<vmem>>) attributes {dimension_semantics = [#tpu.dimension_semantics<parallel>, #tpu.dimension_semantics<parallel>], iteration_bounds = array<i64: 2, 1>, scalar_prefetch = 0 : i64, scratch_operands = 0 : i64, tpu.core_type = #tpu.core_type<tc>, window_params = [{transform_indices = @transform_0, window_bounds = array<i64: 1, 256>}, {transform_indices = @transform_1, window_bounds = array<i64: 1, 256>}, {transform_indices = @transform_2, window_bounds = array<i64: 1, 128, 256>}]} {
    %0 = tpu.iota {dimensions = array<i32: 0>} : vector<64x1xi32>
    %1 = arith.sitofp %0 : vector<64x1xi32> to vector<64x1xf32>
    %cst = arith.constant 5.000000e-01 : f32
    %2 = vector.broadcast %cst : f32 to vector<64x1xf32>
    %3 = arith.mulf %1, %2 : vector<64x1xf32>
    %4 = math.floor %3 : vector<64x1xf32>
    %cst_0 = arith.constant 2.000000e+00 : f32
    %5 = vector.broadcast %cst_0 : f32 to vector<64x1xf32>
    %6 = arith.mulf %4, %5 : vector<64x1xf32>
    %cst_1 = arith.constant -0.14391157 : f32
    %7 = vector.broadcast %cst_1 : f32 to vector<64x1xf32>
    %8 = arith.mulf %6, %7 : vector<64x1xf32>
    %9 = math.exp %8 : vector<64x1xf32>
    %10 = arith.subf %1, %6 : vector<64x1xf32>
    %cst_2 = arith.constant 1.57079637 : f32
    %11 = vector.broadcast %cst_2 : f32 to vector<64x1xf32>
    %12 = arith.mulf %10, %11 : vector<64x1xf32>
    %c0 = arith.constant 0 : index
    %c0_3 = arith.constant 0 : index
    %13 = vector.load %arg2[%c0, %c0_3] : memref<1x256xf32, #tpu.memory_space<vmem>>, vector<1x256xf32>
    %c0_4 = arith.constant 0 : index
    %c0_5 = arith.constant 0 : index
    %14 = vector.load %arg3[%c0_4, %c0_5] : memref<1x256xf32, #tpu.memory_space<vmem>>, vector<1x256xf32>
    %15 = vector.broadcast %13 : vector<1x256xf32> to vector<64x256xf32>
    %16 = vector.broadcast %9 : vector<64x1xf32> to vector<64x256xf32>
    %17 = arith.mulf %15, %16 : vector<64x256xf32>
    %18 = vector.broadcast %12 : vector<64x1xf32> to vector<64x256xf32>
    %19 = arith.addf %17, %18 : vector<64x256xf32>
    %20 = math.sin %19 : vector<64x256xf32>
    %c0_6 = arith.constant 0 : index
    %c0_7 = arith.constant 0 : index
    %c0_8 = arith.constant 0 : index
    %21 = vector.load %arg4[%c0_6, %c0_7, %c0_8] : memref<1x128x256xf32, #tpu.memory_space<vmem>>, vector<1x64x256xf32>
    %22 = vector.shape_cast %21 : vector<1x64x256xf32> to vector<64x256xf32>
    %23 = vector.shape_cast %20 : vector<64x256xf32> to vector<1x64x256xf32>
    tpu.vector_store %arg4[%c0_6, %c0_7, %c0_8], %23 {strides = array<i32>} : memref<1x128x256xf32, #tpu.memory_space<vmem>>, vector<1x64x256xf32>,
    %24 = vector.broadcast %14 : vector<1x256xf32> to vector<64x256xf32>
    %25 = vector.broadcast %9 : vector<64x1xf32> to vector<64x256xf32>
    %26 = arith.mulf %24, %25 : vector<64x256xf32>
    %27 = vector.broadcast %12 : vector<64x1xf32> to vector<64x256xf32>
    %28 = arith.addf %26, %27 : vector<64x256xf32>
    %29 = math.sin %28 : vector<64x256xf32>
    %c0_9 = arith.constant 0 : index
    %c64 = arith.constant 64 : index
    %c0_10 = arith.constant 0 : index
    %30 = vector.load %arg4[%c0_9, %c64, %c0_10] : memref<1x128x256xf32, #tpu.memory_space<vmem>>, vector<1x64x256xf32>
    %31 = vector.shape_cast %30 : vector<1x64x256xf32> to vector<64x256xf32>
    %32 = vector.shape_cast %29 : vector<64x256xf32> to vector<1x64x256xf32>
    tpu.vector_store %arg4[%c0_9, %c64, %c0_10], %32 {strides = array<i32>} : memref<1x128x256xf32, #tpu.memory_space<vmem>>, vector<1x64x256xf32>,
    return
  }
  func.func @transform_0(%arg0: i32, %arg1: i32) -> (i32, i32) {
    %c0_i32 = arith.constant 0 : i32
    %c0_i32_0 = arith.constant 0 : i32
    return %c0_i32, %arg1 : i32, i32
  }
  func.func @transform_1(%arg0: i32, %arg1: i32) -> (i32, i32) {
    %c0_i32 = arith.constant 0 : i32
    %c0_i32_0 = arith.constant 0 : i32
    return %c0_i32, %arg1 : i32, i32
  }
  func.func @transform_2(%arg0: i32, %arg1: i32) -> (i32, i32, i32) {
    %c0_i32 = arith.constant 0 : i32
    %c0_i32_0 = arith.constant 0 : i32
    return %arg0, %c0_i32, %arg1 : i32, i32, i32
  }
}

</mosaic_0001>

<llo_original>
// kernel: tpu_custom_call.1
$region0: #{tpu_custom_call.1}
  #allocation0 [shape = 'u32[]', space=smem, size = 0x4, offset = 0x4, fixed_abs, tag = 'smem constant byte address 0x4 - core index']
  #allocation1 [shape = 'u32[144,128]{1,0:T(1,128)}', space=vmem, size = 0x12000, scoped, tag = 'internal scratch']
  %s0 = inlined_call_operand.hbm [shape: f32[1,256], index: 0, kind: input, shape index: {}]
  %s1 = inlined_call_operand.vmem [shape: f32[1,256], index: 1, kind: input, shape index: {}]
  %s2 = inlined_call_operand.hbm [shape: f32[2,128,256], index: 2, kind: output, shape index: {}]
  %s3 = sld [smem:[#allocation0]]
  $region45: #{tpu_custom_call.1} parent=0
    _
  %s5 = ssub.s32 1, %s3
  %s6 = scalar_select 0, %s5, %s3
  $region1: #{tpu_custom_call.1} parent=0
    #allocation2 [shape = 'u8[1024]{0}', space=vmem, size = 0x400, scoped, tag = 'input window, operand 0, single buffered']
    #allocation3 [shape = 's32[2]{0}', space=sflag, size = 0x8, scoped, tag = 'scoped memory for tpu_custom_call.1']
    #allocation4 [shape = 's32[2]{0}', space=sflag, size = 0x8, scoped, tag = 'scoped memory for tpu_custom_call.1']
    #allocation5 [shape = 'u8[262144]{0}', space=vmem, size = 0x40000, scoped, tag = 'output window, operand 0']
    %7 = vsyncpa [#allocation3], 0
    %8 = vsyncpa [#allocation4], 0
    %s9 = scalar_lea.sflag [#allocation4], 1
    %10 = vsyncpa %s9, 0
    loop: start=0, step=1, limit=4
    $region2: #{tpu_custom_call.1} parent=1 // loop_pre_header
      _
    $region3: #{tpu_custom_call.1} parent=1 // loop_header
      %s12 = sphi 0, %s16
      %p13 = scmp.ge.s32.totalorder %s12, 4
      %s19 = sphi 0, %s31
      %s20 = sphi 0, %s27
      %s21 = sphi 0, %s19
      %s22 = sphi 0, %s20
      %s23 = sphi 0, %s21
      %s24 = sphi 0, %s22
      %s34 = sphi 0, %s36
      %s37 = sphi 0, %s34
      %s38 = sphi 0, %s37
      %s54 = sphi 0, %s38
      %s60 = sphi 0, %s62
      %s63 = sphi 0, %s60
      %s64 = sphi 0, %s63
      %s80 = sphi 0, %s64
      %s88 = sphi 0, %s90
      %s91 = sphi 0, %s88
      %s92 = sphi 0, %s91
      %s108 = sphi 0, %s92
    $region4: #{tpu_custom_call.1} parent=1 // loop_header_branch
      %15 = sbr.rel (%p13) target = $region8
    $region5: #{tpu_custom_call.1} parent=1 // loop_body
      %s17 = ssub.s32 %s12, 1
      %s18 = ssub.s32 %s12, 2
      %s25 = sadd.s32 1, %s20
      %p26 = scmp.ge.s32.totalorder %s25, 1
      %s27 = scalar_select %p26, 0, %s25
      %s28 = sadd.s32 1, %s19
      %s29 = scalar_select %p26, %s28, %s19
      %p30 = scmp.ge.s32.totalorder %s29, 2
      %s31 = scalar_select %p30, 0, %s29
      %s32 = ssub.s32 %s20, %s27
      %p33 = scmp.eq.s32.totalorder %s32, 0
      %s35 = sadd.s32 %s34, 1
      %s36 = scalar_select %p33, %s34, %s35
      %p39 = pneg %p33
      %p40 = scmp.eq.s32.totalorder %s12, 1
      %p41 = por %p39, %p40
      %p42 = scmp.ne.s32.totalorder %s34, %s37
      %p43 = scmp.eq.s32.totalorder %s12, 0
      %p44 = por %p42, %p43
      %p45 = scmp.ne.s32.totalorder %s34, %s37
      %p46 = scmp.eq.s32.totalorder %s17, 1
      %p47 = por %p45, %p46
      %p48 = scmp.ne.s32.totalorder %s37, %s38
      %p49 = scmp.eq.s32.totalorder %s17, 0
      %p50 = por %p48, %p49
      %p51 = scmp.ne.s32.totalorder %s37, %s38
      %p52 = scmp.eq.s32.totalorder %s18, 1
      %p53 = por %p51, %p52
      %p55 = scmp.ne.s32.totalorder %s38, %s54
      %p56 = scmp.eq.s32.totalorder %s18, 0
      %p57 = por %p55, %p56
      %s58 = ssub.s32 %s20, %s27
      %p59 = scmp.eq.s32.totalorder %s58, 0
      %s61 = sadd.s32 %s60, 1
      %s62 = scalar_select %p59, %s60, %s61
      %p65 = pneg %p59
      %p66 = scmp.eq.s32.totalorder %s12, 1
      %p67 = por %p65, %p66
      %p68 = scmp.ne.s32.totalorder %s60, %s63
      %p69 = scmp.eq.s32.totalorder %s12, 0
      %p70 = por %p68, %p69
      %p71 = scmp.ne.s32.totalorder %s60, %s63
      %p72 = scmp.eq.s32.totalorder %s17, 1
      %p73 = por %p71, %p72
      %p74 = scmp.ne.s32.totalorder %s63, %s64
      %p75 = scmp.eq.s32.totalorder %s17, 0
      %p76 = por %p74, %p75
      %p77 = scmp.ne.s32.totalorder %s63, %s64
      %p78 = scmp.eq.s32.totalorder %s18, 1
      %p79 = por %p77, %p78
      %p81 = scmp.ne.s32.totalorder %s64, %s80
      %p82 = scmp.eq.s32.totalorder %s18, 0
      %p83 = por %p81, %p82
      %s84 = ssub.s32 %s19, %s31
      %s85 = ssub.s32 %s20, %s27
      %s86 = sor.u32 %s84, %s85
      %p87 = scmp.eq.s32.totalorder %s86, 0
      %s89 = sadd.s32 %s88, 1
      %s90 = scalar_select %p87, %s88, %s89
      %p93 = pneg %p87
      %p94 = scmp.eq.s32.totalorder %s12, 1
      %p95 = por %p93, %p94
      %p96 = scmp.ne.s32.totalorder %s88, %s91
      %p97 = scmp.eq.s32.totalorder %s12, 0
      %p98 = por %p96, %p97
      %p99 = scmp.ne.s32.totalorder %s88, %s91
      %p100 = scmp.eq.s32.totalorder %s17, 1
      %p101 = por %p99, %p100
      %p102 = scmp.ne.s32.totalorder %s91, %s92
      %p103 = scmp.eq.s32.totalorder %s17, 0
      %p104 = por %p102, %p103
      %p105 = scmp.ne.s32.totalorder %s91, %s92
      %p106 = scmp.eq.s32.totalorder %s18, 1
      %p107 = por %p105, %p106
      %p109 = scmp.ne.s32.totalorder %s92, %s108
      %p110 = scmp.eq.s32.totalorder %s18, 0
      %p111 = por %p109, %p110
      %p112 = scmp.le.s32.totalorder 1, %s12
      %p113 = scmp.lt.s32.totalorder %s12, 3
      %p114 = pnand %p112, %p113
      %p115 = pneg %p114
      // Predicated region
      $region9: #{tpu_custom_call.1} parent=5 // pred_check
        _
      $region10: #{tpu_custom_call.1} parent=5 // pred_check_branch
        %117 = sbr.rel (%p114) target = $region12
      $region11: #{tpu_custom_call.1} parent=5 // pred_region
        %s118 = ssub.s32 %s12, 1
        // Predicated region
        $region13: #{tpu_custom_call.1} parent=11 // pred_check
          %p119 = pneg %p50
        $region14: #{tpu_custom_call.1} parent=11 // pred_check_branch
          %121 = sbr.rel (%p119) target = $region16
        $region15: #{tpu_custom_call.1} parent=11 // pred_region
          %s122 = smul.u32 2, %s22
          %s124 = ssub.s32 32, 32
          %125 = vsyncadd [#allocation3], %s124
          %s126 = smul.addr %s122, 16
          %s127 = scalar_lea.hbm %s0, %s126
          %s129 = sshll.u32 [#allocation2], 4
          %s130 = int_to_ptr.vmem [resolvable:$true] %s129
          %132 = dma.hbm_to_vmem [thread:$0]  %s127, 32, %s130, [#allocation3]
        $region16: #{tpu_custom_call.1} parent=11 // pred_fallthru
          _
        // Predicated region
        $region17: #{tpu_custom_call.1} parent=11 // pred_check
          %p133 = pneg %p76
        $region18: #{tpu_custom_call.1} parent=11 // pred_check_branch
          %135 = sbr.rel (%p133) target = $region20
        $region19: #{tpu_custom_call.1} parent=11 // pred_region
          %s136 = smul.u32 2, %s22
          %p137 = scmp.lt.s32.totalorder %s136, 1
          %s138 = scalar_select %p137, %s136, 1
          %s139 = scalar_lea.vmem %s1, %s138
          %s140 = smul.u32 2, %s22
        $region20: #{tpu_custom_call.1} parent=11 // pred_fallthru
          _
      $region12: #{tpu_custom_call.1} parent=5 // pred_fallthru
        _
      %p141 = scmp.lt.s32.totalorder %s12, 2
      // Predicated region
      $region21: #{tpu_custom_call.1} parent=5 // pred_check
        %p142 = pneg %p141
      $region22: #{tpu_custom_call.1} parent=5 // pred_check_branch
        %144 = sbr.rel (%p142) target = $region24
      $region23: #{tpu_custom_call.1} parent=5 // pred_region
        _
      $region24: #{tpu_custom_call.1} parent=5 // pred_fallthru
        _
      %p145 = scmp.le.s32.totalorder 1, %s12
      %p146 = scmp.lt.s32.totalorder %s12, 3
      %p147 = pnand %p145, %p146
      %p148 = pneg %p147
      // Predicated region
      $region25: #{tpu_custom_call.1} parent=5 // pred_check
        _
      $region26: #{tpu_custom_call.1} parent=5 // pred_check_branch
        %150 = sbr.rel (%p147) target = $region28
      $region27: #{tpu_custom_call.1} parent=5 // pred_region
        %s151 = ssub.s32 %s12, 1
        // Predicated region
        $region29: #{tpu_custom_call.1} parent=27 // pred_check
          %p152 = pneg %p50
        $region30: #{tpu_custom_call.1} parent=27 // pred_check_branch
          %154 = sbr.rel (%p152) target = $region32
        $region31: #{tpu_custom_call.1} parent=27 // pred_region
          %155 = dma.done [#allocation3], 32
        $region32: #{tpu_custom_call.1} parent=27 // pred_fallthru
          _
        %p156 = pneg %p50
        %p157 = pneg %p47
        %s158 = smul.u32 2, %s22
        %p159 = scmp.lt.s32.totalorder %s158, 1
        %s160 = scalar_select %p159, %s158, 1
        %s161 = scalar_lea.vmem %s1, %s160
        %p162 = pneg %p76
        %p163 = pneg %p73
        %p164 = pneg %p104
        %p165 = pneg %p101
        %s166 = sand.u32 %s91, 1
        %s167 = scalar_lea.sflag [#allocation4], %s166
        %s168 = sand.u32 %s91, 1
        %s169 = smul.addr %s168, 256
        %s170 = scalar_lea.vmem [#allocation5], %s169
        %s171 = smul.u32 2, %s22
        %s172 = smul.u32 2, %s22
        %p173 = scmp.lt.s32.totalorder %s172, 1
        %s174 = scalar_select %p173, %s172, 1
        %s175 = scalar_lea.vmem %s1, %s174
        %s176 = smul.u32 2, %s22
        %s177 = smul.u32 2, %s22
        %v178 = vlaneseq
        %v179 = vshrl.u32 %v178, 7
        %v180 = vadd.s32 %v179, 8
        %v181 = vadd.s32 %v179, 16
        %v182 = vadd.s32 %v179, 24
        %v183 = vadd.s32 %v179, 32
        %v184 = vadd.s32 %v179, 40
        %v185 = vadd.s32 %v179, 48
        %v186 = vadd.s32 %v179, 56
        %v187 = vcvt.s32.f32 %v179
        %v188 = vcvt.s32.f32 %v180
        %v189 = vcvt.s32.f32 %v181
        %v190 = vcvt.s32.f32 %v182
        %v191 = vcvt.s32.f32 %v183
        %v192 = vcvt.s32.f32 %v184
        %v193 = vcvt.s32.f32 %v185
        %v194 = vcvt.s32.f32 %v186
        %v195 = vmul.f32 %v187, 0.5
        %v196 = vmul.f32 %v188, 0.5
        %v197 = vmul.f32 %v189, 0.5
        %v198 = vmul.f32 %v190, 0.5
        %v199 = vmul.f32 %v191, 0.5
        %v200 = vmul.f32 %v192, 0.5
        %v201 = vmul.f32 %v193, 0.5
        %v202 = vmul.f32 %v194, 0.5
        %v203 = vfloor.f32 %v195
        %v204 = vfloor.f32 %v196
        %v205 = vfloor.f32 %v197
        %v206 = vfloor.f32 %v198
        %v207 = vfloor.f32 %v199
        %v208 = vfloor.f32 %v200
        %v209 = vfloor.f32 %v201
        %v210 = vfloor.f32 %v202
        %v211 = vmul.f32 %v203, 2.0
        %v212 = vmul.f32 %v204, 2.0
        %v213 = vmul.f32 %v205, 2.0
        %v214 = vmul.f32 %v206, 2.0
        %v215 = vmul.f32 %v207, 2.0
        %v216 = vmul.f32 %v208, 2.0
        %v217 = vmul.f32 %v209, 2.0
        %v218 = vmul.f32 %v210, 2.0
        %v219 = vmul.f32 %v211, -0.14391157
        %v220 = vmul.f32 %v212, -0.14391157
        %v221 = vmul.f32 %v213, -0.14391157
        %v222 = vmul.f32 %v214, -0.14391157
        %v223 = vmul.f32 %v215, -0.14391157
        %v224 = vmul.f32 %v216, -0.14391157
        %v225 = vmul.f32 %v217, -0.14391157
        %v226 = vmul.f32 %v218, -0.14391157
        %v227 = vmul.f32 %v219, 1.442695
        %v228 = vpow.pop %v227
        %v229 = vmul.f32 %v220, 1.442695
        %v230 = vpow.pop %v229
        %v231 = vmul.f32 %v221, 1.442695
        %v232 = vpow.pop %v231
        %v233 = vmul.f32 %v222, 1.442695
        %v234 = vpow.pop %v233
        %v235 = vmul.f32 %v223, 1.442695
        %v236 = vpow.pop %v235
        %v237 = vmul.f32 %v224, 1.442695
        %v238 = vpow.pop %v237
        %v239 = vmul.f32 %v225, 1.442695
        %v240 = vpow.pop %v239
        %v241 = vmul.f32 %v226, 1.442695
        %v242 = vpow.pop %v241
        %v243 = vsub.f32 %v187, %v211
        %v244 = vsub.f32 %v188, %v212
        %v245 = vsub.f32 %v189, %v213
        %v246 = vsub.f32 %v190, %v214
        %v247 = vsub.f32 %v191, %v215
        %v248 = vsub.f32 %v192, %v216
        %v249 = vsub.f32 %v193, %v217
        %v250 = vsub.f32 %v194, %v218
        %v251 = vmul.f32 %v243, 1.5707964
        %v252 = vmul.f32 %v244, 1.5707964
        %v253 = vmul.f32 %v245, 1.5707964
        %v254 = vmul.f32 %v246, 1.5707964
        %v255 = vmul.f32 %v247, 1.5707964
        %v256 = vmul.f32 %v248, 1.5707964
        %v257 = vmul.f32 %v249, 1.5707964
        %v258 = vmul.f32 %v250, 1.5707964
        %v259 = vld [vmem:[#allocation2] sm:$0x3]
        %v260 = vld [vmem:[%s175] sm:$0x3]
        %v262 = vlaneseq
        %v263 = vshrl.u32 %v262, 7
        %v264 = vsub.s32 0, %v263
        %v265 = vrot.slane %v259, %v264
        %v266 = vlaneseq
        %v267 = vshrl.u32 %v266, 7
        %v268 = vsub.s32 1, %v267
        %v269 = vrot.slane %v259, %v268
        %v272 = vmul.f32 %v265, %v228
        %v273 = vmul.f32 %v269, %v228
        %v274 = vmul.f32 %v265, %v230
        %v275 = vmul.f32 %v269, %v230
        %v276 = vmul.f32 %v265, %v232
        %v277 = vmul.f32 %v269, %v232
        %v278 = vmul.f32 %v265, %v234
        %v279 = vmul.f32 %v269, %v234
        %v280 = vmul.f32 %v265, %v236
        %v281 = vmul.f32 %v269, %v236
        %v282 = vmul.f32 %v265, %v238
        %v283 = vmul.f32 %v269, %v238
        %v284 = vmul.f32 %v265, %v240
        %v285 = vmul.f32 %v269, %v240
        %v286 = vmul.f32 %v265, %v242
        %v287 = vmul.f32 %v269, %v242
        %v288 = vadd.f32 %v272, %v251
        %v289 = vadd.f32 %v273, %v251
        %v290 = vadd.f32 %v274, %v252
        %v291 = vadd.f32 %v275, %v252
        %v292 = vadd.f32 %v276, %v253
        %v293 = vadd.f32 %v277, %v253
        %v294 = vadd.f32 %v278, %v254
        %v295 = vadd.f32 %v279, %v254
        %v296 = vadd.f32 %v280, %v255
        %v297 = vadd.f32 %v281, %v255
        %v298 = vadd.f32 %v282, %v256
        %v299 = vadd.f32 %v283, %v256
        %v300 = vadd.f32 %v284, %v257
        %v301 = vadd.f32 %v285, %v257
        %v302 = vadd.f32 %v286, %v258
        %v303 = vadd.f32 %v287, %v258
        %v304 = vand.u32 2147483647, %v288
        %vm305 = vcmp.le.f32.partialorder %v304, 0.7853982
        %vm306 = vcmp.lt.s32.totalorder %v288, 0
        %v307 = vand.u32 %v288, 2139095040
        %v308 = vshrl.u32 %v307, 23
        %v309 = vsub.s32 %v308, 127
        %v310 = vand.u32 2147483647, %v288
        %v311 = vand.u32 %v310, 8388607
        %v312 = vor.u32 %v311, 8388608
        %v313 = vsub.s32 0, %v312
        %v314 = vadd.s32 %v309, 1
        %vm315 = vcmp.gt.s32.totalorder %v314, 0
        %v316 = vsel %vm315, %v314, 0
        %v317 = vshrl.u32 %v316, 5
        %v318 = vand.u32 %v316, 31
        %v319 = vsub.s32 32, %v318
        %v320 = vshrl.u32 683565275, %v319
        %v321 = vshll.u32 683565275, %v318
        %v322 = vshrl.u32 2475754826, %v319
        %v323 = vor.u32 %v321, %v322
        %v324 = vshll.u32 2475754826, %v318
        %v325 = vshrl.u32 2131351028, %v319
        %v326 = vor.u32 %v324, %v325
        %v327 = vshll.u32 2131351028, %v318
        %v328 = vshrl.u32 2102212464, %v319
        %v329 = vor.u32 %v327, %v328
        %v330 = vshll.u32 2102212464, %v318
        %v331 = vshrl.u32 920167782, %v319
        %v332 = vor.u32 %v330, %v331
        %v333 = vshll.u32 920167782, %v318
        %v334 = vshrl.u32 1326507024, %v319
        %v335 = vor.u32 %v333, %v334
        %vm336 = vcmp.lt.s32.totalorder %v317, 1
        %vm337 = vcmp.lt.s32.totalorder %v317, 2
        %vm338 = vcmp.lt.s32.totalorder %v317, 3
        %vm339 = vcmp.lt.s32.totalorder %v317, 4
        %v340 = vsel %vm336, %v320, %v323
        %v341 = vsel %vm339, %v329, 2102212464
        %v342 = vsel %vm338, %v326, %v341
        %v343 = vsel %vm337, %v340, %v342
        %v344 = vsel %vm336, %v323, %v326
        %v345 = vsel %vm339, %v332, 920167782
        %v346 = vsel %vm338, %v329, %v345
        %v347 = vsel %vm337, %v344, %v346
        %v348 = vsel %vm336, %v326, %v329
        %v349 = vsel %vm339, %v335, 1326507024
        %v350 = vsel %vm338, %v332, %v349
        %v351 = vsel %vm337, %v348, %v350
        %v352 = vshll.u32 %v312, 8
        %v353 = vmul.u32.u64.compose %v352, %v351
        %v354 = vextract.low.u32 %v353
        %v355 = vextract.high.u32 %v353
        %v356 = vmul.u32.u64.compose %v352, %v347
        %v357 = vextract.low.u32 %v356
        %v358 = vextract.high.u32 %v356
        %v359 = vmul.u32 %v352, %v343
        %v360 = vadd.s32 %v355, %v357
        %vm361 = vc.u32 %v355, %v357
        %v362 = vadd.s32 %v358, 1
        %v363 = vsel %vm361, %v362, %v358
        %v364 = vadd.s32 %v359, %v363
        %v365 = vadd.s32 %v364, 536870912
        %v366 = vshrl.u32 %v365, 30
        %v367 = vshll.u32 %v366, 30
        %v368 = vsub.s32 %v364, %v367
        %vm369 = vcmp.lt.s32.totalorder %v368, 0
        %v370 = vsub.s32 0, %v368
        %v371 = vsel %vm369, %v370, %v368
        %v372 = vclz %v371
        %v373 = vsub.s32 %v372, 2
        %vm374 = vcmp.gt.s32.totalorder 0, %v373
        %v375 = vsel %vm374, 0, %v373
        %v376 = vsub.s32 32, %v375
        %v377 = vshll.u32 %v368, %v375
        %v378 = vshrl.u32 %v360, %v376
        %v379 = vor.u32 %v377, %v378
        %v380 = vsub.s32 4294967266, %v375
        %v381 = vadd.s32 %v380, 127
        %v382 = vshll.u32 %v381, 23
        %v383 = vor.u32 4788187, %v382
        %v384 = vand.u32 2147483647, %v383
        %v386 = vcvt.s32.f32 %v379
        %v387 = vmul.f32 %v386, %v384
        %v388 = vxor.u32 %v387, 2147483648
        %v389 = vsel %vm306, %v388, %v387
        %v390 = vsub.s32 4, %v366
        %v391 = vsel %vm306, %v390, %v366
        %v392 = vsel %vm305, %v288, %v389
        %v393 = vsel %vm305, 0, %v391
        %v394 = vcosq.f32.pop %v392
        %v395 = vsinq.f32.pop %v392
        %vm396 = vweird.f32 %v288
        %v397 = vadd.s32 %v393, 3
        %v398 = vand.u32 %v397, 3
        %vm399 = vcmp.lt.s32.totalorder %v398, 2
        %vm400 = vcmp.eq.s32.totalorder %v398, 0
        %v401 = vxor.u32 %v395, 2147483648
        %v402 = vsel %vm400, %v394, %v401
        %vm403 = vcmp.eq.s32.totalorder %v398, 2
        %v404 = vxor.u32 %v394, 2147483648
        %v405 = vsel %vm403, %v404, %v395
        %v406 = vsel %vm399, %v402, %v405
        %v407 = vsel %vm396, nan, %v406
        %v408 = vand.u32 2147483647, %v289
        %vm409 = vcmp.le.f32.partialorder %v408, 0.7853982
        %vm410 = vcmp.lt.s32.totalorder %v289, 0
        %v411 = vand.u32 %v289, 2139095040
        %v412 = vshrl.u32 %v411, 23
        %v413 = vsub.s32 %v412, 127
        %v414 = vand.u32 2147483647, %v289
        %v415 = vand.u32 %v414, 8388607
        %v416 = vor.u32 %v415, 8388608
        %v417 = vsub.s32 0, %v416
        %v418 = vadd.s32 %v413, 1
        %vm419 = vcmp.gt.s32.totalorder %v418, 0
        %v420 = vsel %vm419, %v418, 0
        %v421 = vshrl.u32 %v420, 5
        %v422 = vand.u32 %v420, 31
        %v423 = vsub.s32 32, %v422
        %v424 = vshrl.u32 683565275, %v423
        %v425 = vshll.u32 683565275, %v422
        %v426 = vshrl.u32 2475754826, %v423
        %v427 = vor.u32 %v425, %v426
        %v428 = vshll.u32 2475754826, %v422
        %v429 = vshrl.u32 2131351028, %v423
        %v430 = vor.u32 %v428, %v429
        %v431 = vshll.u32 2131351028, %v422
        %v432 = vshrl.u32 2102212464, %v423
        %v433 = vor.u32 %v431, %v432
        %v434 = vshll.u32 2102212464, %v422
        %v435 = vshrl.u32 920167782, %v423
        %v436 = vor.u32 %v434, %v435
        %v437 = vshll.u32 920167782, %v422
        %v438 = vshrl.u32 1326507024, %v423
        %v439 = vor.u32 %v437, %v438
        %vm440 = vcmp.lt.s32.totalorder %v421, 1
        %vm441 = vcmp.lt.s32.totalorder %v421, 2
        %vm442 = vcmp.lt.s32.totalorder %v421, 3
        %vm443 = vcmp.lt.s32.totalorder %v421, 4
        %v444 = vsel %vm440, %v424, %v427
        %v445 = vsel %vm443, %v433, 2102212464
        %v446 = vsel %vm442, %v430, %v445
        %v447 = vsel %vm441, %v444, %v446
        %v448 = vsel %vm440, %v427, %v430
        %v449 = vsel %vm443, %v436, 920167782
        %v450 = vsel %vm442, %v433, %v449
        %v451 = vsel %vm441, %v448, %v450
        %v452 = vsel %vm440, %v430, %v433
        %v453 = vsel %vm443, %v439, 1326507024
        %v454 = vsel %vm442, %v436, %v453
        %v455 = vsel %vm441, %v452, %v454
        %v456 = vshll.u32 %v416, 8
        %v457 = vmul.u32.u64.compose %v456, %v455
        %v458 = vextract.low.u32 %v457
        %v459 = vextract.high.u32 %v457
        %v460 = vmul.u32.u64.compose %v456, %v451
        %v461 = vextract.low.u32 %v460
        %v462 = vextract.high.u32 %v460
        %v463 = vmul.u32 %v456, %v447
        %v464 = vadd.s32 %v459, %v461
        %vm465 = vc.u32 %v459, %v461
        %v466 = vadd.s32 %v462, 1
        %v467 = vsel %vm465, %v466, %v462
        %v468 = vadd.s32 %v463, %v467
        %v469 = vadd.s32 %v468, 536870912
        %v470 = vshrl.u32 %v469, 30
        %v471 = vshll.u32 %v470, 30
        %v472 = vsub.s32 %v468, %v471
        %vm473 = vcmp.lt.s32.totalorder %v472, 0
        %v474 = vsub.s32 0, %v472
        %v475 = vsel %vm473, %v474, %v472
        %v476 = vclz %v475
        %v477 = vsub.s32 %v476, 2
        %vm478 = vcmp.gt.s32.totalorder 0, %v477
        %v479 = vsel %vm478, 0, %v477
        %v480 = vsub.s32 32, %v479
        %v481 = vshll.u32 %v472, %v479
        %v482 = vshrl.u32 %v464, %v480
        %v483 = vor.u32 %v481, %v482
        %v484 = vsub.s32 4294967266, %v479
        %v485 = vadd.s32 %v484, 127
        %v486 = vshll.u32 %v485, 23
        %v487 = vor.u32 4788187, %v486
        %v488 = vand.u32 2147483647, %v487
        %v490 = vcvt.s32.f32 %v483
        %v491 = vmul.f32 %v490, %v488
        %v492 = vxor.u32 %v491, 2147483648
        %v493 = vsel %vm410, %v492, %v491
        %v494 = vsub.s32 4, %v470
        %v495 = vsel %vm410, %v494, %v470
        %v496 = vsel %vm409, %v289, %v493
        %v497 = vsel %vm409, 0, %v495
        %v498 = vcosq.f32.pop %v496
        %v499 = vsinq.f32.pop %v496
        %vm500 = vweird.f32 %v289
        %v501 = vadd.s32 %v497, 3
        %v502 = vand.u32 %v501, 3
        %vm503 = vcmp.lt.s32.totalorder %v502, 2
        %vm504 = vcmp.eq.s32.totalorder %v502, 0
        %v505 = vxor.u32 %v499, 2147483648
        %v506 = vsel %vm504, %v498, %v505
        %vm507 = vcmp.eq.s32.totalorder %v502, 2
        %v508 = vxor.u32 %v498, 2147483648
        %v509 = vsel %vm507, %v508, %v499
        %v510 = vsel %vm503, %v506, %v509
        %v511 = vsel %vm500, nan, %v510
        %v512 = vand.u32 2147483647, %v290
        %vm513 = vcmp.le.f32.partialorder %v512, 0.7853982
        %vm514 = vcmp.lt.s32.totalorder %v290, 0
        %v515 = vand.u32 %v290, 2139095040
        %v516 = vshrl.u32 %v515, 23
        %v517 = vsub.s32 %v516, 127
        %v518 = vand.u32 2147483647, %v290
        %v519 = vand.u32 %v518, 8388607
        %v520 = vor.u32 %v519, 8388608
        %v521 = vsub.s32 0, %v520
        %v522 = vadd.s32 %v517, 1
        %vm523 = vcmp.gt.s32.totalorder %v522, 0
        %v524 = vsel %vm523, %v522, 0
        %v525 = vshrl.u32 %v524, 5
        %v526 = vand.u32 %v524, 31
        %v527 = vsub.s32 32, %v526
        %v528 = vshrl.u32 683565275, %v527
        %v529 = vshll.u32 683565275, %v526
        %v530 = vshrl.u32 2475754826, %v527
        %v531 = vor.u32 %v529, %v530
        %v532 = vshll.u32 2475754826, %v526
        %v533 = vshrl.u32 2131351028, %v527
        %v534 = vor.u32 %v532, %v533
        %v535 = vshll.u32 2131351028, %v526
        %v536 = vshrl.u32 2102212464, %v527
        %v537 = vor.u32 %v535, %v536
        %v538 = vshll.u32 2102212464, %v526
        %v539 = vshrl.u32 920167782, %v527
        %v540 = vor.u32 %v538, %v539
        %v541 = vshll.u32 920167782, %v526
        %v542 = vshrl.u32 1326507024, %v527
        %v543 = vor.u32 %v541, %v542
        %vm544 = vcmp.lt.s32.totalorder %v525, 1
        %vm545 = vcmp.lt.s32.totalorder %v525, 2
        %vm546 = vcmp.lt.s32.totalorder %v525, 3
        %vm547 = vcmp.lt.s32.totalorder %v525, 4
        %v548 = vsel %vm544, %v528, %v531
        %v549 = vsel %vm547, %v537, 2102212464
        %v550 = vsel %vm546, %v534, %v549
        %v551 = vsel %vm545, %v548, %v550
        %v552 = vsel %vm544, %v531, %v534
        %v553 = vsel %vm547, %v540, 920167782
        %v554 = vsel %vm546, %v537, %v553
        %v555 = vsel %vm545, %v552, %v554
        %v556 = vsel %vm544, %v534, %v537
        %v557 = vsel %vm547, %v543, 1326507024
        %v558 = vsel %vm546, %v540, %v557
        %v559 = vsel %vm545, %v556, %v558
        %v560 = vshll.u32 %v520, 8
        %v561 = vmul.u32.u64.compose %v560, %v559
        %v562 = vextract.low.u32 %v561
        %v563 = vextract.high.u32 %v561
        %v564 = vmul.u32.u64.compose %v560, %v555
        %v565 = vextract.low.u32 %v564
        %v566 = vextract.high.u32 %v564
        %v567 = vmul.u32 %v560, %v551
        %v568 = vadd.s32 %v563, %v565
        %vm569 = vc.u32 %v563, %v565
        %v570 = vadd.s32 %v566, 1
        %v571 = vsel %vm569, %v570, %v566
        %v572 = vadd.s32 %v567, %v571
        %v573 = vadd.s32 %v572, 536870912
        %v574 = vshrl.u32 %v573, 30
        %v575 = vshll.u32 %v574, 30
        %v576 = vsub.s32 %v572, %v575
        %vm577 = vcmp.lt.s32.totalorder %v576, 0
        %v578 = vsub.s32 0, %v576
        %v579 = vsel %vm577, %v578, %v576
        %v580 = vclz %v579
        %v581 = vsub.s32 %v580, 2
        %vm582 = vcmp.gt.s32.totalorder 0, %v581
        %v583 = vsel %vm582, 0, %v581
        %v584 = vsub.s32 32, %v583
        %v585 = vshll.u32 %v576, %v583
        %v586 = vshrl.u32 %v568, %v584
        %v587 = vor.u32 %v585, %v586
        %v588 = vsub.s32 4294967266, %v583
        %v589 = vadd.s32 %v588, 127
        %v590 = vshll.u32 %v589, 23
        %v591 = vor.u32 4788187, %v590
        %v592 = vand.u32 2147483647, %v591
        %v594 = vcvt.s32.f32 %v587
        %v595 = vmul.f32 %v594, %v592
        %v596 = vxor.u32 %v595, 2147483648
        %v597 = vsel %vm514, %v596, %v595
        %v598 = vsub.s32 4, %v574
        %v599 = vsel %vm514, %v598, %v574
        %v600 = vsel %vm513, %v290, %v597
        %v601 = vsel %vm513, 0, %v599
        %v602 = vcosq.f32.pop %v600
        %v603 = vsinq.f32.pop %v600
        %vm604 = vweird.f32 %v290
        %v605 = vadd.s32 %v601, 3
        %v606 = vand.u32 %v605, 3
        %vm607 = vcmp.lt.s32.totalorder %v606, 2
        %vm608 = vcmp.eq.s32.totalorder %v606, 0
        %v609 = vxor.u32 %v603, 2147483648
        %v610 = vsel %vm608, %v602, %v609
        %vm611 = vcmp.eq.s32.totalorder %v606, 2
        %v612 = vxor.u32 %v602, 2147483648
        %v613 = vsel %vm611, %v612, %v603
        %v614 = vsel %vm607, %v610, %v613
        %v615 = vsel %vm604, nan, %v614
        %v616 = vand.u32 2147483647, %v291
        %vm617 = vcmp.le.f32.partialorder %v616, 0.7853982
        %vm618 = vcmp.lt.s32.totalorder %v291, 0
        %v619 = vand.u32 %v291, 2139095040
        %v620 = vshrl.u32 %v619, 23
        %v621 = vsub.s32 %v620, 127
        %v622 = vand.u32 2147483647, %v291
        %v623 = vand.u32 %v622, 8388607
        %v624 = vor.u32 %v623, 8388608
        %v625 = vsub.s32 0, %v624
        %v626 = vadd.s32 %v621, 1
        %vm627 = vcmp.gt.s32.totalorder %v626, 0
        %v628 = vsel %vm627, %v626, 0
        %v629 = vshrl.u32 %v628, 5
        %v630 = vand.u32 %v628, 31
        %v631 = vsub.s32 32, %v630
        %v632 = vshrl.u32 683565275, %v631
        %v633 = vshll.u32 683565275, %v630
        %v634 = vshrl.u32 2475754826, %v631
        %v635 = vor.u32 %v633, %v634
        %v636 = vshll.u32 2475754826, %v630
        %v637 = vshrl.u32 2131351028, %v631
        %v638 = vor.u32 %v636, %v637
        %v639 = vshll.u32 2131351028, %v630
        %v640 = vshrl.u32 2102212464, %v631
        %v641 = vor.u32 %v639, %v640
        %v642 = vshll.u32 2102212464, %v630
        %v643 = vshrl.u32 920167782, %v631
        %v644 = vor.u32 %v642, %v643
        %v645 = vshll.u32 920167782, %v630
        %v646 = vshrl.u32 1326507024, %v631
        %v647 = vor.u32 %v645, %v646
        %vm648 = vcmp.lt.s32.totalorder %v629, 1
        %vm649 = vcmp.lt.s32.totalorder %v629, 2
        %vm650 = vcmp.lt.s32.totalorder %v629, 3
        %vm651 = vcmp.lt.s32.totalorder %v629, 4
        %v652 = vsel %vm648, %v632, %v635
        %v653 = vsel %vm651, %v641, 2102212464
        %v654 = vsel %vm650, %v638, %v653
        %v655 = vsel %vm649, %v652, %v654
        %v656 = vsel %vm648, %v635, %v638
        %v657 = vsel %vm651, %v644, 920167782
        %v658 = vsel %vm650, %v641, %v657
        %v659 = vsel %vm649, %v656, %v658
        %v660 = vsel %vm648, %v638, %v641
        %v661 = vsel %vm651, %v647, 1326507024
        %v662 = vsel %vm650, %v644, %v661
        %v663 = vsel %vm649, %v660, %v662
        %v664 = vshll.u32 %v624, 8
        %v665 = vmul.u32.u64.compose %v664, %v663
        %v666 = vextract.low.u32 %v665
        %v667 = vextract.high.u32 %v665
        %v668 = vmul.u32.u64.compose %v664, %v659
        %v669 = vextract.low.u32 %v668
        %v670 = vextract.high.u32 %v668
        %v671 = vmul.u32 %v664, %v655
        %v672 = vadd.s32 %v667, %v669
        %vm673 = vc.u32 %v667, %v669
        %v674 = vadd.s32 %v670, 1
        %v675 = vsel %vm673, %v674, %v670
        %v676 = vadd.s32 %v671, %v675
        %v677 = vadd.s32 %v676, 536870912
        %v678 = vshrl.u32 %v677, 30
        %v679 = vshll.u32 %v678, 30
        %v680 = vsub.s32 %v676, %v679
        %vm681 = vcmp.lt.s32.totalorder %v680, 0
        %v682 = vsub.s32 0, %v680
        %v683 = vsel %vm681, %v682, %v680
        %v684 = vclz %v683
        %v685 = vsub.s32 %v684, 2
        %vm686 = vcmp.gt.s32.totalorder 0, %v685
        %v687 = vsel %vm686, 0, %v685
        %v688 = vsub.s32 32, %v687
        %v689 = vshll.u32 %v680, %v687
        %v690 = vshrl.u32 %v672, %v688
        %v691 = vor.u32 %v689, %v690
        %v692 = vsub.s32 4294967266, %v687
        %v693 = vadd.s32 %v692, 127
        %v694 = vshll.u32 %v693, 23
        %v695 = vor.u32 4788187, %v694
        %v696 = vand.u32 2147483647, %v695
        %v698 = vcvt.s32.f32 %v691
        %v699 = vmul.f32 %v698, %v696
        %v700 = vxor.u32 %v699, 2147483648
        %v701 = vsel %vm618, %v700, %v699
        %v702 = vsub.s32 4, %v678
        %v703 = vsel %vm618, %v702, %v678
        %v704 = vsel %vm617, %v291, %v701
        %v705 = vsel %vm617, 0, %v703
        %v706 = vcosq.f32.pop %v704
        %v707 = vsinq.f32.pop %v704
        %vm708 = vweird.f32 %v291
        %v709 = vadd.s32 %v705, 3
        %v710 = vand.u32 %v709, 3
        %vm711 = vcmp.lt.s32.totalorder %v710, 2
        %vm712 = vcmp.eq.s32.totalorder %v710, 0
        %v713 = vxor.u32 %v707, 2147483648
        %v714 = vsel %vm712, %v706, %v713
        %vm715 = vcmp.eq.s32.totalorder %v710, 2
        %v716 = vxor.u32 %v706, 2147483648
        %v717 = vsel %vm715, %v716, %v707
        %v718 = vsel %vm711, %v714, %v717
        %v719 = vsel %vm708, nan, %v718
        %v720 = vand.u32 2147483647, %v292
        %vm721 = vcmp.le.f32.partialorder %v720, 0.7853982
        %vm722 = vcmp.lt.s32.totalorder %v292, 0
        %v723 = vand.u32 %v292, 2139095040
        %v724 = vshrl.u32 %v723, 23
        %v725 = vsub.s32 %v724, 127
        %v726 = vand.u32 2147483647, %v292
        %v727 = vand.u32 %v726, 8388607
        %v728 = vor.u32 %v727, 8388608
        %v729 = vsub.s32 0, %v728
        %v730 = vadd.s32 %v725, 1
        %vm731 = vcmp.gt.s32.totalorder %v730, 0
        %v732 = vsel %vm731, %v730, 0
        %v733 = vshrl.u32 %v732, 5
        %v734 = vand.u32 %v732, 31
        %v735 = vsub.s32 32, %v734
        %v736 = vshrl.u32 683565275, %v735
        %v737 = vshll.u32 683565275, %v734
        %v738 = vshrl.u32 2475754826, %v735
        %v739 = vor.u32 %v737, %v738
        %v740 = vshll.u32 2475754826, %v734
        %v741 = vshrl.u32 2131351028, %v735
        %v742 = vor.u32 %v740, %v741
        %v743 = vshll.u32 2131351028, %v734
        %v744 = vshrl.u32 2102212464, %v735
        %v745 = vor.u32 %v743, %v744
        %v746 = vshll.u32 2102212464, %v734
        %v747 = vshrl.u32 920167782, %v735
        %v748 = vor.u32 %v746, %v747
        %v749 = vshll.u32 920167782, %v734
        %v750 = vshrl.u32 1326507024, %v735
        %v751 = vor.u32 %v749, %v750
        %vm752 = vcmp.lt.s32.totalorder %v733, 1
        %vm753 = vcmp.lt.s32.totalorder %v733, 2
        %vm754 = vcmp.lt.s32.totalorder %v733, 3
        %vm755 = vcmp.lt.s32.totalorder %v733, 4
        %v756 = vsel %vm752, %v736, %v739
        %v757 = vsel %vm755, %v745, 2102212464
        %v758 = vsel %vm754, %v742, %v757
        %v759 = vsel %vm753, %v756, %v758
        %v760 = vsel %vm752, %v739, %v742
        %v761 = vsel %vm755, %v748, 920167782
        %v762 = vsel %vm754, %v745, %v761
        %v763 = vsel %vm753, %v760, %v762
        %v764 = vsel %vm752, %v742, %v745
        %v765 = vsel %vm755, %v751, 1326507024
        %v766 = vsel %vm754, %v748, %v765
        %v767 = vsel %vm753, %v764, %v766
        %v768 = vshll.u32 %v728, 8
        %v769 = vmul.u32.u64.compose %v768, %v767
        %v770 = vextract.low.u32 %v769
        %v771 = vextract.high.u32 %v769
        %v772 = vmul.u32.u64.compose %v768, %v763
        %v773 = vextract.low.u32 %v772
        %v774 = vextract.high.u32 %v772
        %v775 = vmul.u32 %v768, %v759
        %v776 = vadd.s32 %v771, %v773
        %vm777 = vc.u32 %v771, %v773
        %v778 = vadd.s32 %v774, 1
        %v779 = vsel %vm777, %v778, %v774
        %v780 = vadd.s32 %v775, %v779
        %v781 = vadd.s32 %v780, 536870912
        %v782 = vshrl.u32 %v781, 30
        %v783 = vshll.u32 %v782, 30
        %v784 = vsub.s32 %v780, %v783
        %vm785 = vcmp.lt.s32.totalorder %v784, 0
        %v786 = vsub.s32 0, %v784
        %v787 = vsel %vm785, %v786, %v784
        %v788 = vclz %v787
        %v789 = vsub.s32 %v788, 2
        %vm790 = vcmp.gt.s32.totalorder 0, %v789
        %v791 = vsel %vm790, 0, %v789
        %v792 = vsub.s32 32, %v791
        %v793 = vshll.u32 %v784, %v791
        %v794 = vshrl.u32 %v776, %v792
        %v795 = vor.u32 %v793, %v794
        %v796 = vsub.s32 4294967266, %v791
        %v797 = vadd.s32 %v796, 127
        %v798 = vshll.u32 %v797, 23
        %v799 = vor.u32 4788187, %v798
        %v800 = vand.u32 2147483647, %v799
        %v802 = vcvt.s32.f32 %v795
        %v803 = vmul.f32 %v802, %v800
        %v804 = vxor.u32 %v803, 2147483648
        %v805 = vsel %vm722, %v804, %v803
        %v806 = vsub.s32 4, %v782
        %v807 = vsel %vm722, %v806, %v782
        %v808 = vsel %vm721, %v292, %v805
        %v809 = vsel %vm721, 0, %v807
        %v810 = vcosq.f32.pop %v808
        %v811 = vsinq.f32.pop %v808
        %vm812 = vweird.f32 %v292
        %v813 = vadd.s32 %v809, 3
        %v814 = vand.u32 %v813, 3
        %vm815 = vcmp.lt.s32.totalorder %v814, 2
        %vm816 = vcmp.eq.s32.totalorder %v814, 0
        %v817 = vxor.u32 %v811, 2147483648
        %v818 = vsel %vm816, %v810, %v817
        %vm819 = vcmp.eq.s32.totalorder %v814, 2
        %v820 = vxor.u32 %v810, 2147483648
        %v821 = vsel %vm819, %v820, %v811
        %v822 = vsel %vm815, %v818, %v821
        %v823 = vsel %vm812, nan, %v822
        %v824 = vand.u32 2147483647, %v293
        %vm825 = vcmp.le.f32.partialorder %v824, 0.7853982
        %vm826 = vcmp.lt.s32.totalorder %v293, 0
        %v827 = vand.u32 %v293, 2139095040
        %v828 = vshrl.u32 %v827, 23
        %v829 = vsub.s32 %v828, 127
        %v830 = vand.u32 2147483647, %v293
        %v831 = vand.u32 %v830, 8388607
        %v832 = vor.u32 %v831, 8388608
        %v833 = vsub.s32 0, %v832
        %v834 = vadd.s32 %v829, 1
        %vm835 = vcmp.gt.s32.totalorder %v834, 0
        %v836 = vsel %vm835, %v834, 0
        %v837 = vshrl.u32 %v836, 5
        %v838 = vand.u32 %v836, 31
        %v839 = vsub.s32 32, %v838
        %v840 = vshrl.u32 683565275, %v839
        %v841 = vshll.u32 683565275, %v838
        %v842 = vshrl.u32 2475754826, %v839
        %v843 = vor.u32 %v841, %v842
        %v844 = vshll.u32 2475754826, %v838
        %v845 = vshrl.u32 2131351028, %v839
        %v846 = vor.u32 %v844, %v845
        %v847 = vshll.u32 2131351028, %v838
        %v848 = vshrl.u32 2102212464, %v839
        %v849 = vor.u32 %v847, %v848
        %v850 = vshll.u32 2102212464, %v838
        %v851 = vshrl.u32 920167782, %v839
        %v852 = vor.u32 %v850, %v851
        %v853 = vshll.u32 920167782, %v838
        %v854 = vshrl.u32 1326507024, %v839
        %v855 = vor.u32 %v853, %v854
        %vm856 = vcmp.lt.s32.totalorder %v837, 1
        %vm857 = vcmp.lt.s32.totalorder %v837, 2
        %vm858 = vcmp.lt.s32.totalorder %v837, 3
        %vm859 = vcmp.lt.s32.totalorder %v837, 4
        %v860 = vsel %vm856, %v840, %v843
        %v861 = vsel %vm859, %v849, 2102212464
        %v862 = vsel %vm858, %v846, %v861
        %v863 = vsel %vm857, %v860, %v862
        %v864 = vsel %vm856, %v843, %v846
        %v865 = vsel %vm859, %v852, 920167782
        %v866 = vsel %vm858, %v849, %v865
        %v867 = vsel %vm857, %v864, %v866
        %v868 = vsel %vm856, %v846, %v849
        %v869 = vsel %vm859, %v855, 1326507024
        %v870 = vsel %vm858, %v852, %v869
        %v871 = vsel %vm857, %v868, %v870
        %v872 = vshll.u32 %v832, 8
        %v873 = vmul.u32.u64.compose %v872, %v871
        %v874 = vextract.low.u32 %v873
        %v875 = vextract.high.u32 %v873
        %v876 = vmul.u32.u64.compose %v872, %v867
        %v877 = vextract.low.u32 %v876
        %v878 = vextract.high.u32 %v876
        %v879 = vmul.u32 %v872, %v863
        %v880 = vadd.s32 %v875, %v877
        %vm881 = vc.u32 %v875, %v877
        %v882 = vadd.s32 %v878, 1
        %v883 = vsel %vm881, %v882, %v878
        %v884 = vadd.s32 %v879, %v883
        %v885 = vadd.s32 %v884, 536870912
        %v886 = vshrl.u32 %v885, 30
        %v887 = vshll.u32 %v886, 30
        %v888 = vsub.s32 %v884, %v887
        %vm889 = vcmp.lt.s32.totalorder %v888, 0
        %v890 = vsub.s32 0, %v888
        %v891 = vsel %vm889, %v890, %v888
        %v892 = vclz %v891
        %v893 = vsub.s32 %v892, 2
        %vm894 = vcmp.gt.s32.totalorder 0, %v893
        %v895 = vsel %vm894, 0, %v893
        %v896 = vsub.s32 32, %v895
        %v897 = vshll.u32 %v888, %v895
        %v898 = vshrl.u32 %v880, %v896
        %v899 = vor.u32 %v897, %v898
        %v900 = vsub.s32 4294967266, %v895
        %v901 = vadd.s32 %v900, 127
        %v902 = vshll.u32 %v901, 23
        %v903 = vor.u32 4788187, %v902
        %v904 = vand.u32 2147483647, %v903
        %v906 = vcvt.s32.f32 %v899
        %v907 = vmul.f32 %v906, %v904
        %v908 = vxor.u32 %v907, 2147483648
        %v909 = vsel %vm826, %v908, %v907
        %v910 = vsub.s32 4, %v886
        %v911 = vsel %vm826, %v910, %v886
        %v912 = vsel %vm825, %v293, %v909
        %v913 = vsel %vm825, 0, %v911
        %v914 = vcosq.f32.pop %v912
        %v915 = vsinq.f32.pop %v912
        %vm916 = vweird.f32 %v293
        %v917 = vadd.s32 %v913, 3
        %v918 = vand.u32 %v917, 3
        %vm919 = vcmp.lt.s32.totalorder %v918, 2
        %vm920 = vcmp.eq.s32.totalorder %v918, 0
        %v921 = vxor.u32 %v915, 2147483648
        %v922 = vsel %vm920, %v914, %v921
        %vm923 = vcmp.eq.s32.totalorder %v918, 2
        %v924 = vxor.u32 %v914, 2147483648
        %v925 = vsel %vm923, %v924, %v915
        %v926 = vsel %vm919, %v922, %v925
        %v927 = vsel %vm916, nan, %v926
        %v928 = vand.u32 2147483647, %v294
        %vm929 = vcmp.le.f32.partialorder %v928, 0.7853982
        %vm930 = vcmp.lt.s32.totalorder %v294, 0
        %v931 = vand.u32 %v294, 2139095040
        %v932 = vshrl.u32 %v931, 23
        %v933 = vsub.s32 %v932, 127
        %v934 = vand.u32 2147483647, %v294
        %v935 = vand.u32 %v934, 8388607
        %v936 = vor.u32 %v935, 8388608
        %v937 = vsub.s32 0, %v936
        %v938 = vadd.s32 %v933, 1
        %vm939 = vcmp.gt.s32.totalorder %v938, 0
        %v940 = vsel %vm939, %v938, 0
        %v941 = vshrl.u32 %v940, 5
        %v942 = vand.u32 %v940, 31
        %v943 = vsub.s32 32, %v942
        %v944 = vshrl.u32 683565275, %v943
        %v945 = vshll.u32 683565275, %v942
        %v946 = vshrl.u32 2475754826, %v943
        %v947 = vor.u32 %v945, %v946
        %v948 = vshll.u32 2475754826, %v942
        %v949 = vshrl.u32 2131351028, %v943
        %v950 = vor.u32 %v948, %v949
        %v951 = vshll.u32 2131351028, %v942
        %v952 = vshrl.u32 2102212464, %v943
        %v953 = vor.u32 %v951, %v952
        %v954 = vshll.u32 2102212464, %v942
        %v955 = vshrl.u32 920167782, %v943
        %v956 = vor.u32 %v954, %v955
        %v957 = vshll.u32 920167782, %v942
        %v958 = vshrl.u32 1326507024, %v943
        %v959 = vor.u32 %v957, %v958
        %vm960 = vcmp.lt.s32.totalorder %v941, 1
        %vm961 = vcmp.lt.s32.totalorder %v941, 2
        %vm962 = vcmp.lt.s32.totalorder %v941, 3
        %vm963 = vcmp.lt.s32.totalorder %v941, 4
        %v964 = vsel %vm960, %v944, %v947
        %v965 = vsel %vm963, %v953, 2102212464
        %v966 = vsel %vm962, %v950, %v965
        %v967 = vsel %vm961, %v964, %v966
        %v968 = vsel %vm960, %v947, %v950
        %v969 = vsel %vm963, %v956, 920167782
        %v970 = vsel %vm962, %v953, %v969
        %v971 = vsel %vm961, %v968, %v970
        %v972 = vsel %vm960, %v950, %v953
        %v973 = vsel %vm963, %v959, 1326507024
        %v974 = vsel %vm962, %v956, %v973
        %v975 = vsel %vm961, %v972, %v974
        %v976 = vshll.u32 %v936, 8
        %v977 = vmul.u32.u64.compose %v976, %v975
        %v978 = vextract.low.u32 %v977
        %v979 = vextract.high.u32 %v977
        %v980 = vmul.u32.u64.compose %v976, %v971
        %v981 = vextract.low.u32 %v980
        %v982 = vextract.high.u32 %v980
        %v983 = vmul.u32 %v976, %v967
        %v984 = vadd.s32 %v979, %v981
        %vm985 = vc.u32 %v979, %v981
        %v986 = vadd.s32 %v982, 1
        %v987 = vsel %vm985, %v986, %v982
        %v988 = vadd.s32 %v983, %v987
        %v989 = vadd.s32 %v988, 536870912
        %v990 = vshrl.u32 %v989, 30
        %v991 = vshll.u32 %v990, 30
        %v992 = vsub.s32 %v988, %v991
        %vm993 = vcmp.lt.s32.totalorder %v992, 0
        %v994 = vsub.s32 0, %v992
        %v995 = vsel %vm993, %v994, %v992
        %v996 = vclz %v995
        %v997 = vsub.s32 %v996, 2
        %vm998 = vcmp.gt.s32.totalorder 0, %v997
        %v999 = vsel %vm998, 0, %v997
        %v1000 = vsub.s32 32, %v999
        %v1001 = vshll.u32 %v992, %v999
        %v1002 = vshrl.u32 %v984, %v1000
        %v1003 = vor.u32 %v1001, %v1002
        %v1004 = vsub.s32 4294967266, %v999
        %v1005 = vadd.s32 %v1004, 127
        %v1006 = vshll.u32 %v1005, 23
        %v1007 = vor.u32 4788187, %v1006
        %v1008 = vand.u32 2147483647, %v1007
        %v1010 = vcvt.s32.f32 %v1003
        %v1011 = vmul.f32 %v1010, %v1008
        %v1012 = vxor.u32 %v1011, 2147483648
        %v1013 = vsel %vm930, %v1012, %v1011
        %v1014 = vsub.s32 4, %v990
        %v1015 = vsel %vm930, %v1014, %v990
        %v1016 = vsel %vm929, %v294, %v1013
        %v1017 = vsel %vm929, 0, %v1015
        %v1018 = vcosq.f32.pop %v1016
        %v1019 = vsinq.f32.pop %v1016
        %vm1020 = vweird.f32 %v294
        %v1021 = vadd.s32 %v1017, 3
        %v1022 = vand.u32 %v1021, 3
        %vm1023 = vcmp.lt.s32.totalorder %v1022, 2
        %vm1024 = vcmp.eq.s32.totalorder %v1022, 0
        %v1025 = vxor.u32 %v1019, 2147483648
        %v1026 = vsel %vm1024, %v1018, %v1025
        %vm1027 = vcmp.eq.s32.totalorder %v1022, 2
        %v1028 = vxor.u32 %v1018, 2147483648
        %v1029 = vsel %vm1027, %v1028, %v1019
        %v1030 = vsel %vm1023, %v1026, %v1029
        %v1031 = vsel %vm1020, nan, %v1030
        %v1032 = vand.u32 2147483647, %v295
        %vm1033 = vcmp.le.f32.partialorder %v1032, 0.7853982
        %vm1034 = vcmp.lt.s32.totalorder %v295, 0
        %v1035 = vand.u32 %v295, 2139095040
        %v1036 = vshrl.u32 %v1035, 23
        %v1037 = vsub.s32 %v1036, 127
        %v1038 = vand.u32 2147483647, %v295
        %v1039 = vand.u32 %v1038, 8388607
        %v1040 = vor.u32 %v1039, 8388608
        %v1041 = vsub.s32 0, %v1040
        %v1042 = vadd.s32 %v1037, 1
        %vm1043 = vcmp.gt.s32.totalorder %v1042, 0
        %v1044 = vsel %vm1043, %v1042, 0
        %v1045 = vshrl.u32 %v1044, 5
        %v1046 = vand.u32 %v1044, 31
        %v1047 = vsub.s32 32, %v1046
        %v1048 = vshrl.u32 683565275, %v1047
        %v1049 = vshll.u32 683565275, %v1046
        %v1050 = vshrl.u32 2475754826, %v1047
        %v1051 = vor.u32 %v1049, %v1050
        %v1052 = vshll.u32 2475754826, %v1046
        %v1053 = vshrl.u32 2131351028, %v1047
        %v1054 = vor.u32 %v1052, %v1053
        %v1055 = vshll.u32 2131351028, %v1046
        %v1056 = vshrl.u32 2102212464, %v1047
        %v1057 = vor.u32 %v1055, %v1056
        %v1058 = vshll.u32 2102212464, %v1046
        %v1059 = vshrl.u32 920167782, %v1047
        %v1060 = vor.u32 %v1058, %v1059
        %v1061 = vshll.u32 920167782, %v1046
        %v1062 = vshrl.u32 1326507024, %v1047
        %v1063 = vor.u32 %v1061, %v1062
        %vm1064 = vcmp.lt.s32.totalorder %v1045, 1
        %vm1065 = vcmp.lt.s32.totalorder %v1045, 2
        %vm1066 = vcmp.lt.s32.totalorder %v1045, 3
        %vm1067 = vcmp.lt.s32.totalorder %v1045, 4
        %v1068 = vsel %vm1064, %v1048, %v1051
        %v1069 = vsel %vm1067, %v1057, 2102212464
        %v1070 = vsel %vm1066, %v1054, %v1069
        %v1071 = vsel %vm1065, %v1068, %v1070
        %v1072 = vsel %vm1064, %v1051, %v1054
        %v1073 = vsel %vm1067, %v1060, 920167782
        %v1074 = vsel %vm1066, %v1057, %v1073
        %v1075 = vsel %vm1065, %v1072, %v1074
        %v1076 = vsel %vm1064, %v1054, %v1057
        %v1077 = vsel %vm1067, %v1063, 1326507024
        %v1078 = vsel %vm1066, %v1060, %v1077
        %v1079 = vsel %vm1065, %v1076, %v1078
        %v1080 = vshll.u32 %v1040, 8
        %v1081 = vmul.u32.u64.compose %v1080, %v1079
        %v1082 = vextract.low.u32 %v1081
        %v1083 = vextract.high.u32 %v1081
        %v1084 = vmul.u32.u64.compose %v1080, %v1075
        %v1085 = vextract.low.u32 %v1084
        %v1086 = vextract.high.u32 %v1084
        %v1087 = vmul.u32 %v1080, %v1071
        %v1088 = vadd.s32 %v1083, %v1085
        %vm1089 = vc.u32 %v1083, %v1085
        %v1090 = vadd.s32 %v1086, 1
        %v1091 = vsel %vm1089, %v1090, %v1086
        %v1092 = vadd.s32 %v1087, %v1091
        %v1093 = vadd.s32 %v1092, 536870912
        %v1094 = vshrl.u32 %v1093, 30
        %v1095 = vshll.u32 %v1094, 30
        %v1096 = vsub.s32 %v1092, %v1095
        %vm1097 = vcmp.lt.s32.totalorder %v1096, 0
        %v1098 = vsub.s32 0, %v1096
        %v1099 = vsel %vm1097, %v1098, %v1096
        %v1100 = vclz %v1099
        %v1101 = vsub.s32 %v1100, 2
        %vm1102 = vcmp.gt.s32.totalorder 0, %v1101
        %v1103 = vsel %vm1102, 0, %v1101
        %v1104 = vsub.s32 32, %v1103
        %v1105 = vshll.u32 %v1096, %v1103
        %v1106 = vshrl.u32 %v1088, %v1104
        %v1107 = vor.u32 %v1105, %v1106
        %v1108 = vsub.s32 4294967266, %v1103
        %v1109 = vadd.s32 %v1108, 127
        %v1110 = vshll.u32 %v1109, 23
        %v1111 = vor.u32 4788187, %v1110
        %v1112 = vand.u32 2147483647, %v1111
        %v1114 = vcvt.s32.f32 %v1107
        %v1115 = vmul.f32 %v1114, %v1112
        %v1116 = vxor.u32 %v1115, 2147483648
        %v1117 = vsel %vm1034, %v1116, %v1115
        %v1118 = vsub.s32 4, %v1094
        %v1119 = vsel %vm1034, %v1118, %v1094
        %v1120 = vsel %vm1033, %v295, %v1117
        %v1121 = vsel %vm1033, 0, %v1119
        %v1122 = vcosq.f32.pop %v1120
        %v1123 = vsinq.f32.pop %v1120
        %vm1124 = vweird.f32 %v295
        %v1125 = vadd.s32 %v1121, 3
        %v1126 = vand.u32 %v1125, 3
        %vm1127 = vcmp.lt.s32.totalorder %v1126, 2
        %vm1128 = vcmp.eq.s32.totalorder %v1126, 0
        %v1129 = vxor.u32 %v1123, 2147483648
        %v1130 = vsel %vm1128, %v1122, %v1129
        %vm1131 = vcmp.eq.s32.totalorder %v1126, 2
        %v1132 = vxor.u32 %v1122, 2147483648
        %v1133 = vsel %vm1131, %v1132, %v1123
        %v1134 = vsel %vm1127, %v1130, %v1133
        %v1135 = vsel %vm1124, nan, %v1134
        %v1136 = vand.u32 2147483647, %v296
        %vm1137 = vcmp.le.f32.partialorder %v1136, 0.7853982
        %vm1138 = vcmp.lt.s32.totalorder %v296, 0
        %v1139 = vand.u32 %v296, 2139095040
        %v1140 = vshrl.u32 %v1139, 23
        %v1141 = vsub.s32 %v1140, 127
        %v1142 = vand.u32 2147483647, %v296
        %v1143 = vand.u32 %v1142, 8388607
        %v1144 = vor.u32 %v1143, 8388608
        %v1145 = vsub.s32 0, %v1144
        %v1146 = vadd.s32 %v1141, 1
        %vm1147 = vcmp.gt.s32.totalorder %v1146, 0
        %v1148 = vsel %vm1147, %v1146, 0
        %v1149 = vshrl.u32 %v1148, 5
        %v1150 = vand.u32 %v1148, 31
        %v1151 = vsub.s32 32, %v1150
        %v1152 = vshrl.u32 683565275, %v1151
        %v1153 = vshll.u32 683565275, %v1150
        %v1154 = vshrl.u32 2475754826, %v1151
        %v1155 = vor.u32 %v1153, %v1154
        %v1156 = vshll.u32 2475754826, %v1150
        %v1157 = vshrl.u32 2131351028, %v1151
        %v1158 = vor.u32 %v1156, %v1157
        %v1159 = vshll.u32 2131351028, %v1150
        %v1160 = vshrl.u32 2102212464, %v1151
        %v1161 = vor.u32 %v1159, %v1160
        %v1162 = vshll.u32 2102212464, %v1150
        %v1163 = vshrl.u32 920167782, %v1151
        %v1164 = vor.u32 %v1162, %v1163
        %v1165 = vshll.u32 920167782, %v1150
        %v1166 = vshrl.u32 1326507024, %v1151
        %v1167 = vor.u32 %v1165, %v1166
        %vm1168 = vcmp.lt.s32.totalorder %v1149, 1
        %vm1169 = vcmp.lt.s32.totalorder %v1149, 2
        %vm1170 = vcmp.lt.s32.totalorder %v1149, 3
        %vm1171 = vcmp.lt.s32.totalorder %v1149, 4
        %v1172 = vsel %vm1168, %v1152, %v1155
        %v1173 = vsel %vm1171, %v1161, 2102212464
        %v1174 = vsel %vm1170, %v1158, %v1173
        %v1175 = vsel %vm1169, %v1172, %v1174
        %v1176 = vsel %vm1168, %v1155, %v1158
        %v1177 = vsel %vm1171, %v1164, 920167782
        %v1178 = vsel %vm1170, %v1161, %v1177
        %v1179 = vsel %vm1169, %v1176, %v1178
        %v1180 = vsel %vm1168, %v1158, %v1161
        %v1181 = vsel %vm1171, %v1167, 1326507024
        %v1182 = vsel %vm1170, %v1164, %v1181
        %v1183 = vsel %vm1169, %v1180, %v1182
        %v1184 = vshll.u32 %v1144, 8
        %v1185 = vmul.u32.u64.compose %v1184, %v1183
        %v1186 = vextract.low.u32 %v1185
        %v1187 = vextract.high.u32 %v1185
        %v1188 = vmul.u32.u64.compose %v1184, %v1179
        %v1189 = vextract.low.u32 %v1188
        %v1190 = vextract.high.u32 %v1188
        %v1191 = vmul.u32 %v1184, %v1175
        %v1192 = vadd.s32 %v1187, %v1189
        %vm1193 = vc.u32 %v1187, %v1189
        %v1194 = vadd.s32 %v1190, 1
        %v1195 = vsel %vm1193, %v1194, %v1190
        %v1196 = vadd.s32 %v1191, %v1195
        %v1197 = vadd.s32 %v1196, 536870912
        %v1198 = vshrl.u32 %v1197, 30
        %v1199 = vshll.u32 %v1198, 30
        %v1200 = vsub.s32 %v1196, %v1199
        %vm1201 = vcmp.lt.s32.totalorder %v1200, 0
        %v1202 = vsub.s32 0, %v1200
        %v1203 = vsel %vm1201, %v1202, %v1200
        %v1204 = vclz %v1203
        %v1205 = vsub.s32 %v1204, 2
        %vm1206 = vcmp.gt.s32.totalorder 0, %v1205
        %v1207 = vsel %vm1206, 0, %v1205
        %v1208 = vsub.s32 32, %v1207
        %v1209 = vshll.u32 %v1200, %v1207
        %v1210 = vshrl.u32 %v1192, %v1208
        %v1211 = vor.u32 %v1209, %v1210
        %v1212 = vsub.s32 4294967266, %v1207
        %v1213 = vadd.s32 %v1212, 127
        %v1214 = vshll.u32 %v1213, 23
        %v1215 = vor.u32 4788187, %v1214
        %v1216 = vand.u32 2147483647, %v1215
        %v1218 = vcvt.s32.f32 %v1211
        %v1219 = vmul.f32 %v1218, %v1216
        %v1220 = vxor.u32 %v1219, 2147483648
        %v1221 = vsel %vm1138, %v1220, %v1219
        %v1222 = vsub.s32 4, %v1198
        %v1223 = vsel %vm1138, %v1222, %v1198
        %v1224 = vsel %vm1137, %v296, %v1221
        %v1225 = vsel %vm1137, 0, %v1223
        %v1226 = vcosq.f32.pop %v1224
        %v1227 = vsinq.f32.pop %v1224
        %vm1228 = vweird.f32 %v296
        %v1229 = vadd.s32 %v1225, 3
        %v1230 = vand.u32 %v1229, 3
        %vm1231 = vcmp.lt.s32.totalorder %v1230, 2
        %vm1232 = vcmp.eq.s32.totalorder %v1230, 0
        %v1233 = vxor.u32 %v1227, 2147483648
        %v1234 = vsel %vm1232, %v1226, %v1233
        %vm1235 = vcmp.eq.s32.totalorder %v1230, 2
        %v1236 = vxor.u32 %v1226, 2147483648
        %v1237 = vsel %vm1235, %v1236, %v1227
        %v1238 = vsel %vm1231, %v1234, %v1237
        %v1239 = vsel %vm1228, nan, %v1238
        %v1240 = vand.u32 2147483647, %v297
        %vm1241 = vcmp.le.f32.partialorder %v1240, 0.7853982
        %vm1242 = vcmp.lt.s32.totalorder %v297, 0
        %v1243 = vand.u32 %v297, 2139095040
        %v1244 = vshrl.u32 %v1243, 23
        %v1245 = vsub.s32 %v1244, 127
        %v1246 = vand.u32 2147483647, %v297
        %v1247 = vand.u32 %v1246, 8388607
        %v1248 = vor.u32 %v1247, 8388608
        %v1249 = vsub.s32 0, %v1248
        %v1250 = vadd.s32 %v1245, 1
        %vm1251 = vcmp.gt.s32.totalorder %v1250, 0
        %v1252 = vsel %vm1251, %v1250, 0
        %v1253 = vshrl.u32 %v1252, 5
        %v1254 = vand.u32 %v1252, 31
        %v1255 = vsub.s32 32, %v1254
        %v1256 = vshrl.u32 683565275, %v1255
        %v1257 = vshll.u32 683565275, %v1254
        %v1258 = vshrl.u32 2475754826, %v1255
        %v1259 = vor.u32 %v1257, %v1258
        %v1260 = vshll.u32 2475754826, %v1254
        %v1261 = vshrl.u32 2131351028, %v1255
        %v1262 = vor.u32 %v1260, %v1261
        %v1263 = vshll.u32 2131351028, %v1254
        %v1264 = vshrl.u32 2102212464, %v1255
        %v1265 = vor.u32 %v1263, %v1264
        %v1266 = vshll.u32 2102212464, %v1254
        %v1267 = vshrl.u32 920167782, %v1255
        %v1268 = vor.u32 %v1266, %v1267
        %v1269 = vshll.u32 920167782, %v1254
        %v1270 = vshrl.u32 1326507024, %v1255
        %v1271 = vor.u32 %v1269, %v1270
        %vm1272 = vcmp.lt.s32.totalorder %v1253, 1
        %vm1273 = vcmp.lt.s32.totalorder %v1253, 2
        %vm1274 = vcmp.lt.s32.totalorder %v1253, 3
        %vm1275 = vcmp.lt.s32.totalorder %v1253, 4
        %v1276 = vsel %vm1272, %v1256, %v1259
        %v1277 = vsel %vm1275, %v1265, 2102212464
        %v1278 = vsel %vm1274, %v1262, %v1277
        %v1279 = vsel %vm1273, %v1276, %v1278
        %v1280 = vsel %vm1272, %v1259, %v1262
        %v1281 = vsel %vm1275, %v1268, 920167782
        %v1282 = vsel %vm1274, %v1265, %v1281
        %v1283 = vsel %vm1273, %v1280, %v1282
        %v1284 = vsel %vm1272, %v1262, %v1265
        %v1285 = vsel %vm1275, %v1271, 1326507024
        %v1286 = vsel %vm1274, %v1268, %v1285
        %v1287 = vsel %vm1273, %v1284, %v1286
        %v1288 = vshll.u32 %v1248, 8
        %v1289 = vmul.u32.u64.compose %v1288, %v1287
        %v1290 = vextract.low.u32 %v1289
        %v1291 = vextract.high.u32 %v1289
        %v1292 = vmul.u32.u64.compose %v1288, %v1283
        %v1293 = vextract.low.u32 %v1292
        %v1294 = vextract.high.u32 %v1292
        %v1295 = vmul.u32 %v1288, %v1279
        %v1296 = vadd.s32 %v1291, %v1293
        %vm1297 = vc.u32 %v1291, %v1293
        %v1298 = vadd.s32 %v1294, 1
        %v1299 = vsel %vm1297, %v1298, %v1294
        %v1300 = vadd.s32 %v1295, %v1299
        %v1301 = vadd.s32 %v1300, 536870912
        %v1302 = vshrl.u32 %v1301, 30
        %v1303 = vshll.u32 %v1302, 30
        %v1304 = vsub.s32 %v1300, %v1303
        %vm1305 = vcmp.lt.s32.totalorder %v1304, 0
        %v1306 = vsub.s32 0, %v1304
        %v1307 = vsel %vm1305, %v1306, %v1304
        %v1308 = vclz %v1307
        %v1309 = vsub.s32 %v1308, 2
        %vm1310 = vcmp.gt.s32.totalorder 0, %v1309
        %v1311 = vsel %vm1310, 0, %v1309
        %v1312 = vsub.s32 32, %v1311
        %v1313 = vshll.u32 %v1304, %v1311
        %v1314 = vshrl.u32 %v1296, %v1312
        %v1315 = vor.u32 %v1313, %v1314
        %v1316 = vsub.s32 4294967266, %v1311
        %v1317 = vadd.s32 %v1316, 127
        %v1318 = vshll.u32 %v1317, 23
        %v1319 = vor.u32 4788187, %v1318
        %v1320 = vand.u32 2147483647, %v1319
        %v1322 = vcvt.s32.f32 %v1315
        %v1323 = vmul.f32 %v1322, %v1320
        %v1324 = vxor.u32 %v1323, 2147483648
        %v1325 = vsel %vm1242, %v1324, %v1323
        %v1326 = vsub.s32 4, %v1302
        %v1327 = vsel %vm1242, %v1326, %v1302
        %v1328 = vsel %vm1241, %v297, %v1325
        %v1329 = vsel %vm1241, 0, %v1327
        %v1330 = vcosq.f32.pop %v1328
        %v1331 = vsinq.f32.pop %v1328
        %vm1332 = vweird.f32 %v297
        %v1333 = vadd.s32 %v1329, 3
        %v1334 = vand.u32 %v1333, 3
        %vm1335 = vcmp.lt.s32.totalorder %v1334, 2
        %vm1336 = vcmp.eq.s32.totalorder %v1334, 0
        %v1337 = vxor.u32 %v1331, 2147483648
        %v1338 = vsel %vm1336, %v1330, %v1337
        %vm1339 = vcmp.eq.s32.totalorder %v1334, 2
        %v1340 = vxor.u32 %v1330, 2147483648
        %v1341 = vsel %vm1339, %v1340, %v1331
        %v1342 = vsel %vm1335, %v1338, %v1341
        %v1343 = vsel %vm1332, nan, %v1342
        %v1344 = vand.u32 2147483647, %v298
        %vm1345 = vcmp.le.f32.partialorder %v1344, 0.7853982
        %vm1346 = vcmp.lt.s32.totalorder %v298, 0
        %v1347 = vand.u32 %v298, 2139095040
        %v1348 = vshrl.u32 %v1347, 23
        %v1349 = vsub.s32 %v1348, 127
        %v1350 = vand.u32 2147483647, %v298
        %v1351 = vand.u32 %v1350, 8388607
        %v1352 = vor.u32 %v1351, 8388608
        %v1353 = vsub.s32 0, %v1352
        %v1354 = vadd.s32 %v1349, 1
        %vm1355 = vcmp.gt.s32.totalorder %v1354, 0
        %v1356 = vsel %vm1355, %v1354, 0
        %v1357 = vshrl.u32 %v1356, 5
        %v1358 = vand.u32 %v1356, 31
        %v1359 = vsub.s32 32, %v1358
        %v1360 = vshrl.u32 683565275, %v1359
        %v1361 = vshll.u32 683565275, %v1358
        %v1362 = vshrl.u32 2475754826, %v1359
        %v1363 = vor.u32 %v1361, %v1362
        %v1364 = vshll.u32 2475754826, %v1358
        %v1365 = vshrl.u32 2131351028, %v1359
        %v1366 = vor.u32 %v1364, %v1365
        %v1367 = vshll.u32 2131351028, %v1358
        %v1368 = vshrl.u32 2102212464, %v1359
        %v1369 = vor.u32 %v1367, %v1368
        %v1370 = vshll.u32 2102212464, %v1358
        %v1371 = vshrl.u32 920167782, %v1359
        %v1372 = vor.u32 %v1370, %v1371
        %v1373 = vshll.u32 920167782, %v1358
        %v1374 = vshrl.u32 1326507024, %v1359
        %v1375 = vor.u32 %v1373, %v1374
        %vm1376 = vcmp.lt.s32.totalorder %v1357, 1
        %vm1377 = vcmp.lt.s32.totalorder %v1357, 2
        %vm1378 = vcmp.lt.s32.totalorder %v1357, 3
        %vm1379 = vcmp.lt.s32.totalorder %v1357, 4
        %v1380 = vsel %vm1376, %v1360, %v1363
        %v1381 = vsel %vm1379, %v1369, 2102212464
        %v1382 = vsel %vm1378, %v1366, %v1381
        %v1383 = vsel %vm1377, %v1380, %v1382
        %v1384 = vsel %vm1376, %v1363, %v1366
        %v1385 = vsel %vm1379, %v1372, 920167782
        %v1386 = vsel %vm1378, %v1369, %v1385
        %v1387 = vsel %vm1377, %v1384, %v1386
        %v1388 = vsel %vm1376, %v1366, %v1369
        %v1389 = vsel %vm1379, %v1375, 1326507024
        %v1390 = vsel %vm1378, %v1372, %v1389
        %v1391 = vsel %vm1377, %v1388, %v1390
        %v1392 = vshll.u32 %v1352, 8
        %v1393 = vmul.u32.u64.compose %v1392, %v1391
        %v1394 = vextract.low.u32 %v1393
        %v1395 = vextract.high.u32 %v1393
        %v1396 = vmul.u32.u64.compose %v1392, %v1387
        %v1397 = vextract.low.u32 %v1396
        %v1398 = vextract.high.u32 %v1396
        %v1399 = vmul.u32 %v1392, %v1383
        %v1400 = vadd.s32 %v1395, %v1397
        %vm1401 = vc.u32 %v1395, %v1397
        %v1402 = vadd.s32 %v1398, 1
        %v1403 = vsel %vm1401, %v1402, %v1398
        %v1404 = vadd.s32 %v1399, %v1403
        %v1405 = vadd.s32 %v1404, 536870912
        %v1406 = vshrl.u32 %v1405, 30
        %v1407 = vshll.u32 %v1406, 30
        %v1408 = vsub.s32 %v1404, %v1407
        %vm1409 = vcmp.lt.s32.totalorder %v1408, 0
        %v1410 = vsub.s32 0, %v1408
        %v1411 = vsel %vm1409, %v1410, %v1408
        %v1412 = vclz %v1411
        %v1413 = vsub.s32 %v1412, 2
        %vm1414 = vcmp.gt.s32.totalorder 0, %v1413
        %v1415 = vsel %vm1414, 0, %v1413
        %v1416 = vsub.s32 32, %v1415
        %v1417 = vshll.u32 %v1408, %v1415
        %v1418 = vshrl.u32 %v1400, %v1416
        %v1419 = vor.u32 %v1417, %v1418
        %v1420 = vsub.s32 4294967266, %v1415
        %v1421 = vadd.s32 %v1420, 127
        %v1422 = vshll.u32 %v1421, 23
        %v1423 = vor.u32 4788187, %v1422
        %v1424 = vand.u32 2147483647, %v1423
        %v1426 = vcvt.s32.f32 %v1419
        %v1427 = vmul.f32 %v1426, %v1424
        %v1428 = vxor.u32 %v1427, 2147483648
        %v1429 = vsel %vm1346, %v1428, %v1427
        %v1430 = vsub.s32 4, %v1406
        %v1431 = vsel %vm1346, %v1430, %v1406
        %v1432 = vsel %vm1345, %v298, %v1429
        %v1433 = vsel %vm1345, 0, %v1431
        %v1434 = vcosq.f32.pop %v1432
        %v1435 = vsinq.f32.pop %v1432
        %vm1436 = vweird.f32 %v298
        %v1437 = vadd.s32 %v1433, 3
        %v1438 = vand.u32 %v1437, 3
        %vm1439 = vcmp.lt.s32.totalorder %v1438, 2
        %vm1440 = vcmp.eq.s32.totalorder %v1438, 0
        %v1441 = vxor.u32 %v1435, 2147483648
        %v1442 = vsel %vm1440, %v1434, %v1441
        %vm1443 = vcmp.eq.s32.totalorder %v1438, 2
        %v1444 = vxor.u32 %v1434, 2147483648
        %v1445 = vsel %vm1443, %v1444, %v1435
        %v1446 = vsel %vm1439, %v1442, %v1445
        %v1447 = vsel %vm1436, nan, %v1446
        %v1448 = vand.u32 2147483647, %v299
        %vm1449 = vcmp.le.f32.partialorder %v1448, 0.7853982
        %vm1450 = vcmp.lt.s32.totalorder %v299, 0
        %v1451 = vand.u32 %v299, 2139095040
        %v1452 = vshrl.u32 %v1451, 23
        %v1453 = vsub.s32 %v1452, 127
        %v1454 = vand.u32 2147483647, %v299
        %v1455 = vand.u32 %v1454, 8388607
        %v1456 = vor.u32 %v1455, 8388608
        %v1457 = vsub.s32 0, %v1456
        %v1458 = vadd.s32 %v1453, 1
        %vm1459 = vcmp.gt.s32.totalorder %v1458, 0
        %v1460 = vsel %vm1459, %v1458, 0
        %v1461 = vshrl.u32 %v1460, 5
        %v1462 = vand.u32 %v1460, 31
        %v1463 = vsub.s32 32, %v1462
        %v1464 = vshrl.u32 683565275, %v1463
        %v1465 = vshll.u32 683565275, %v1462
        %v1466 = vshrl.u32 2475754826, %v1463
        %v1467 = vor.u32 %v1465, %v1466
        %v1468 = vshll.u32 2475754826, %v1462
        %v1469 = vshrl.u32 2131351028, %v1463
        %v1470 = vor.u32 %v1468, %v1469
        %v1471 = vshll.u32 2131351028, %v1462
        %v1472 = vshrl.u32 2102212464, %v1463
        %v1473 = vor.u32 %v1471, %v1472
        %v1474 = vshll.u32 2102212464, %v1462
        %v1475 = vshrl.u32 920167782, %v1463
        %v1476 = vor.u32 %v1474, %v1475
        %v1477 = vshll.u32 920167782, %v1462
        %v1478 = vshrl.u32 1326507024, %v1463
        %v1479 = vor.u32 %v1477, %v1478
        %vm1480 = vcmp.lt.s32.totalorder %v1461, 1
        %vm1481 = vcmp.lt.s32.totalorder %v1461, 2
        %vm1482 = vcmp.lt.s32.totalorder %v1461, 3
        %vm1483 = vcmp.lt.s32.totalorder %v1461, 4
        %v1484 = vsel %vm1480, %v1464, %v1467
        %v1485 = vsel %vm1483, %v1473, 2102212464
        %v1486 = vsel %vm1482, %v1470, %v1485
        %v1487 = vsel %vm1481, %v1484, %v1486
        %v1488 = vsel %vm1480, %v1467, %v1470
        %v1489 = vsel %vm1483, %v1476, 920167782
        %v1490 = vsel %vm1482, %v1473, %v1489
        %v1491 = vsel %vm1481, %v1488, %v1490
        %v1492 = vsel %vm1480, %v1470, %v1473
        %v1493 = vsel %vm1483, %v1479, 1326507024
        %v1494 = vsel %vm1482, %v1476, %v1493
        %v1495 = vsel %vm1481, %v1492, %v1494
        %v1496 = vshll.u32 %v1456, 8
        %v1497 = vmul.u32.u64.compose %v1496, %v1495
        %v1498 = vextract.low.u32 %v1497
        %v1499 = vextract.high.u32 %v1497
        %v1500 = vmul.u32.u64.compose %v1496, %v1491
        %v1501 = vextract.low.u32 %v1500
        %v1502 = vextract.high.u32 %v1500
        %v1503 = vmul.u32 %v1496, %v1487
        %v1504 = vadd.s32 %v1499, %v1501
        %vm1505 = vc.u32 %v1499, %v1501
        %v1506 = vadd.s32 %v1502, 1
        %v1507 = vsel %vm1505, %v1506, %v1502
        %v1508 = vadd.s32 %v1503, %v1507
        %v1509 = vadd.s32 %v1508, 536870912
        %v1510 = vshrl.u32 %v1509, 30
        %v1511 = vshll.u32 %v1510, 30
        %v1512 = vsub.s32 %v1508, %v1511
        %vm1513 = vcmp.lt.s32.totalorder %v1512, 0
        %v1514 = vsub.s32 0, %v1512
        %v1515 = vsel %vm1513, %v1514, %v1512
        %v1516 = vclz %v1515
        %v1517 = vsub.s32 %v1516, 2
        %vm1518 = vcmp.gt.s32.totalorder 0, %v1517
        %v1519 = vsel %vm1518, 0, %v1517
        %v1520 = vsub.s32 32, %v1519
        %v1521 = vshll.u32 %v1512, %v1519
        %v1522 = vshrl.u32 %v1504, %v1520
        %v1523 = vor.u32 %v1521, %v1522
        %v1524 = vsub.s32 4294967266, %v1519
        %v1525 = vadd.s32 %v1524, 127
        %v1526 = vshll.u32 %v1525, 23
        %v1527 = vor.u32 4788187, %v1526
        %v1528 = vand.u32 2147483647, %v1527
        %v1530 = vcvt.s32.f32 %v1523
        %v1531 = vmul.f32 %v1530, %v1528
        %v1532 = vxor.u32 %v1531, 2147483648
        %v1533 = vsel %vm1450, %v1532, %v1531
        %v1534 = vsub.s32 4, %v1510
        %v1535 = vsel %vm1450, %v1534, %v1510
        %v1536 = vsel %vm1449, %v299, %v1533
        %v1537 = vsel %vm1449, 0, %v1535
        %v1538 = vcosq.f32.pop %v1536
        %v1539 = vsinq.f32.pop %v1536
        %vm1540 = vweird.f32 %v299
        %v1541 = vadd.s32 %v1537, 3
        %v1542 = vand.u32 %v1541, 3
        %vm1543 = vcmp.lt.s32.totalorder %v1542, 2
        %vm1544 = vcmp.eq.s32.totalorder %v1542, 0
        %v1545 = vxor.u32 %v1539, 2147483648
        %v1546 = vsel %vm1544, %v1538, %v1545
        %vm1547 = vcmp.eq.s32.totalorder %v1542, 2
        %v1548 = vxor.u32 %v1538, 2147483648
        %v1549 = vsel %vm1547, %v1548, %v1539
        %v1550 = vsel %vm1543, %v1546, %v1549
        %v1551 = vsel %vm1540, nan, %v1550
        %v1552 = vand.u32 2147483647, %v300
        %vm1553 = vcmp.le.f32.partialorder %v1552, 0.7853982
        %vm1554 = vcmp.lt.s32.totalorder %v300, 0
        %v1555 = vand.u32 %v300, 2139095040
        %v1556 = vshrl.u32 %v1555, 23
        %v1557 = vsub.s32 %v1556, 127
        %v1558 = vand.u32 2147483647, %v300
        %v1559 = vand.u32 %v1558, 8388607
        %v1560 = vor.u32 %v1559, 8388608
        %v1561 = vsub.s32 0, %v1560
        %v1562 = vadd.s32 %v1557, 1
        %vm1563 = vcmp.gt.s32.totalorder %v1562, 0
        %v1564 = vsel %vm1563, %v1562, 0
        %v1565 = vshrl.u32 %v1564, 5
        %v1566 = vand.u32 %v1564, 31
        %v1567 = vsub.s32 32, %v1566
        %v1568 = vshrl.u32 683565275, %v1567
        %v1569 = vshll.u32 683565275, %v1566
        %v1570 = vshrl.u32 2475754826, %v1567
        %v1571 = vor.u32 %v1569, %v1570
        %v1572 = vshll.u32 2475754826, %v1566
        %v1573 = vshrl.u32 2131351028, %v1567
        %v1574 = vor.u32 %v1572, %v1573
        %v1575 = vshll.u32 2131351028, %v1566
        %v1576 = vshrl.u32 2102212464, %v1567
        %v1577 = vor.u32 %v1575, %v1576
        %v1578 = vshll.u32 2102212464, %v1566
        %v1579 = vshrl.u32 920167782, %v1567
        %v1580 = vor.u32 %v1578, %v1579
        %v1581 = vshll.u32 920167782, %v1566
        %v1582 = vshrl.u32 1326507024, %v1567
        %v1583 = vor.u32 %v1581, %v1582
        %vm1584 = vcmp.lt.s32.totalorder %v1565, 1
        %vm1585 = vcmp.lt.s32.totalorder %v1565, 2
        %vm1586 = vcmp.lt.s32.totalorder %v1565, 3
        %vm1587 = vcmp.lt.s32.totalorder %v1565, 4
        %v1588 = vsel %vm1584, %v1568, %v1571
        %v1589 = vsel %vm1587, %v1577, 2102212464
        %v1590 = vsel %vm1586, %v1574, %v1589
        %v1591 = vsel %vm1585, %v1588, %v1590
        %v1592 = vsel %vm1584, %v1571, %v1574
        %v1593 = vsel %vm1587, %v1580, 920167782
        %v1594 = vsel %vm1586, %v1577, %v1593
        %v1595 = vsel %vm1585, %v1592, %v1594
        %v1596 = vsel %vm1584, %v1574, %v1577
        %v1597 = vsel %vm1587, %v1583, 1326507024
        %v1598 = vsel %vm1586, %v1580, %v1597
        %v1599 = vsel %vm1585, %v1596, %v1598
        %v1600 = vshll.u32 %v1560, 8
        %v1601 = vmul.u32.u64.compose %v1600, %v1599
        %v1602 = vextract.low.u32 %v1601
        %v1603 = vextract.high.u32 %v1601
        %v1604 = vmul.u32.u64.compose %v1600, %v1595
        %v1605 = vextract.low.u32 %v1604
        %v1606 = vextract.high.u32 %v1604
        %v1607 = vmul.u32 %v1600, %v1591
        %v1608 = vadd.s32 %v1603, %v1605
        %vm1609 = vc.u32 %v1603, %v1605
        %v1610 = vadd.s32 %v1606, 1
        %v1611 = vsel %vm1609, %v1610, %v1606
        %v1612 = vadd.s32 %v1607, %v1611
        %v1613 = vadd.s32 %v1612, 536870912
        %v1614 = vshrl.u32 %v1613, 30
        %v1615 = vshll.u32 %v1614, 30
        %v1616 = vsub.s32 %v1612, %v1615
        %vm1617 = vcmp.lt.s32.totalorder %v1616, 0
        %v1618 = vsub.s32 0, %v1616
        %v1619 = vsel %vm1617, %v1618, %v1616
        %v1620 = vclz %v1619
        %v1621 = vsub.s32 %v1620, 2
        %vm1622 = vcmp.gt.s32.totalorder 0, %v1621
        %v1623 = vsel %vm1622, 0, %v1621
        %v1624 = vsub.s32 32, %v1623
        %v1625 = vshll.u32 %v1616, %v1623
        %v1626 = vshrl.u32 %v1608, %v1624
        %v1627 = vor.u32 %v1625, %v1626
        %v1628 = vsub.s32 4294967266, %v1623
        %v1629 = vadd.s32 %v1628, 127
        %v1630 = vshll.u32 %v1629, 23
        %v1631 = vor.u32 4788187, %v1630
        %v1632 = vand.u32 2147483647, %v1631
        %v1634 = vcvt.s32.f32 %v1627
        %v1635 = vmul.f32 %v1634, %v1632
        %v1636 = vxor.u32 %v1635, 2147483648
        %v1637 = vsel %vm1554, %v1636, %v1635
        %v1638 = vsub.s32 4, %v1614
        %v1639 = vsel %vm1554, %v1638, %v1614
        %v1640 = vsel %vm1553, %v300, %v1637
        %v1641 = vsel %vm1553, 0, %v1639
        %v1642 = vcosq.f32.pop %v1640
        %v1643 = vsinq.f32.pop %v1640
        %vm1644 = vweird.f32 %v300
        %v1645 = vadd.s32 %v1641, 3
        %v1646 = vand.u32 %v1645, 3
        %vm1647 = vcmp.lt.s32.totalorder %v1646, 2
        %vm1648 = vcmp.eq.s32.totalorder %v1646, 0
        %v1649 = vxor.u32 %v1643, 2147483648
        %v1650 = vsel %vm1648, %v1642, %v1649
        %vm1651 = vcmp.eq.s32.totalorder %v1646, 2
        %v1652 = vxor.u32 %v1642, 2147483648
        %v1653 = vsel %vm1651, %v1652, %v1643
        %v1654 = vsel %vm1647, %v1650, %v1653
        %v1655 = vsel %vm1644, nan, %v1654
        %v1656 = vand.u32 2147483647, %v301
        %vm1657 = vcmp.le.f32.partialorder %v1656, 0.7853982
        %vm1658 = vcmp.lt.s32.totalorder %v301, 0
        %v1659 = vand.u32 %v301, 2139095040
        %v1660 = vshrl.u32 %v1659, 23
        %v1661 = vsub.s32 %v1660, 127
        %v1662 = vand.u32 2147483647, %v301
        %v1663 = vand.u32 %v1662, 8388607
        %v1664 = vor.u32 %v1663, 8388608
        %v1665 = vsub.s32 0, %v1664
        %v1666 = vadd.s32 %v1661, 1
        %vm1667 = vcmp.gt.s32.totalorder %v1666, 0
        %v1668 = vsel %vm1667, %v1666, 0
        %v1669 = vshrl.u32 %v1668, 5
        %v1670 = vand.u32 %v1668, 31
        %v1671 = vsub.s32 32, %v1670
        %v1672 = vshrl.u32 683565275, %v1671
        %v1673 = vshll.u32 683565275, %v1670
        %v1674 = vshrl.u32 2475754826, %v1671
        %v1675 = vor.u32 %v1673, %v1674
        %v1676 = vshll.u32 2475754826, %v1670
        %v1677 = vshrl.u32 2131351028, %v1671
        %v1678 = vor.u32 %v1676, %v1677
        %v1679 = vshll.u32 2131351028, %v1670
        %v1680 = vshrl.u32 2102212464, %v1671
        %v1681 = vor.u32 %v1679, %v1680
        %v1682 = vshll.u32 2102212464, %v1670
        %v1683 = vshrl.u32 920167782, %v1671
        %v1684 = vor.u32 %v1682, %v1683
        %v1685 = vshll.u32 920167782, %v1670
        %v1686 = vshrl.u32 1326507024, %v1671
        %v1687 = vor.u32 %v1685, %v1686
        %vm1688 = vcmp.lt.s32.totalorder %v1669, 1
        %vm1689 = vcmp.lt.s32.totalorder %v1669, 2
        %vm1690 = vcmp.lt.s32.totalorder %v1669, 3
        %vm1691 = vcmp.lt.s32.totalorder %v1669, 4
        %v1692 = vsel %vm1688, %v1672, %v1675
        %v1693 = vsel %vm1691, %v1681, 2102212464
        %v1694 = vsel %vm1690, %v1678, %v1693
        %v1695 = vsel %vm1689, %v1692, %v1694
        %v1696 = vsel %vm1688, %v1675, %v1678
        %v1697 = vsel %vm1691, %v1684, 920167782
        %v1698 = vsel %vm1690, %v1681, %v1697
        %v1699 = vsel %vm1689, %v1696, %v1698
        %v1700 = vsel %vm1688, %v1678, %v1681
        %v1701 = vsel %vm1691, %v1687, 1326507024
        %v1702 = vsel %vm1690, %v1684, %v1701
        %v1703 = vsel %vm1689, %v1700, %v1702
        %v1704 = vshll.u32 %v1664, 8
        %v1705 = vmul.u32.u64.compose %v1704, %v1703
        %v1706 = vextract.low.u32 %v1705
        %v1707 = vextract.high.u32 %v1705
        %v1708 = vmul.u32.u64.compose %v1704, %v1699
        %v1709 = vextract.low.u32 %v1708
        %v1710 = vextract.high.u32 %v1708
        %v1711 = vmul.u32 %v1704, %v1695
        %v1712 = vadd.s32 %v1707, %v1709
        %vm1713 = vc.u32 %v1707, %v1709
        %v1714 = vadd.s32 %v1710, 1
        %v1715 = vsel %vm1713, %v1714, %v1710
        %v1716 = vadd.s32 %v1711, %v1715
        %v1717 = vadd.s32 %v1716, 536870912
        %v1718 = vshrl.u32 %v1717, 30
        %v1719 = vshll.u32 %v1718, 30
        %v1720 = vsub.s32 %v1716, %v1719
        %vm1721 = vcmp.lt.s32.totalorder %v1720, 0
        %v1722 = vsub.s32 0, %v1720
        %v1723 = vsel %vm1721, %v1722, %v1720
        %v1724 = vclz %v1723
        %v1725 = vsub.s32 %v1724, 2
        %vm1726 = vcmp.gt.s32.totalorder 0, %v1725
        %v1727 = vsel %vm1726, 0, %v1725
        %v1728 = vsub.s32 32, %v1727
        %v1729 = vshll.u32 %v1720, %v1727
        %v1730 = vshrl.u32 %v1712, %v1728
        %v1731 = vor.u32 %v1729, %v1730
        %v1732 = vsub.s32 4294967266, %v1727
        %v1733 = vadd.s32 %v1732, 127
        %v1734 = vshll.u32 %v1733, 23
        %v1735 = vor.u32 4788187, %v1734
        %v1736 = vand.u32 2147483647, %v1735
        %v1738 = vcvt.s32.f32 %v1731
        %v1739 = vmul.f32 %v1738, %v1736
        %v1740 = vxor.u32 %v1739, 2147483648
        %v1741 = vsel %vm1658, %v1740, %v1739
        %v1742 = vsub.s32 4, %v1718
        %v1743 = vsel %vm1658, %v1742, %v1718
        %v1744 = vsel %vm1657, %v301, %v1741
        %v1745 = vsel %vm1657, 0, %v1743
        %v1746 = vcosq.f32.pop %v1744
        %v1747 = vsinq.f32.pop %v1744
        %vm1748 = vweird.f32 %v301
        %v1749 = vadd.s32 %v1745, 3
        %v1750 = vand.u32 %v1749, 3
        %vm1751 = vcmp.lt.s32.totalorder %v1750, 2
        %vm1752 = vcmp.eq.s32.totalorder %v1750, 0
        %v1753 = vxor.u32 %v1747, 2147483648
        %v1754 = vsel %vm1752, %v1746, %v1753
        %vm1755 = vcmp.eq.s32.totalorder %v1750, 2
        %v1756 = vxor.u32 %v1746, 2147483648
        %v1757 = vsel %vm1755, %v1756, %v1747
        %v1758 = vsel %vm1751, %v1754, %v1757
        %v1759 = vsel %vm1748, nan, %v1758
        %v1760 = vand.u32 2147483647, %v302
        %vm1761 = vcmp.le.f32.partialorder %v1760, 0.7853982
        %vm1762 = vcmp.lt.s32.totalorder %v302, 0
        %v1763 = vand.u32 %v302, 2139095040
        %v1764 = vshrl.u32 %v1763, 23
        %v1765 = vsub.s32 %v1764, 127
        %v1766 = vand.u32 2147483647, %v302
        %v1767 = vand.u32 %v1766, 8388607
        %v1768 = vor.u32 %v1767, 8388608
        %v1769 = vsub.s32 0, %v1768
        %v1770 = vadd.s32 %v1765, 1
        %vm1771 = vcmp.gt.s32.totalorder %v1770, 0
        %v1772 = vsel %vm1771, %v1770, 0
        %v1773 = vshrl.u32 %v1772, 5
        %v1774 = vand.u32 %v1772, 31
        %v1775 = vsub.s32 32, %v1774
        %v1776 = vshrl.u32 683565275, %v1775
        %v1777 = vshll.u32 683565275, %v1774
        %v1778 = vshrl.u32 2475754826, %v1775
        %v1779 = vor.u32 %v1777, %v1778
        %v1780 = vshll.u32 2475754826, %v1774
        %v1781 = vshrl.u32 2131351028, %v1775
        %v1782 = vor.u32 %v1780, %v1781
        %v1783 = vshll.u32 2131351028, %v1774
        %v1784 = vshrl.u32 2102212464, %v1775
        %v1785 = vor.u32 %v1783, %v1784
        %v1786 = vshll.u32 2102212464, %v1774
        %v1787 = vshrl.u32 920167782, %v1775
        %v1788 = vor.u32 %v1786, %v1787
        %v1789 = vshll.u32 920167782, %v1774
        %v1790 = vshrl.u32 1326507024, %v1775
        %v1791 = vor.u32 %v1789, %v1790
        %vm1792 = vcmp.lt.s32.totalorder %v1773, 1
        %vm1793 = vcmp.lt.s32.totalorder %v1773, 2
        %vm1794 = vcmp.lt.s32.totalorder %v1773, 3
        %vm1795 = vcmp.lt.s32.totalorder %v1773, 4
        %v1796 = vsel %vm1792, %v1776, %v1779
        %v1797 = vsel %vm1795, %v1785, 2102212464
        %v1798 = vsel %vm1794, %v1782, %v1797
        %v1799 = vsel %vm1793, %v1796, %v1798
        %v1800 = vsel %vm1792, %v1779, %v1782
        %v1801 = vsel %vm1795, %v1788, 920167782
        %v1802 = vsel %vm1794, %v1785, %v1801
        %v1803 = vsel %vm1793, %v1800, %v1802
        %v1804 = vsel %vm1792, %v1782, %v1785
        %v1805 = vsel %vm1795, %v1791, 1326507024
        %v1806 = vsel %vm1794, %v1788, %v1805
        %v1807 = vsel %vm1793, %v1804, %v1806
        %v1808 = vshll.u32 %v1768, 8
        %v1809 = vmul.u32.u64.compose %v1808, %v1807
        %v1810 = vextract.low.u32 %v1809
        %v1811 = vextract.high.u32 %v1809
        %v1812 = vmul.u32.u64.compose %v1808, %v1803
        %v1813 = vextract.low.u32 %v1812
        %v1814 = vextract.high.u32 %v1812
        %v1815 = vmul.u32 %v1808, %v1799
        %v1816 = vadd.s32 %v1811, %v1813
        %vm1817 = vc.u32 %v1811, %v1813
        %v1818 = vadd.s32 %v1814, 1
        %v1819 = vsel %vm1817, %v1818, %v1814
        %v1820 = vadd.s32 %v1815, %v1819
        %v1821 = vadd.s32 %v1820, 536870912
        %v1822 = vshrl.u32 %v1821, 30
        %v1823 = vshll.u32 %v1822, 30
        %v1824 = vsub.s32 %v1820, %v1823
        %vm1825 = vcmp.lt.s32.totalorder %v1824, 0
        %v1826 = vsub.s32 0, %v1824
        %v1827 = vsel %vm1825, %v1826, %v1824
        %v1828 = vclz %v1827
        %v1829 = vsub.s32 %v1828, 2
        %vm1830 = vcmp.gt.s32.totalorder 0, %v1829
        %v1831 = vsel %vm1830, 0, %v1829
        %v1832 = vsub.s32 32, %v1831
        %v1833 = vshll.u32 %v1824, %v1831
        %v1834 = vshrl.u32 %v1816, %v1832
        %v1835 = vor.u32 %v1833, %v1834
        %v1836 = vsub.s32 4294967266, %v1831
        %v1837 = vadd.s32 %v1836, 127
        %v1838 = vshll.u32 %v1837, 23
        %v1839 = vor.u32 4788187, %v1838
        %v1840 = vand.u32 2147483647, %v1839
        %v1842 = vcvt.s32.f32 %v1835
        %v1843 = vmul.f32 %v1842, %v1840
        %v1844 = vxor.u32 %v1843, 2147483648
        %v1845 = vsel %vm1762, %v1844, %v1843
        %v1846 = vsub.s32 4, %v1822
        %v1847 = vsel %vm1762, %v1846, %v1822
        %v1848 = vsel %vm1761, %v302, %v1845
        %v1849 = vsel %vm1761, 0, %v1847
        %v1850 = vcosq.f32.pop %v1848
        %v1851 = vsinq.f32.pop %v1848
        %vm1852 = vweird.f32 %v302
        %v1853 = vadd.s32 %v1849, 3
        %v1854 = vand.u32 %v1853, 3
        %vm1855 = vcmp.lt.s32.totalorder %v1854, 2
        %vm1856 = vcmp.eq.s32.totalorder %v1854, 0
        %v1857 = vxor.u32 %v1851, 2147483648
        %v1858 = vsel %vm1856, %v1850, %v1857
        %vm1859 = vcmp.eq.s32.totalorder %v1854, 2
        %v1860 = vxor.u32 %v1850, 2147483648
        %v1861 = vsel %vm1859, %v1860, %v1851
        %v1862 = vsel %vm1855, %v1858, %v1861
        %v1863 = vsel %vm1852, nan, %v1862
        %v1864 = vand.u32 2147483647, %v303
        %vm1865 = vcmp.le.f32.partialorder %v1864, 0.7853982
        %vm1866 = vcmp.lt.s32.totalorder %v303, 0
        %v1867 = vand.u32 %v303, 2139095040
        %v1868 = vshrl.u32 %v1867, 23
        %v1869 = vsub.s32 %v1868, 127
        %v1870 = vand.u32 2147483647, %v303
        %v1871 = vand.u32 %v1870, 8388607
        %v1872 = vor.u32 %v1871, 8388608
        %v1873 = vsub.s32 0, %v1872
        %v1874 = vadd.s32 %v1869, 1
        %vm1875 = vcmp.gt.s32.totalorder %v1874, 0
        %v1876 = vsel %vm1875, %v1874, 0
        %v1877 = vshrl.u32 %v1876, 5
        %v1878 = vand.u32 %v1876, 31
        %v1879 = vsub.s32 32, %v1878
        %v1880 = vshrl.u32 683565275, %v1879
        %v1881 = vshll.u32 683565275, %v1878
        %v1882 = vshrl.u32 2475754826, %v1879
        %v1883 = vor.u32 %v1881, %v1882
        %v1884 = vshll.u32 2475754826, %v1878
        %v1885 = vshrl.u32 2131351028, %v1879
        %v1886 = vor.u32 %v1884, %v1885
        %v1887 = vshll.u32 2131351028, %v1878
        %v1888 = vshrl.u32 2102212464, %v1879
        %v1889 = vor.u32 %v1887, %v1888
        %v1890 = vshll.u32 2102212464, %v1878
        %v1891 = vshrl.u32 920167782, %v1879
        %v1892 = vor.u32 %v1890, %v1891
        %v1893 = vshll.u32 920167782, %v1878
        %v1894 = vshrl.u32 1326507024, %v1879
        %v1895 = vor.u32 %v1893, %v1894
        %vm1896 = vcmp.lt.s32.totalorder %v1877, 1
        %vm1897 = vcmp.lt.s32.totalorder %v1877, 2
        %vm1898 = vcmp.lt.s32.totalorder %v1877, 3
        %vm1899 = vcmp.lt.s32.totalorder %v1877, 4
        %v1900 = vsel %vm1896, %v1880, %v1883
        %v1901 = vsel %vm1899, %v1889, 2102212464
        %v1902 = vsel %vm1898, %v1886, %v1901
        %v1903 = vsel %vm1897, %v1900, %v1902
        %v1904 = vsel %vm1896, %v1883, %v1886
        %v1905 = vsel %vm1899, %v1892, 920167782
        %v1906 = vsel %vm1898, %v1889, %v1905
        %v1907 = vsel %vm1897, %v1904, %v1906
        %v1908 = vsel %vm1896, %v1886, %v1889
        %v1909 = vsel %vm1899, %v1895, 1326507024
        %v1910 = vsel %vm1898, %v1892, %v1909
        %v1911 = vsel %vm1897, %v1908, %v1910
        %v1912 = vshll.u32 %v1872, 8
        %v1913 = vmul.u32.u64.compose %v1912, %v1911
        %v1914 = vextract.low.u32 %v1913
        %v1915 = vextract.high.u32 %v1913
        %v1916 = vmul.u32.u64.compose %v1912, %v1907
        %v1917 = vextract.low.u32 %v1916
        %v1918 = vextract.high.u32 %v1916
        %v1919 = vmul.u32 %v1912, %v1903
        %v1920 = vadd.s32 %v1915, %v1917
        %vm1921 = vc.u32 %v1915, %v1917
        %v1922 = vadd.s32 %v1918, 1
        %v1923 = vsel %vm1921, %v1922, %v1918
        %v1924 = vadd.s32 %v1919, %v1923
        %v1925 = vadd.s32 %v1924, 536870912
        %v1926 = vshrl.u32 %v1925, 30
        %v1927 = vshll.u32 %v1926, 30
        %v1928 = vsub.s32 %v1924, %v1927
        %vm1929 = vcmp.lt.s32.totalorder %v1928, 0
        %v1930 = vsub.s32 0, %v1928
        %v1931 = vsel %vm1929, %v1930, %v1928
        %v1932 = vclz %v1931
        %v1933 = vsub.s32 %v1932, 2
        %vm1934 = vcmp.gt.s32.totalorder 0, %v1933
        %v1935 = vsel %vm1934, 0, %v1933
        %v1936 = vsub.s32 32, %v1935
        %v1937 = vshll.u32 %v1928, %v1935
        %v1938 = vshrl.u32 %v1920, %v1936
        %v1939 = vor.u32 %v1937, %v1938
        %v1940 = vsub.s32 4294967266, %v1935
        %v1941 = vadd.s32 %v1940, 127
        %v1942 = vshll.u32 %v1941, 23
        %v1943 = vor.u32 4788187, %v1942
        %v1944 = vand.u32 2147483647, %v1943
        %v1946 = vcvt.s32.f32 %v1939
        %v1947 = vmul.f32 %v1946, %v1944
        %v1948 = vxor.u32 %v1947, 2147483648
        %v1949 = vsel %vm1866, %v1948, %v1947
        %v1950 = vsub.s32 4, %v1926
        %v1951 = vsel %vm1866, %v1950, %v1926
        %v1952 = vsel %vm1865, %v303, %v1949
        %v1953 = vsel %vm1865, 0, %v1951
        %v1954 = vcosq.f32.pop %v1952
        %v1955 = vsinq.f32.pop %v1952
        %vm1956 = vweird.f32 %v303
        %v1957 = vadd.s32 %v1953, 3
        %v1958 = vand.u32 %v1957, 3
        %vm1959 = vcmp.lt.s32.totalorder %v1958, 2
        %vm1960 = vcmp.eq.s32.totalorder %v1958, 0
        %v1961 = vxor.u32 %v1955, 2147483648
        %v1962 = vsel %vm1960, %v1954, %v1961
        %vm1963 = vcmp.eq.s32.totalorder %v1958, 2
        %v1964 = vxor.u32 %v1954, 2147483648
        %v1965 = vsel %vm1963, %v1964, %v1955
        %v1966 = vsel %vm1959, %v1962, %v1965
        %v1967 = vsel %vm1956, nan, %v1966
        %1968 = vst [vmem:[%s170] sm:$0xff] %v407
        %1969 = vst [vmem:[%s170 + $0x8] sm:$0xff] %v511
        %1970 = vst [vmem:[%s170 + $0x10] sm:$0xff] %v615
        %1971 = vst [vmem:[%s170 + $0x18] sm:$0xff] %v719
        %1972 = vst [vmem:[%s170 + $0x20] sm:$0xff] %v823
        %1973 = vst [vmem:[%s170 + $0x28] sm:$0xff] %v927
        %1974 = vst [vmem:[%s170 + $0x30] sm:$0xff] %v1031
        %1975 = vst [vmem:[%s170 + $0x38] sm:$0xff] %v1135
        %1976 = vst [vmem:[%s170 + $0x40] sm:$0xff] %v1239
        %1977 = vst [vmem:[%s170 + $0x48] sm:$0xff] %v1343
        %1978 = vst [vmem:[%s170 + $0x50] sm:$0xff] %v1447
        %1979 = vst [vmem:[%s170 + $0x58] sm:$0xff] %v1551
        %1980 = vst [vmem:[%s170 + $0x60] sm:$0xff] %v1655
        %1981 = vst [vmem:[%s170 + $0x68] sm:$0xff] %v1759
        %1982 = vst [vmem:[%s170 + $0x70] sm:$0xff] %v1863
        %1983 = vst [vmem:[%s170 + $0x78] sm:$0xff] %v1967
        %v1985 = vlaneseq
        %v1986 = vshrl.u32 %v1985, 7
        %v1987 = vsub.s32 0, %v1986
        %v1988 = vrot.slane %v260, %v1987
        %v1989 = vlaneseq
        %v1990 = vshrl.u32 %v1989, 7
        %v1991 = vsub.s32 1, %v1990
        %v1992 = vrot.slane %v260, %v1991
        %v1995 = vmul.f32 %v1988, %v228
        %v1996 = vmul.f32 %v1992, %v228
        %v1997 = vmul.f32 %v1988, %v230
        %v1998 = vmul.f32 %v1992, %v230
        %v1999 = vmul.f32 %v1988, %v232
        %v2000 = vmul.f32 %v1992, %v232
        %v2001 = vmul.f32 %v1988, %v234
        %v2002 = vmul.f32 %v1992, %v234
        %v2003 = vmul.f32 %v1988, %v236
        %v2004 = vmul.f32 %v1992, %v236
        %v2005 = vmul.f32 %v1988, %v238
        %v2006 = vmul.f32 %v1992, %v238
        %v2007 = vmul.f32 %v1988, %v240
        %v2008 = vmul.f32 %v1992, %v240
        %v2009 = vmul.f32 %v1988, %v242
        %v2010 = vmul.f32 %v1992, %v242
        %v2011 = vadd.f32 %v1995, %v251
        %v2012 = vadd.f32 %v1996, %v251
        %v2013 = vadd.f32 %v1997, %v252
        %v2014 = vadd.f32 %v1998, %v252
        %v2015 = vadd.f32 %v1999, %v253
        %v2016 = vadd.f32 %v2000, %v253
        %v2017 = vadd.f32 %v2001, %v254
        %v2018 = vadd.f32 %v2002, %v254
        %v2019 = vadd.f32 %v2003, %v255
        %v2020 = vadd.f32 %v2004, %v255
        %v2021 = vadd.f32 %v2005, %v256
        %v2022 = vadd.f32 %v2006, %v256
        %v2023 = vadd.f32 %v2007, %v257
        %v2024 = vadd.f32 %v2008, %v257
        %v2025 = vadd.f32 %v2009, %v258
        %v2026 = vadd.f32 %v2010, %v258
        %v2027 = vand.u32 2147483647, %v2011
        %vm2028 = vcmp.le.f32.partialorder %v2027, 0.7853982
        %vm2029 = vcmp.lt.s32.totalorder %v2011, 0
        %v2030 = vand.u32 %v2011, 2139095040
        %v2031 = vshrl.u32 %v2030, 23
        %v2032 = vsub.s32 %v2031, 127
        %v2033 = vand.u32 2147483647, %v2011
        %v2034 = vand.u32 %v2033, 8388607
        %v2035 = vor.u32 %v2034, 8388608
        %v2036 = vsub.s32 0, %v2035
        %v2037 = vadd.s32 %v2032, 1
        %vm2038 = vcmp.gt.s32.totalorder %v2037, 0
        %v2039 = vsel %vm2038, %v2037, 0
        %v2040 = vshrl.u32 %v2039, 5
        %v2041 = vand.u32 %v2039, 31
        %v2042 = vsub.s32 32, %v2041
        %v2043 = vshrl.u32 683565275, %v2042
        %v2044 = vshll.u32 683565275, %v2041
        %v2045 = vshrl.u32 2475754826, %v2042
        %v2046 = vor.u32 %v2044, %v2045
        %v2047 = vshll.u32 2475754826, %v2041
        %v2048 = vshrl.u32 2131351028, %v2042
        %v2049 = vor.u32 %v2047, %v2048
        %v2050 = vshll.u32 2131351028, %v2041
        %v2051 = vshrl.u32 2102212464, %v2042
        %v2052 = vor.u32 %v2050, %v2051
        %v2053 = vshll.u32 2102212464, %v2041
        %v2054 = vshrl.u32 920167782, %v2042
        %v2055 = vor.u32 %v2053, %v2054
        %v2056 = vshll.u32 920167782, %v2041
        %v2057 = vshrl.u32 1326507024, %v2042
        %v2058 = vor.u32 %v2056, %v2057
        %vm2059 = vcmp.lt.s32.totalorder %v2040, 1
        %vm2060 = vcmp.lt.s32.totalorder %v2040, 2
        %vm2061 = vcmp.lt.s32.totalorder %v2040, 3
        %vm2062 = vcmp.lt.s32.totalorder %v2040, 4
        %v2063 = vsel %vm2059, %v2043, %v2046
        %v2064 = vsel %vm2062, %v2052, 2102212464
        %v2065 = vsel %vm2061, %v2049, %v2064
        %v2066 = vsel %vm2060, %v2063, %v2065
        %v2067 = vsel %vm2059, %v2046, %v2049
        %v2068 = vsel %vm2062, %v2055, 920167782
        %v2069 = vsel %vm2061, %v2052, %v2068
        %v2070 = vsel %vm2060, %v2067, %v2069
        %v2071 = vsel %vm2059, %v2049, %v2052
        %v2072 = vsel %vm2062, %v2058, 1326507024
        %v2073 = vsel %vm2061, %v2055, %v2072
        %v2074 = vsel %vm2060, %v2071, %v2073
        %v2075 = vshll.u32 %v2035, 8
        %v2076 = vmul.u32.u64.compose %v2075, %v2074
        %v2077 = vextract.low.u32 %v2076
        %v2078 = vextract.high.u32 %v2076
        %v2079 = vmul.u32.u64.compose %v2075, %v2070
        %v2080 = vextract.low.u32 %v2079
        %v2081 = vextract.high.u32 %v2079
        %v2082 = vmul.u32 %v2075, %v2066
        %v2083 = vadd.s32 %v2078, %v2080
        %vm2084 = vc.u32 %v2078, %v2080
        %v2085 = vadd.s32 %v2081, 1
        %v2086 = vsel %vm2084, %v2085, %v2081
        %v2087 = vadd.s32 %v2082, %v2086
        %v2088 = vadd.s32 %v2087, 536870912
        %v2089 = vshrl.u32 %v2088, 30
        %v2090 = vshll.u32 %v2089, 30
        %v2091 = vsub.s32 %v2087, %v2090
        %vm2092 = vcmp.lt.s32.totalorder %v2091, 0
        %v2093 = vsub.s32 0, %v2091
        %v2094 = vsel %vm2092, %v2093, %v2091
        %v2095 = vclz %v2094
        %v2096 = vsub.s32 %v2095, 2
        %vm2097 = vcmp.gt.s32.totalorder 0, %v2096
        %v2098 = vsel %vm2097, 0, %v2096
        %v2099 = vsub.s32 32, %v2098
        %v2100 = vshll.u32 %v2091, %v2098
        %v2101 = vshrl.u32 %v2083, %v2099
        %v2102 = vor.u32 %v2100, %v2101
        %v2103 = vsub.s32 4294967266, %v2098
        %v2104 = vadd.s32 %v2103, 127
        %v2105 = vshll.u32 %v2104, 23
        %v2106 = vor.u32 4788187, %v2105
        %v2107 = vand.u32 2147483647, %v2106
        %v2109 = vcvt.s32.f32 %v2102
        %v2110 = vmul.f32 %v2109, %v2107
        %v2111 = vxor.u32 %v2110, 2147483648
        %v2112 = vsel %vm2029, %v2111, %v2110
        %v2113 = vsub.s32 4, %v2089
        %v2114 = vsel %vm2029, %v2113, %v2089
        %v2115 = vsel %vm2028, %v2011, %v2112
        %v2116 = vsel %vm2028, 0, %v2114
        %v2117 = vcosq.f32.pop %v2115
        %v2118 = vsinq.f32.pop %v2115
        %vm2119 = vweird.f32 %v2011
        %v2120 = vadd.s32 %v2116, 3
        %v2121 = vand.u32 %v2120, 3
        %vm2122 = vcmp.lt.s32.totalorder %v2121, 2
        %vm2123 = vcmp.eq.s32.totalorder %v2121, 0
        %v2124 = vxor.u32 %v2118, 2147483648
        %v2125 = vsel %vm2123, %v2117, %v2124
        %vm2126 = vcmp.eq.s32.totalorder %v2121, 2
        %v2127 = vxor.u32 %v2117, 2147483648
        %v2128 = vsel %vm2126, %v2127, %v2118
        %v2129 = vsel %vm2122, %v2125, %v2128
        %v2130 = vsel %vm2119, nan, %v2129
        %v2131 = vand.u32 2147483647, %v2012
        %vm2132 = vcmp.le.f32.partialorder %v2131, 0.7853982
        %vm2133 = vcmp.lt.s32.totalorder %v2012, 0
        %v2134 = vand.u32 %v2012, 2139095040
        %v2135 = vshrl.u32 %v2134, 23
        %v2136 = vsub.s32 %v2135, 127
        %v2137 = vand.u32 2147483647, %v2012
        %v2138 = vand.u32 %v2137, 8388607
        %v2139 = vor.u32 %v2138, 8388608
        %v2140 = vsub.s32 0, %v2139
        %v2141 = vadd.s32 %v2136, 1
        %vm2142 = vcmp.gt.s32.totalorder %v2141, 0
        %v2143 = vsel %vm2142, %v2141, 0
        %v2144 = vshrl.u32 %v2143, 5
        %v2145 = vand.u32 %v2143, 31
        %v2146 = vsub.s32 32, %v2145
        %v2147 = vshrl.u32 683565275, %v2146
        %v2148 = vshll.u32 683565275, %v2145
        %v2149 = vshrl.u32 2475754826, %v2146
        %v2150 = vor.u32 %v2148, %v2149
        %v2151 = vshll.u32 2475754826, %v2145
        %v2152 = vshrl.u32 2131351028, %v2146
        %v2153 = vor.u32 %v2151, %v2152
        %v2154 = vshll.u32 2131351028, %v2145
        %v2155 = vshrl.u32 2102212464, %v2146
        %v2156 = vor.u32 %v2154, %v2155
        %v2157 = vshll.u32 2102212464, %v2145
        %v2158 = vshrl.u32 920167782, %v2146
        %v2159 = vor.u32 %v2157, %v2158
        %v2160 = vshll.u32 920167782, %v2145
        %v2161 = vshrl.u32 1326507024, %v2146
        %v2162 = vor.u32 %v2160, %v2161
        %vm2163 = vcmp.lt.s32.totalorder %v2144, 1
        %vm2164 = vcmp.lt.s32.totalorder %v2144, 2
        %vm2165 = vcmp.lt.s32.totalorder %v2144, 3
        %vm2166 = vcmp.lt.s32.totalorder %v2144, 4
        %v2167 = vsel %vm2163, %v2147, %v2150
        %v2168 = vsel %vm2166, %v2156, 2102212464
        %v2169 = vsel %vm2165, %v2153, %v2168
        %v2170 = vsel %vm2164, %v2167, %v2169
        %v2171 = vsel %vm2163, %v2150, %v2153
        %v2172 = vsel %vm2166, %v2159, 920167782
        %v2173 = vsel %vm2165, %v2156, %v2172
        %v2174 = vsel %vm2164, %v2171, %v2173
        %v2175 = vsel %vm2163, %v2153, %v2156
        %v2176 = vsel %vm2166, %v2162, 1326507024
        %v2177 = vsel %vm2165, %v2159, %v2176
        %v2178 = vsel %vm2164, %v2175, %v2177
        %v2179 = vshll.u32 %v2139, 8
        %v2180 = vmul.u32.u64.compose %v2179, %v2178
        %v2181 = vextract.low.u32 %v2180
        %v2182 = vextract.high.u32 %v2180
        %v2183 = vmul.u32.u64.compose %v2179, %v2174
        %v2184 = vextract.low.u32 %v2183
        %v2185 = vextract.high.u32 %v2183
        %v2186 = vmul.u32 %v2179, %v2170
        %v2187 = vadd.s32 %v2182, %v2184
        %vm2188 = vc.u32 %v2182, %v2184
        %v2189 = vadd.s32 %v2185, 1
        %v2190 = vsel %vm2188, %v2189, %v2185
        %v2191 = vadd.s32 %v2186, %v2190
        %v2192 = vadd.s32 %v2191, 536870912
        %v2193 = vshrl.u32 %v2192, 30
        %v2194 = vshll.u32 %v2193, 30
        %v2195 = vsub.s32 %v2191, %v2194
        %vm2196 = vcmp.lt.s32.totalorder %v2195, 0
        %v2197 = vsub.s32 0, %v2195
        %v2198 = vsel %vm2196, %v2197, %v2195
        %v2199 = vclz %v2198
        %v2200 = vsub.s32 %v2199, 2
        %vm2201 = vcmp.gt.s32.totalorder 0, %v2200
        %v2202 = vsel %vm2201, 0, %v2200
        %v2203 = vsub.s32 32, %v2202
        %v2204 = vshll.u32 %v2195, %v2202
        %v2205 = vshrl.u32 %v2187, %v2203
        %v2206 = vor.u32 %v2204, %v2205
        %v2207 = vsub.s32 4294967266, %v2202
        %v2208 = vadd.s32 %v2207, 127
        %v2209 = vshll.u32 %v2208, 23
        %v2210 = vor.u32 4788187, %v2209
        %v2211 = vand.u32 2147483647, %v2210
        %v2213 = vcvt.s32.f32 %v2206
        %v2214 = vmul.f32 %v2213, %v2211
        %v2215 = vxor.u32 %v2214, 2147483648
        %v2216 = vsel %vm2133, %v2215, %v2214
        %v2217 = vsub.s32 4, %v2193
        %v2218 = vsel %vm2133, %v2217, %v2193
        %v2219 = vsel %vm2132, %v2012, %v2216
        %v2220 = vsel %vm2132, 0, %v2218
        %v2221 = vcosq.f32.pop %v2219
        %v2222 = vsinq.f32.pop %v2219
        %vm2223 = vweird.f32 %v2012
        %v2224 = vadd.s32 %v2220, 3
        %v2225 = vand.u32 %v2224, 3
        %vm2226 = vcmp.lt.s32.totalorder %v2225, 2
        %vm2227 = vcmp.eq.s32.totalorder %v2225, 0
        %v2228 = vxor.u32 %v2222, 2147483648
        %v2229 = vsel %vm2227, %v2221, %v2228
        %vm2230 = vcmp.eq.s32.totalorder %v2225, 2
        %v2231 = vxor.u32 %v2221, 2147483648
        %v2232 = vsel %vm2230, %v2231, %v2222
        %v2233 = vsel %vm2226, %v2229, %v2232
        %v2234 = vsel %vm2223, nan, %v2233
        %v2235 = vand.u32 2147483647, %v2013
        %vm2236 = vcmp.le.f32.partialorder %v2235, 0.7853982
        %vm2237 = vcmp.lt.s32.totalorder %v2013, 0
        %v2238 = vand.u32 %v2013, 2139095040
        %v2239 = vshrl.u32 %v2238, 23
        %v2240 = vsub.s32 %v2239, 127
        %v2241 = vand.u32 2147483647, %v2013
        %v2242 = vand.u32 %v2241, 8388607
        %v2243 = vor.u32 %v2242, 8388608
        %v2244 = vsub.s32 0, %v2243
        %v2245 = vadd.s32 %v2240, 1
        %vm2246 = vcmp.gt.s32.totalorder %v2245, 0
        %v2247 = vsel %vm2246, %v2245, 0
        %v2248 = vshrl.u32 %v2247, 5
        %v2249 = vand.u32 %v2247, 31
        %v2250 = vsub.s32 32, %v2249
        %v2251 = vshrl.u32 683565275, %v2250
        %v2252 = vshll.u32 683565275, %v2249
        %v2253 = vshrl.u32 2475754826, %v2250
        %v2254 = vor.u32 %v2252, %v2253
        %v2255 = vshll.u32 2475754826, %v2249
        %v2256 = vshrl.u32 2131351028, %v2250
        %v2257 = vor.u32 %v2255, %v2256
        %v2258 = vshll.u32 2131351028, %v2249
        %v2259 = vshrl.u32 2102212464, %v2250
        %v2260 = vor.u32 %v2258, %v2259
        %v2261 = vshll.u32 2102212464, %v2249
        %v2262 = vshrl.u32 920167782, %v2250
        %v2263 = vor.u32 %v2261, %v2262
        %v2264 = vshll.u32 920167782, %v2249
        %v2265 = vshrl.u32 1326507024, %v2250
        %v2266 = vor.u32 %v2264, %v2265
        %vm2267 = vcmp.lt.s32.totalorder %v2248, 1
        %vm2268 = vcmp.lt.s32.totalorder %v2248, 2
        %vm2269 = vcmp.lt.s32.totalorder %v2248, 3
        %vm2270 = vcmp.lt.s32.totalorder %v2248, 4
        %v2271 = vsel %vm2267, %v2251, %v2254
        %v2272 = vsel %vm2270, %v2260, 2102212464
        %v2273 = vsel %vm2269, %v2257, %v2272
        %v2274 = vsel %vm2268, %v2271, %v2273
        %v2275 = vsel %vm2267, %v2254, %v2257
        %v2276 = vsel %vm2270, %v2263, 920167782
        %v2277 = vsel %vm2269, %v2260, %v2276
        %v2278 = vsel %vm2268, %v2275, %v2277
        %v2279 = vsel %vm2267, %v2257, %v2260
        %v2280 = vsel %vm2270, %v2266, 1326507024
        %v2281 = vsel %vm2269, %v2263, %v2280
        %v2282 = vsel %vm2268, %v2279, %v2281
        %v2283 = vshll.u32 %v2243, 8
        %v2284 = vmul.u32.u64.compose %v2283, %v2282
        %v2285 = vextract.low.u32 %v2284
        %v2286 = vextract.high.u32 %v2284
        %v2287 = vmul.u32.u64.compose %v2283, %v2278
        %v2288 = vextract.low.u32 %v2287
        %v2289 = vextract.high.u32 %v2287
        %v2290 = vmul.u32 %v2283, %v2274
        %v2291 = vadd.s32 %v2286, %v2288
        %vm2292 = vc.u32 %v2286, %v2288
        %v2293 = vadd.s32 %v2289, 1
        %v2294 = vsel %vm2292, %v2293, %v2289
        %v2295 = vadd.s32 %v2290, %v2294
        %v2296 = vadd.s32 %v2295, 536870912
        %v2297 = vshrl.u32 %v2296, 30
        %v2298 = vshll.u32 %v2297, 30
        %v2299 = vsub.s32 %v2295, %v2298
        %vm2300 = vcmp.lt.s32.totalorder %v2299, 0
        %v2301 = vsub.s32 0, %v2299
        %v2302 = vsel %vm2300, %v2301, %v2299
        %v2303 = vclz %v2302
        %v2304 = vsub.s32 %v2303, 2
        %vm2305 = vcmp.gt.s32.totalorder 0, %v2304
        %v2306 = vsel %vm2305, 0, %v2304
        %v2307 = vsub.s32 32, %v2306
        %v2308 = vshll.u32 %v2299, %v2306
        %v2309 = vshrl.u32 %v2291, %v2307
        %v2310 = vor.u32 %v2308, %v2309
        %v2311 = vsub.s32 4294967266, %v2306
        %v2312 = vadd.s32 %v2311, 127
        %v2313 = vshll.u32 %v2312, 23
        %v2314 = vor.u32 4788187, %v2313
        %v2315 = vand.u32 2147483647, %v2314
        %v2317 = vcvt.s32.f32 %v2310
        %v2318 = vmul.f32 %v2317, %v2315
        %v2319 = vxor.u32 %v2318, 2147483648
        %v2320 = vsel %vm2237, %v2319, %v2318
        %v2321 = vsub.s32 4, %v2297
        %v2322 = vsel %vm2237, %v2321, %v2297
        %v2323 = vsel %vm2236, %v2013, %v2320
        %v2324 = vsel %vm2236, 0, %v2322
        %v2325 = vcosq.f32.pop %v2323
        %v2326 = vsinq.f32.pop %v2323
        %vm2327 = vweird.f32 %v2013
        %v2328 = vadd.s32 %v2324, 3
        %v2329 = vand.u32 %v2328, 3
        %vm2330 = vcmp.lt.s32.totalorder %v2329, 2
        %vm2331 = vcmp.eq.s32.totalorder %v2329, 0
        %v2332 = vxor.u32 %v2326, 2147483648
        %v2333 = vsel %vm2331, %v2325, %v2332
        %vm2334 = vcmp.eq.s32.totalorder %v2329, 2
        %v2335 = vxor.u32 %v2325, 2147483648
        %v2336 = vsel %vm2334, %v2335, %v2326
        %v2337 = vsel %vm2330, %v2333, %v2336
        %v2338 = vsel %vm2327, nan, %v2337
        %v2339 = vand.u32 2147483647, %v2014
        %vm2340 = vcmp.le.f32.partialorder %v2339, 0.7853982
        %vm2341 = vcmp.lt.s32.totalorder %v2014, 0
        %v2342 = vand.u32 %v2014, 2139095040
        %v2343 = vshrl.u32 %v2342, 23
        %v2344 = vsub.s32 %v2343, 127
        %v2345 = vand.u32 2147483647, %v2014
        %v2346 = vand.u32 %v2345, 8388607
        %v2347 = vor.u32 %v2346, 8388608
        %v2348 = vsub.s32 0, %v2347
        %v2349 = vadd.s32 %v2344, 1
        %vm2350 = vcmp.gt.s32.totalorder %v2349, 0
        %v2351 = vsel %vm2350, %v2349, 0
        %v2352 = vshrl.u32 %v2351, 5
        %v2353 = vand.u32 %v2351, 31
        %v2354 = vsub.s32 32, %v2353
        %v2355 = vshrl.u32 683565275, %v2354
        %v2356 = vshll.u32 683565275, %v2353
        %v2357 = vshrl.u32 2475754826, %v2354
        %v2358 = vor.u32 %v2356, %v2357
        %v2359 = vshll.u32 2475754826, %v2353
        %v2360 = vshrl.u32 2131351028, %v2354
        %v2361 = vor.u32 %v2359, %v2360
        %v2362 = vshll.u32 2131351028, %v2353
        %v2363 = vshrl.u32 2102212464, %v2354
        %v2364 = vor.u32 %v2362, %v2363
        %v2365 = vshll.u32 2102212464, %v2353
        %v2366 = vshrl.u32 920167782, %v2354
        %v2367 = vor.u32 %v2365, %v2366
        %v2368 = vshll.u32 920167782, %v2353
        %v2369 = vshrl.u32 1326507024, %v2354
        %v2370 = vor.u32 %v2368, %v2369
        %vm2371 = vcmp.lt.s32.totalorder %v2352, 1
        %vm2372 = vcmp.lt.s32.totalorder %v2352, 2
        %vm2373 = vcmp.lt.s32.totalorder %v2352, 3
        %vm2374 = vcmp.lt.s32.totalorder %v2352, 4
        %v2375 = vsel %vm2371, %v2355, %v2358
        %v2376 = vsel %vm2374, %v2364, 2102212464
        %v2377 = vsel %vm2373, %v2361, %v2376
        %v2378 = vsel %vm2372, %v2375, %v2377
        %v2379 = vsel %vm2371, %v2358, %v2361
        %v2380 = vsel %vm2374, %v2367, 920167782
        %v2381 = vsel %vm2373, %v2364, %v2380
        %v2382 = vsel %vm2372, %v2379, %v2381
        %v2383 = vsel %vm2371, %v2361, %v2364
        %v2384 = vsel %vm2374, %v2370, 1326507024
        %v2385 = vsel %vm2373, %v2367, %v2384
        %v2386 = vsel %vm2372, %v2383, %v2385
        %v2387 = vshll.u32 %v2347, 8
        %v2388 = vmul.u32.u64.compose %v2387, %v2386
        %v2389 = vextract.low.u32 %v2388
        %v2390 = vextract.high.u32 %v2388
        %v2391 = vmul.u32.u64.compose %v2387, %v2382
        %v2392 = vextract.low.u32 %v2391
        %v2393 = vextract.high.u32 %v2391
        %v2394 = vmul.u32 %v2387, %v2378
        %v2395 = vadd.s32 %v2390, %v2392
        %vm2396 = vc.u32 %v2390, %v2392
        %v2397 = vadd.s32 %v2393, 1
        %v2398 = vsel %vm2396, %v2397, %v2393
        %v2399 = vadd.s32 %v2394, %v2398
        %v2400 = vadd.s32 %v2399, 536870912
        %v2401 = vshrl.u32 %v2400, 30
        %v2402 = vshll.u32 %v2401, 30
        %v2403 = vsub.s32 %v2399, %v2402
        %vm2404 = vcmp.lt.s32.totalorder %v2403, 0
        %v2405 = vsub.s32 0, %v2403
        %v2406 = vsel %vm2404, %v2405, %v2403
        %v2407 = vclz %v2406
        %v2408 = vsub.s32 %v2407, 2
        %vm2409 = vcmp.gt.s32.totalorder 0, %v2408
        %v2410 = vsel %vm2409, 0, %v2408
        %v2411 = vsub.s32 32, %v2410
        %v2412 = vshll.u32 %v2403, %v2410
        %v2413 = vshrl.u32 %v2395, %v2411
        %v2414 = vor.u32 %v2412, %v2413
        %v2415 = vsub.s32 4294967266, %v2410
        %v2416 = vadd.s32 %v2415, 127
        %v2417 = vshll.u32 %v2416, 23
        %v2418 = vor.u32 4788187, %v2417
        %v2419 = vand.u32 2147483647, %v2418
        %v2421 = vcvt.s32.f32 %v2414
        %v2422 = vmul.f32 %v2421, %v2419
        %v2423 = vxor.u32 %v2422, 2147483648
        %v2424 = vsel %vm2341, %v2423, %v2422
        %v2425 = vsub.s32 4, %v2401
        %v2426 = vsel %vm2341, %v2425, %v2401
        %v2427 = vsel %vm2340, %v2014, %v2424
        %v2428 = vsel %vm2340, 0, %v2426
        %v2429 = vcosq.f32.pop %v2427
        %v2430 = vsinq.f32.pop %v2427
        %vm2431 = vweird.f32 %v2014
        %v2432 = vadd.s32 %v2428, 3
        %v2433 = vand.u32 %v2432, 3
        %vm2434 = vcmp.lt.s32.totalorder %v2433, 2
        %vm2435 = vcmp.eq.s32.totalorder %v2433, 0
        %v2436 = vxor.u32 %v2430, 2147483648
        %v2437 = vsel %vm2435, %v2429, %v2436
        %vm2438 = vcmp.eq.s32.totalorder %v2433, 2
        %v2439 = vxor.u32 %v2429, 2147483648
        %v2440 = vsel %vm2438, %v2439, %v2430
        %v2441 = vsel %vm2434, %v2437, %v2440
        %v2442 = vsel %vm2431, nan, %v2441
        %v2443 = vand.u32 2147483647, %v2015
        %vm2444 = vcmp.le.f32.partialorder %v2443, 0.7853982
        %vm2445 = vcmp.lt.s32.totalorder %v2015, 0
        %v2446 = vand.u32 %v2015, 2139095040
        %v2447 = vshrl.u32 %v2446, 23
        %v2448 = vsub.s32 %v2447, 127
        %v2449 = vand.u32 2147483647, %v2015
        %v2450 = vand.u32 %v2449, 8388607
        %v2451 = vor.u32 %v2450, 8388608
        %v2452 = vsub.s32 0, %v2451
        %v2453 = vadd.s32 %v2448, 1
        %vm2454 = vcmp.gt.s32.totalorder %v2453, 0
        %v2455 = vsel %vm2454, %v2453, 0
        %v2456 = vshrl.u32 %v2455, 5
        %v2457 = vand.u32 %v2455, 31
        %v2458 = vsub.s32 32, %v2457
        %v2459 = vshrl.u32 683565275, %v2458
        %v2460 = vshll.u32 683565275, %v2457
        %v2461 = vshrl.u32 2475754826, %v2458
        %v2462 = vor.u32 %v2460, %v2461
        %v2463 = vshll.u32 2475754826, %v2457
        %v2464 = vshrl.u32 2131351028, %v2458
        %v2465 = vor.u32 %v2463, %v2464
        %v2466 = vshll.u32 2131351028, %v2457
        %v2467 = vshrl.u32 2102212464, %v2458
        %v2468 = vor.u32 %v2466, %v2467
        %v2469 = vshll.u32 2102212464, %v2457
        %v2470 = vshrl.u32 920167782, %v2458
        %v2471 = vor.u32 %v2469, %v2470
        %v2472 = vshll.u32 920167782, %v2457
        %v2473 = vshrl.u32 1326507024, %v2458
        %v2474 = vor.u32 %v2472, %v2473
        %vm2475 = vcmp.lt.s32.totalorder %v2456, 1
        %vm2476 = vcmp.lt.s32.totalorder %v2456, 2
        %vm2477 = vcmp.lt.s32.totalorder %v2456, 3
        %vm2478 = vcmp.lt.s32.totalorder %v2456, 4
        %v2479 = vsel %vm2475, %v2459, %v2462
        %v2480 = vsel %vm2478, %v2468, 2102212464
        %v2481 = vsel %vm2477, %v2465, %v2480
        %v2482 = vsel %vm2476, %v2479, %v2481
        %v2483 = vsel %vm2475, %v2462, %v2465
        %v2484 = vsel %vm2478, %v2471, 920167782
        %v2485 = vsel %vm2477, %v2468, %v2484
        %v2486 = vsel %vm2476, %v2483, %v2485
        %v2487 = vsel %vm2475, %v2465, %v2468
        %v2488 = vsel %vm2478, %v2474, 1326507024
        %v2489 = vsel %vm2477, %v2471, %v2488
        %v2490 = vsel %vm2476, %v2487, %v2489
        %v2491 = vshll.u32 %v2451, 8
        %v2492 = vmul.u32.u64.compose %v2491, %v2490
        %v2493 = vextract.low.u32 %v2492
        %v2494 = vextract.high.u32 %v2492
        %v2495 = vmul.u32.u64.compose %v2491, %v2486
        %v2496 = vextract.low.u32 %v2495
        %v2497 = vextract.high.u32 %v2495
        %v2498 = vmul.u32 %v2491, %v2482
        %v2499 = vadd.s32 %v2494, %v2496
        %vm2500 = vc.u32 %v2494, %v2496
        %v2501 = vadd.s32 %v2497, 1
        %v2502 = vsel %vm2500, %v2501, %v2497
        %v2503 = vadd.s32 %v2498, %v2502
        %v2504 = vadd.s32 %v2503, 536870912
        %v2505 = vshrl.u32 %v2504, 30
        %v2506 = vshll.u32 %v2505, 30
        %v2507 = vsub.s32 %v2503, %v2506
        %vm2508 = vcmp.lt.s32.totalorder %v2507, 0
        %v2509 = vsub.s32 0, %v2507
        %v2510 = vsel %vm2508, %v2509, %v2507
        %v2511 = vclz %v2510
        %v2512 = vsub.s32 %v2511, 2
        %vm2513 = vcmp.gt.s32.totalorder 0, %v2512
        %v2514 = vsel %vm2513, 0, %v2512
        %v2515 = vsub.s32 32, %v2514
        %v2516 = vshll.u32 %v2507, %v2514
        %v2517 = vshrl.u32 %v2499, %v2515
        %v2518 = vor.u32 %v2516, %v2517
        %v2519 = vsub.s32 4294967266, %v2514
        %v2520 = vadd.s32 %v2519, 127
        %v2521 = vshll.u32 %v2520, 23
        %v2522 = vor.u32 4788187, %v2521
        %v2523 = vand.u32 2147483647, %v2522
        %v2525 = vcvt.s32.f32 %v2518
        %v2526 = vmul.f32 %v2525, %v2523
        %v2527 = vxor.u32 %v2526, 2147483648
        %v2528 = vsel %vm2445, %v2527, %v2526
        %v2529 = vsub.s32 4, %v2505
        %v2530 = vsel %vm2445, %v2529, %v2505
        %v2531 = vsel %vm2444, %v2015, %v2528
        %v2532 = vsel %vm2444, 0, %v2530
        %v2533 = vcosq.f32.pop %v2531
        %v2534 = vsinq.f32.pop %v2531
        %vm2535 = vweird.f32 %v2015
        %v2536 = vadd.s32 %v2532, 3
        %v2537 = vand.u32 %v2536, 3
        %vm2538 = vcmp.lt.s32.totalorder %v2537, 2
        %vm2539 = vcmp.eq.s32.totalorder %v2537, 0
        %v2540 = vxor.u32 %v2534, 2147483648
        %v2541 = vsel %vm2539, %v2533, %v2540
        %vm2542 = vcmp.eq.s32.totalorder %v2537, 2
        %v2543 = vxor.u32 %v2533, 2147483648
        %v2544 = vsel %vm2542, %v2543, %v2534
        %v2545 = vsel %vm2538, %v2541, %v2544
        %v2546 = vsel %vm2535, nan, %v2545
        %v2547 = vand.u32 2147483647, %v2016
        %vm2548 = vcmp.le.f32.partialorder %v2547, 0.7853982
        %vm2549 = vcmp.lt.s32.totalorder %v2016, 0
        %v2550 = vand.u32 %v2016, 2139095040
        %v2551 = vshrl.u32 %v2550, 23
        %v2552 = vsub.s32 %v2551, 127
        %v2553 = vand.u32 2147483647, %v2016
        %v2554 = vand.u32 %v2553, 8388607
        %v2555 = vor.u32 %v2554, 8388608
        %v2556 = vsub.s32 0, %v2555
        %v2557 = vadd.s32 %v2552, 1
        %vm2558 = vcmp.gt.s32.totalorder %v2557, 0
        %v2559 = vsel %vm2558, %v2557, 0
        %v2560 = vshrl.u32 %v2559, 5
        %v2561 = vand.u32 %v2559, 31
        %v2562 = vsub.s32 32, %v2561
        %v2563 = vshrl.u32 683565275, %v2562
        %v2564 = vshll.u32 683565275, %v2561
        %v2565 = vshrl.u32 2475754826, %v2562
        %v2566 = vor.u32 %v2564, %v2565
        %v2567 = vshll.u32 2475754826, %v2561
        %v2568 = vshrl.u32 2131351028, %v2562
        %v2569 = vor.u32 %v2567, %v2568
        %v2570 = vshll.u32 2131351028, %v2561
        %v2571 = vshrl.u32 2102212464, %v2562
        %v2572 = vor.u32 %v2570, %v2571
        %v2573 = vshll.u32 2102212464, %v2561
        %v2574 = vshrl.u32 920167782, %v2562
        %v2575 = vor.u32 %v2573, %v2574
        %v2576 = vshll.u32 920167782, %v2561
        %v2577 = vshrl.u32 1326507024, %v2562
        %v2578 = vor.u32 %v2576, %v2577
        %vm2579 = vcmp.lt.s32.totalorder %v2560, 1
        %vm2580 = vcmp.lt.s32.totalorder %v2560, 2
        %vm2581 = vcmp.lt.s32.totalorder %v2560, 3
        %vm2582 = vcmp.lt.s32.totalorder %v2560, 4
        %v2583 = vsel %vm2579, %v2563, %v2566
        %v2584 = vsel %vm2582, %v2572, 2102212464
        %v2585 = vsel %vm2581, %v2569, %v2584
        %v2586 = vsel %vm2580, %v2583, %v2585
        %v2587 = vsel %vm2579, %v2566, %v2569
        %v2588 = vsel %vm2582, %v2575, 920167782
        %v2589 = vsel %vm2581, %v2572, %v2588
        %v2590 = vsel %vm2580, %v2587, %v2589
        %v2591 = vsel %vm2579, %v2569, %v2572
        %v2592 = vsel %vm2582, %v2578, 1326507024
        %v2593 = vsel %vm2581, %v2575, %v2592
        %v2594 = vsel %vm2580, %v2591, %v2593
        %v2595 = vshll.u32 %v2555, 8
        %v2596 = vmul.u32.u64.compose %v2595, %v2594
        %v2597 = vextract.low.u32 %v2596
        %v2598 = vextract.high.u32 %v2596
        %v2599 = vmul.u32.u64.compose %v2595, %v2590
        %v2600 = vextract.low.u32 %v2599
        %v2601 = vextract.high.u32 %v2599
        %v2602 = vmul.u32 %v2595, %v2586
        %v2603 = vadd.s32 %v2598, %v2600
        %vm2604 = vc.u32 %v2598, %v2600
        %v2605 = vadd.s32 %v2601, 1
        %v2606 = vsel %vm2604, %v2605, %v2601
        %v2607 = vadd.s32 %v2602, %v2606
        %v2608 = vadd.s32 %v2607, 536870912
        %v2609 = vshrl.u32 %v2608, 30
        %v2610 = vshll.u32 %v2609, 30
        %v2611 = vsub.s32 %v2607, %v2610
        %vm2612 = vcmp.lt.s32.totalorder %v2611, 0
        %v2613 = vsub.s32 0, %v2611
        %v2614 = vsel %vm2612, %v2613, %v2611
        %v2615 = vclz %v2614
        %v2616 = vsub.s32 %v2615, 2
        %vm2617 = vcmp.gt.s32.totalorder 0, %v2616
        %v2618 = vsel %vm2617, 0, %v2616
        %v2619 = vsub.s32 32, %v2618
        %v2620 = vshll.u32 %v2611, %v2618
        %v2621 = vshrl.u32 %v2603, %v2619
        %v2622 = vor.u32 %v2620, %v2621
        %v2623 = vsub.s32 4294967266, %v2618
        %v2624 = vadd.s32 %v2623, 127
        %v2625 = vshll.u32 %v2624, 23
        %v2626 = vor.u32 4788187, %v2625
        %v2627 = vand.u32 2147483647, %v2626
        %v2629 = vcvt.s32.f32 %v2622
        %v2630 = vmul.f32 %v2629, %v2627
        %v2631 = vxor.u32 %v2630, 2147483648
        %v2632 = vsel %vm2549, %v2631, %v2630
        %v2633 = vsub.s32 4, %v2609
        %v2634 = vsel %vm2549, %v2633, %v2609
        %v2635 = vsel %vm2548, %v2016, %v2632
        %v2636 = vsel %vm2548, 0, %v2634
        %v2637 = vcosq.f32.pop %v2635
        %v2638 = vsinq.f32.pop %v2635
        %vm2639 = vweird.f32 %v2016
        %v2640 = vadd.s32 %v2636, 3
        %v2641 = vand.u32 %v2640, 3
        %vm2642 = vcmp.lt.s32.totalorder %v2641, 2
        %vm2643 = vcmp.eq.s32.totalorder %v2641, 0
        %v2644 = vxor.u32 %v2638, 2147483648
        %v2645 = vsel %vm2643, %v2637, %v2644
        %vm2646 = vcmp.eq.s32.totalorder %v2641, 2
        %v2647 = vxor.u32 %v2637, 2147483648
        %v2648 = vsel %vm2646, %v2647, %v2638
        %v2649 = vsel %vm2642, %v2645, %v2648
        %v2650 = vsel %vm2639, nan, %v2649
        %v2651 = vand.u32 2147483647, %v2017
        %vm2652 = vcmp.le.f32.partialorder %v2651, 0.7853982
        %vm2653 = vcmp.lt.s32.totalorder %v2017, 0
        %v2654 = vand.u32 %v2017, 2139095040
        %v2655 = vshrl.u32 %v2654, 23
        %v2656 = vsub.s32 %v2655, 127
        %v2657 = vand.u32 2147483647, %v2017
        %v2658 = vand.u32 %v2657, 8388607
        %v2659 = vor.u32 %v2658, 8388608
        %v2660 = vsub.s32 0, %v2659
        %v2661 = vadd.s32 %v2656, 1
        %vm2662 = vcmp.gt.s32.totalorder %v2661, 0
        %v2663 = vsel %vm2662, %v2661, 0
        %v2664 = vshrl.u32 %v2663, 5
        %v2665 = vand.u32 %v2663, 31
        %v2666 = vsub.s32 32, %v2665
        %v2667 = vshrl.u32 683565275, %v2666
        %v2668 = vshll.u32 683565275, %v2665
        %v2669 = vshrl.u32 2475754826, %v2666
        %v2670 = vor.u32 %v2668, %v2669
        %v2671 = vshll.u32 2475754826, %v2665
        %v2672 = vshrl.u32 2131351028, %v2666
        %v2673 = vor.u32 %v2671, %v2672
        %v2674 = vshll.u32 2131351028, %v2665
        %v2675 = vshrl.u32 2102212464, %v2666
        %v2676 = vor.u32 %v2674, %v2675
        %v2677 = vshll.u32 2102212464, %v2665
        %v2678 = vshrl.u32 920167782, %v2666
        %v2679 = vor.u32 %v2677, %v2678
        %v2680 = vshll.u32 920167782, %v2665
        %v2681 = vshrl.u32 1326507024, %v2666
        %v2682 = vor.u32 %v2680, %v2681
        %vm2683 = vcmp.lt.s32.totalorder %v2664, 1
        %vm2684 = vcmp.lt.s32.totalorder %v2664, 2
        %vm2685 = vcmp.lt.s32.totalorder %v2664, 3
        %vm2686 = vcmp.lt.s32.totalorder %v2664, 4
        %v2687 = vsel %vm2683, %v2667, %v2670
        %v2688 = vsel %vm2686, %v2676, 2102212464
        %v2689 = vsel %vm2685, %v2673, %v2688
        %v2690 = vsel %vm2684, %v2687, %v2689
        %v2691 = vsel %vm2683, %v2670, %v2673
        %v2692 = vsel %vm2686, %v2679, 920167782
        %v2693 = vsel %vm2685, %v2676, %v2692
        %v2694 = vsel %vm2684, %v2691, %v2693
        %v2695 = vsel %vm2683, %v2673, %v2676
        %v2696 = vsel %vm2686, %v2682, 1326507024
        %v2697 = vsel %vm2685, %v2679, %v2696
        %v2698 = vsel %vm2684, %v2695, %v2697
        %v2699 = vshll.u32 %v2659, 8
        %v2700 = vmul.u32.u64.compose %v2699, %v2698
        %v2701 = vextract.low.u32 %v2700
        %v2702 = vextract.high.u32 %v2700
        %v2703 = vmul.u32.u64.compose %v2699, %v2694
        %v2704 = vextract.low.u32 %v2703
        %v2705 = vextract.high.u32 %v2703
        %v2706 = vmul.u32 %v2699, %v2690
        %v2707 = vadd.s32 %v2702, %v2704
        %vm2708 = vc.u32 %v2702, %v2704
        %v2709 = vadd.s32 %v2705, 1
        %v2710 = vsel %vm2708, %v2709, %v2705
        %v2711 = vadd.s32 %v2706, %v2710
        %v2712 = vadd.s32 %v2711, 536870912
        %v2713 = vshrl.u32 %v2712, 30
        %v2714 = vshll.u32 %v2713, 30
        %v2715 = vsub.s32 %v2711, %v2714
        %vm2716 = vcmp.lt.s32.totalorder %v2715, 0
        %v2717 = vsub.s32 0, %v2715
        %v2718 = vsel %vm2716, %v2717, %v2715
        %v2719 = vclz %v2718
        %v2720 = vsub.s32 %v2719, 2
        %vm2721 = vcmp.gt.s32.totalorder 0, %v2720
        %v2722 = vsel %vm2721, 0, %v2720
        %v2723 = vsub.s32 32, %v2722
        %v2724 = vshll.u32 %v2715, %v2722
        %v2725 = vshrl.u32 %v2707, %v2723
        %v2726 = vor.u32 %v2724, %v2725
        %v2727 = vsub.s32 4294967266, %v2722
        %v2728 = vadd.s32 %v2727, 127
        %v2729 = vshll.u32 %v2728, 23
        %v2730 = vor.u32 4788187, %v2729
        %v2731 = vand.u32 2147483647, %v2730
        %v2733 = vcvt.s32.f32 %v2726
        %v2734 = vmul.f32 %v2733, %v2731
        %v2735 = vxor.u32 %v2734, 2147483648
        %v2736 = vsel %vm2653, %v2735, %v2734
        %v2737 = vsub.s32 4, %v2713
        %v2738 = vsel %vm2653, %v2737, %v2713
        %v2739 = vsel %vm2652, %v2017, %v2736
        %v2740 = vsel %vm2652, 0, %v2738
        %v2741 = vcosq.f32.pop %v2739
        %v2742 = vsinq.f32.pop %v2739
        %vm2743 = vweird.f32 %v2017
        %v2744 = vadd.s32 %v2740, 3
        %v2745 = vand.u32 %v2744, 3
        %vm2746 = vcmp.lt.s32.totalorder %v2745, 2
        %vm2747 = vcmp.eq.s32.totalorder %v2745, 0
        %v2748 = vxor.u32 %v2742, 2147483648
        %v2749 = vsel %vm2747, %v2741, %v2748
        %vm2750 = vcmp.eq.s32.totalorder %v2745, 2
        %v2751 = vxor.u32 %v2741, 2147483648
        %v2752 = vsel %vm2750, %v2751, %v2742
        %v2753 = vsel %vm2746, %v2749, %v2752
        %v2754 = vsel %vm2743, nan, %v2753
        %v2755 = vand.u32 2147483647, %v2018
        %vm2756 = vcmp.le.f32.partialorder %v2755, 0.7853982
        %vm2757 = vcmp.lt.s32.totalorder %v2018, 0
        %v2758 = vand.u32 %v2018, 2139095040
        %v2759 = vshrl.u32 %v2758, 23
        %v2760 = vsub.s32 %v2759, 127
        %v2761 = vand.u32 2147483647, %v2018
        %v2762 = vand.u32 %v2761, 8388607
        %v2763 = vor.u32 %v2762, 8388608
        %v2764 = vsub.s32 0, %v2763
        %v2765 = vadd.s32 %v2760, 1
        %vm2766 = vcmp.gt.s32.totalorder %v2765, 0
        %v2767 = vsel %vm2766, %v2765, 0
        %v2768 = vshrl.u32 %v2767, 5
        %v2769 = vand.u32 %v2767, 31
        %v2770 = vsub.s32 32, %v2769
        %v2771 = vshrl.u32 683565275, %v2770
        %v2772 = vshll.u32 683565275, %v2769
        %v2773 = vshrl.u32 2475754826, %v2770
        %v2774 = vor.u32 %v2772, %v2773
        %v2775 = vshll.u32 2475754826, %v2769
        %v2776 = vshrl.u32 2131351028, %v2770
        %v2777 = vor.u32 %v2775, %v2776
        %v2778 = vshll.u32 2131351028, %v2769
        %v2779 = vshrl.u32 2102212464, %v2770
        %v2780 = vor.u32 %v2778, %v2779
        %v2781 = vshll.u32 2102212464, %v2769
        %v2782 = vshrl.u32 920167782, %v2770
        %v2783 = vor.u32 %v2781, %v2782
        %v2784 = vshll.u32 920167782, %v2769
        %v2785 = vshrl.u32 1326507024, %v2770
        %v2786 = vor.u32 %v2784, %v2785
        %vm2787 = vcmp.lt.s32.totalorder %v2768, 1
        %vm2788 = vcmp.lt.s32.totalorder %v2768, 2
        %vm2789 = vcmp.lt.s32.totalorder %v2768, 3
        %vm2790 = vcmp.lt.s32.totalorder %v2768, 4
        %v2791 = vsel %vm2787, %v2771, %v2774
        %v2792 = vsel %vm2790, %v2780, 2102212464
        %v2793 = vsel %vm2789, %v2777, %v2792
        %v2794 = vsel %vm2788, %v2791, %v2793
        %v2795 = vsel %vm2787, %v2774, %v2777
        %v2796 = vsel %vm2790, %v2783, 920167782
        %v2797 = vsel %vm2789, %v2780, %v2796
        %v2798 = vsel %vm2788, %v2795, %v2797
        %v2799 = vsel %vm2787, %v2777, %v2780
        %v2800 = vsel %vm2790, %v2786, 1326507024
        %v2801 = vsel %vm2789, %v2783, %v2800
        %v2802 = vsel %vm2788, %v2799, %v2801
        %v2803 = vshll.u32 %v2763, 8
        %v2804 = vmul.u32.u64.compose %v2803, %v2802
        %v2805 = vextract.low.u32 %v2804
        %v2806 = vextract.high.u32 %v2804
        %v2807 = vmul.u32.u64.compose %v2803, %v2798
        %v2808 = vextract.low.u32 %v2807
        %v2809 = vextract.high.u32 %v2807
        %v2810 = vmul.u32 %v2803, %v2794
        %v2811 = vadd.s32 %v2806, %v2808
        %vm2812 = vc.u32 %v2806, %v2808
        %v2813 = vadd.s32 %v2809, 1
        %v2814 = vsel %vm2812, %v2813, %v2809
        %v2815 = vadd.s32 %v2810, %v2814
        %v2816 = vadd.s32 %v2815, 536870912
        %v2817 = vshrl.u32 %v2816, 30
        %v2818 = vshll.u32 %v2817, 30
        %v2819 = vsub.s32 %v2815, %v2818
        %vm2820 = vcmp.lt.s32.totalorder %v2819, 0
        %v2821 = vsub.s32 0, %v2819
        %v2822 = vsel %vm2820, %v2821, %v2819
        %v2823 = vclz %v2822
        %v2824 = vsub.s32 %v2823, 2
        %vm2825 = vcmp.gt.s32.totalorder 0, %v2824
        %v2826 = vsel %vm2825, 0, %v2824
        %v2827 = vsub.s32 32, %v2826
        %v2828 = vshll.u32 %v2819, %v2826
        %v2829 = vshrl.u32 %v2811, %v2827
        %v2830 = vor.u32 %v2828, %v2829
        %v2831 = vsub.s32 4294967266, %v2826
        %v2832 = vadd.s32 %v2831, 127
        %v2833 = vshll.u32 %v2832, 23
        %v2834 = vor.u32 4788187, %v2833
        %v2835 = vand.u32 2147483647, %v2834
        %v2837 = vcvt.s32.f32 %v2830
        %v2838 = vmul.f32 %v2837, %v2835
        %v2839 = vxor.u32 %v2838, 2147483648
        %v2840 = vsel %vm2757, %v2839, %v2838
        %v2841 = vsub.s32 4, %v2817
        %v2842 = vsel %vm2757, %v2841, %v2817
        %v2843 = vsel %vm2756, %v2018, %v2840
        %v2844 = vsel %vm2756, 0, %v2842
        %v2845 = vcosq.f32.pop %v2843
        %v2846 = vsinq.f32.pop %v2843
        %vm2847 = vweird.f32 %v2018
        %v2848 = vadd.s32 %v2844, 3
        %v2849 = vand.u32 %v2848, 3
        %vm2850 = vcmp.lt.s32.totalorder %v2849, 2
        %vm2851 = vcmp.eq.s32.totalorder %v2849, 0
        %v2852 = vxor.u32 %v2846, 2147483648
        %v2853 = vsel %vm2851, %v2845, %v2852
        %vm2854 = vcmp.eq.s32.totalorder %v2849, 2
        %v2855 = vxor.u32 %v2845, 2147483648
        %v2856 = vsel %vm2854, %v2855, %v2846
        %v2857 = vsel %vm2850, %v2853, %v2856
        %v2858 = vsel %vm2847, nan, %v2857
        %v2859 = vand.u32 2147483647, %v2019
        %vm2860 = vcmp.le.f32.partialorder %v2859, 0.7853982
        %vm2861 = vcmp.lt.s32.totalorder %v2019, 0
        %v2862 = vand.u32 %v2019, 2139095040
        %v2863 = vshrl.u32 %v2862, 23
        %v2864 = vsub.s32 %v2863, 127
        %v2865 = vand.u32 2147483647, %v2019
        %v2866 = vand.u32 %v2865, 8388607
        %v2867 = vor.u32 %v2866, 8388608
        %v2868 = vsub.s32 0, %v2867
        %v2869 = vadd.s32 %v2864, 1
        %vm2870 = vcmp.gt.s32.totalorder %v2869, 0
        %v2871 = vsel %vm2870, %v2869, 0
        %v2872 = vshrl.u32 %v2871, 5
        %v2873 = vand.u32 %v2871, 31
        %v2874 = vsub.s32 32, %v2873
        %v2875 = vshrl.u32 683565275, %v2874
        %v2876 = vshll.u32 683565275, %v2873
        %v2877 = vshrl.u32 2475754826, %v2874
        %v2878 = vor.u32 %v2876, %v2877
        %v2879 = vshll.u32 2475754826, %v2873
        %v2880 = vshrl.u32 2131351028, %v2874
        %v2881 = vor.u32 %v2879, %v2880
        %v2882 = vshll.u32 2131351028, %v2873
        %v2883 = vshrl.u32 2102212464, %v2874
        %v2884 = vor.u32 %v2882, %v2883
        %v2885 = vshll.u32 2102212464, %v2873
        %v2886 = vshrl.u32 920167782, %v2874
        %v2887 = vor.u32 %v2885, %v2886
        %v2888 = vshll.u32 920167782, %v2873
        %v2889 = vshrl.u32 1326507024, %v2874
        %v2890 = vor.u32 %v2888, %v2889
        %vm2891 = vcmp.lt.s32.totalorder %v2872, 1
        %vm2892 = vcmp.lt.s32.totalorder %v2872, 2
        %vm2893 = vcmp.lt.s32.totalorder %v2872, 3
        %vm2894 = vcmp.lt.s32.totalorder %v2872, 4
        %v2895 = vsel %vm2891, %v2875, %v2878
        %v2896 = vsel %vm2894, %v2884, 2102212464
        %v2897 = vsel %vm2893, %v2881, %v2896
        %v2898 = vsel %vm2892, %v2895, %v2897
        %v2899 = vsel %vm2891, %v2878, %v2881
        %v2900 = vsel %vm2894, %v2887, 920167782
        %v2901 = vsel %vm2893, %v2884, %v2900
        %v2902 = vsel %vm2892, %v2899, %v2901
        %v2903 = vsel %vm2891, %v2881, %v2884
        %v2904 = vsel %vm2894, %v2890, 1326507024
        %v2905 = vsel %vm2893, %v2887, %v2904
        %v2906 = vsel %vm2892, %v2903, %v2905
        %v2907 = vshll.u32 %v2867, 8
        %v2908 = vmul.u32.u64.compose %v2907, %v2906
        %v2909 = vextract.low.u32 %v2908
        %v2910 = vextract.high.u32 %v2908
        %v2911 = vmul.u32.u64.compose %v2907, %v2902
        %v2912 = vextract.low.u32 %v2911
        %v2913 = vextract.high.u32 %v2911
        %v2914 = vmul.u32 %v2907, %v2898
        %v2915 = vadd.s32 %v2910, %v2912
        %vm2916 = vc.u32 %v2910, %v2912
        %v2917 = vadd.s32 %v2913, 1
        %v2918 = vsel %vm2916, %v2917, %v2913
        %v2919 = vadd.s32 %v2914, %v2918
        %v2920 = vadd.s32 %v2919, 536870912
        %v2921 = vshrl.u32 %v2920, 30
        %v2922 = vshll.u32 %v2921, 30
        %v2923 = vsub.s32 %v2919, %v2922
        %vm2924 = vcmp.lt.s32.totalorder %v2923, 0
        %v2925 = vsub.s32 0, %v2923
        %v2926 = vsel %vm2924, %v2925, %v2923
        %v2927 = vclz %v2926
        %v2928 = vsub.s32 %v2927, 2
        %vm2929 = vcmp.gt.s32.totalorder 0, %v2928
        %v2930 = vsel %vm2929, 0, %v2928
        %v2931 = vsub.s32 32, %v2930
        %v2932 = vshll.u32 %v2923, %v2930
        %v2933 = vshrl.u32 %v2915, %v2931
        %v2934 = vor.u32 %v2932, %v2933
        %v2935 = vsub.s32 4294967266, %v2930
        %v2936 = vadd.s32 %v2935, 127
        %v2937 = vshll.u32 %v2936, 23
        %v2938 = vor.u32 4788187, %v2937
        %v2939 = vand.u32 2147483647, %v2938
        %v2941 = vcvt.s32.f32 %v2934
        %v2942 = vmul.f32 %v2941, %v2939
        %v2943 = vxor.u32 %v2942, 2147483648
        %v2944 = vsel %vm2861, %v2943, %v2942
        %v2945 = vsub.s32 4, %v2921
        %v2946 = vsel %vm2861, %v2945, %v2921
        %v2947 = vsel %vm2860, %v2019, %v2944
        %v2948 = vsel %vm2860, 0, %v2946
        %v2949 = vcosq.f32.pop %v2947
        %v2950 = vsinq.f32.pop %v2947
        %vm2951 = vweird.f32 %v2019
        %v2952 = vadd.s32 %v2948, 3
        %v2953 = vand.u32 %v2952, 3
        %vm2954 = vcmp.lt.s32.totalorder %v2953, 2
        %vm2955 = vcmp.eq.s32.totalorder %v2953, 0
        %v2956 = vxor.u32 %v2950, 2147483648
        %v2957 = vsel %vm2955, %v2949, %v2956
        %vm2958 = vcmp.eq.s32.totalorder %v2953, 2
        %v2959 = vxor.u32 %v2949, 2147483648
        %v2960 = vsel %vm2958, %v2959, %v2950
        %v2961 = vsel %vm2954, %v2957, %v2960
        %v2962 = vsel %vm2951, nan, %v2961
        %v2963 = vand.u32 2147483647, %v2020
        %vm2964 = vcmp.le.f32.partialorder %v2963, 0.7853982
        %vm2965 = vcmp.lt.s32.totalorder %v2020, 0
        %v2966 = vand.u32 %v2020, 2139095040
        %v2967 = vshrl.u32 %v2966, 23
        %v2968 = vsub.s32 %v2967, 127
        %v2969 = vand.u32 2147483647, %v2020
        %v2970 = vand.u32 %v2969, 8388607
        %v2971 = vor.u32 %v2970, 8388608
        %v2972 = vsub.s32 0, %v2971
        %v2973 = vadd.s32 %v2968, 1
        %vm2974 = vcmp.gt.s32.totalorder %v2973, 0
        %v2975 = vsel %vm2974, %v2973, 0
        %v2976 = vshrl.u32 %v2975, 5
        %v2977 = vand.u32 %v2975, 31
        %v2978 = vsub.s32 32, %v2977
        %v2979 = vshrl.u32 683565275, %v2978
        %v2980 = vshll.u32 683565275, %v2977
        %v2981 = vshrl.u32 2475754826, %v2978
        %v2982 = vor.u32 %v2980, %v2981
        %v2983 = vshll.u32 2475754826, %v2977
        %v2984 = vshrl.u32 2131351028, %v2978
        %v2985 = vor.u32 %v2983, %v2984
        %v2986 = vshll.u32 2131351028, %v2977
        %v2987 = vshrl.u32 2102212464, %v2978
        %v2988 = vor.u32 %v2986, %v2987
        %v2989 = vshll.u32 2102212464, %v2977
        %v2990 = vshrl.u32 920167782, %v2978
        %v2991 = vor.u32 %v2989, %v2990
        %v2992 = vshll.u32 920167782, %v2977
        %v2993 = vshrl.u32 1326507024, %v2978
        %v2994 = vor.u32 %v2992, %v2993
        %vm2995 = vcmp.lt.s32.totalorder %v2976, 1
        %vm2996 = vcmp.lt.s32.totalorder %v2976, 2
        %vm2997 = vcmp.lt.s32.totalorder %v2976, 3
        %vm2998 = vcmp.lt.s32.totalorder %v2976, 4
        %v2999 = vsel %vm2995, %v2979, %v2982
        %v3000 = vsel %vm2998, %v2988, 2102212464
        %v3001 = vsel %vm2997, %v2985, %v3000
        %v3002 = vsel %vm2996, %v2999, %v3001
        %v3003 = vsel %vm2995, %v2982, %v2985
        %v3004 = vsel %vm2998, %v2991, 920167782
        %v3005 = vsel %vm2997, %v2988, %v3004
        %v3006 = vsel %vm2996, %v3003, %v3005
        %v3007 = vsel %vm2995, %v2985, %v2988
        %v3008 = vsel %vm2998, %v2994, 1326507024
        %v3009 = vsel %vm2997, %v2991, %v3008
        %v3010 = vsel %vm2996, %v3007, %v3009
        %v3011 = vshll.u32 %v2971, 8
        %v3012 = vmul.u32.u64.compose %v3011, %v3010
        %v3013 = vextract.low.u32 %v3012
        %v3014 = vextract.high.u32 %v3012
        %v3015 = vmul.u32.u64.compose %v3011, %v3006
        %v3016 = vextract.low.u32 %v3015
        %v3017 = vextract.high.u32 %v3015
        %v3018 = vmul.u32 %v3011, %v3002
        %v3019 = vadd.s32 %v3014, %v3016
        %vm3020 = vc.u32 %v3014, %v3016
        %v3021 = vadd.s32 %v3017, 1
        %v3022 = vsel %vm3020, %v3021, %v3017
        %v3023 = vadd.s32 %v3018, %v3022
        %v3024 = vadd.s32 %v3023, 536870912
        %v3025 = vshrl.u32 %v3024, 30
        %v3026 = vshll.u32 %v3025, 30
        %v3027 = vsub.s32 %v3023, %v3026
        %vm3028 = vcmp.lt.s32.totalorder %v3027, 0
        %v3029 = vsub.s32 0, %v3027
        %v3030 = vsel %vm3028, %v3029, %v3027
        %v3031 = vclz %v3030
        %v3032 = vsub.s32 %v3031, 2
        %vm3033 = vcmp.gt.s32.totalorder 0, %v3032
        %v3034 = vsel %vm3033, 0, %v3032
        %v3035 = vsub.s32 32, %v3034
        %v3036 = vshll.u32 %v3027, %v3034
        %v3037 = vshrl.u32 %v3019, %v3035
        %v3038 = vor.u32 %v3036, %v3037
        %v3039 = vsub.s32 4294967266, %v3034
        %v3040 = vadd.s32 %v3039, 127
        %v3041 = vshll.u32 %v3040, 23
        %v3042 = vor.u32 4788187, %v3041
        %v3043 = vand.u32 2147483647, %v3042
        %v3045 = vcvt.s32.f32 %v3038
        %v3046 = vmul.f32 %v3045, %v3043
        %v3047 = vxor.u32 %v3046, 2147483648
        %v3048 = vsel %vm2965, %v3047, %v3046
        %v3049 = vsub.s32 4, %v3025
        %v3050 = vsel %vm2965, %v3049, %v3025
        %v3051 = vsel %vm2964, %v2020, %v3048
        %v3052 = vsel %vm2964, 0, %v3050
        %v3053 = vcosq.f32.pop %v3051
        %v3054 = vsinq.f32.pop %v3051
        %vm3055 = vweird.f32 %v2020
        %v3056 = vadd.s32 %v3052, 3
        %v3057 = vand.u32 %v3056, 3
        %vm3058 = vcmp.lt.s32.totalorder %v3057, 2
        %vm3059 = vcmp.eq.s32.totalorder %v3057, 0
        %v3060 = vxor.u32 %v3054, 2147483648
        %v3061 = vsel %vm3059, %v3053, %v3060
        %vm3062 = vcmp.eq.s32.totalorder %v3057, 2
        %v3063 = vxor.u32 %v3053, 2147483648
        %v3064 = vsel %vm3062, %v3063, %v3054
        %v3065 = vsel %vm3058, %v3061, %v3064
        %v3066 = vsel %vm3055, nan, %v3065
        %v3067 = vand.u32 2147483647, %v2021
        %vm3068 = vcmp.le.f32.partialorder %v3067, 0.7853982
        %vm3069 = vcmp.lt.s32.totalorder %v2021, 0
        %v3070 = vand.u32 %v2021, 2139095040
        %v3071 = vshrl.u32 %v3070, 23
        %v3072 = vsub.s32 %v3071, 127
        %v3073 = vand.u32 2147483647, %v2021
        %v3074 = vand.u32 %v3073, 8388607
        %v3075 = vor.u32 %v3074, 8388608
        %v3076 = vsub.s32 0, %v3075
        %v3077 = vadd.s32 %v3072, 1
        %vm3078 = vcmp.gt.s32.totalorder %v3077, 0
        %v3079 = vsel %vm3078, %v3077, 0
        %v3080 = vshrl.u32 %v3079, 5
        %v3081 = vand.u32 %v3079, 31
        %v3082 = vsub.s32 32, %v3081
        %v3083 = vshrl.u32 683565275, %v3082
        %v3084 = vshll.u32 683565275, %v3081
        %v3085 = vshrl.u32 2475754826, %v3082
        %v3086 = vor.u32 %v3084, %v3085
        %v3087 = vshll.u32 2475754826, %v3081
        %v3088 = vshrl.u32 2131351028, %v3082
        %v3089 = vor.u32 %v3087, %v3088
        %v3090 = vshll.u32 2131351028, %v3081
        %v3091 = vshrl.u32 2102212464, %v3082
        %v3092 = vor.u32 %v3090, %v3091
        %v3093 = vshll.u32 2102212464, %v3081
        %v3094 = vshrl.u32 920167782, %v3082
        %v3095 = vor.u32 %v3093, %v3094
        %v3096 = vshll.u32 920167782, %v3081
        %v3097 = vshrl.u32 1326507024, %v3082
        %v3098 = vor.u32 %v3096, %v3097
        %vm3099 = vcmp.lt.s32.totalorder %v3080, 1
        %vm3100 = vcmp.lt.s32.totalorder %v3080, 2
        %vm3101 = vcmp.lt.s32.totalorder %v3080, 3
        %vm3102 = vcmp.lt.s32.totalorder %v3080, 4
        %v3103 = vsel %vm3099, %v3083, %v3086
        %v3104 = vsel %vm3102, %v3092, 2102212464
        %v3105 = vsel %vm3101, %v3089, %v3104
        %v3106 = vsel %vm3100, %v3103, %v3105
        %v3107 = vsel %vm3099, %v3086, %v3089
        %v3108 = vsel %vm3102, %v3095, 920167782
        %v3109 = vsel %vm3101, %v3092, %v3108
        %v3110 = vsel %vm3100, %v3107, %v3109
        %v3111 = vsel %vm3099, %v3089, %v3092
        %v3112 = vsel %vm3102, %v3098, 1326507024
        %v3113 = vsel %vm3101, %v3095, %v3112
        %v3114 = vsel %vm3100, %v3111, %v3113
        %v3115 = vshll.u32 %v3075, 8
        %v3116 = vmul.u32.u64.compose %v3115, %v3114
        %v3117 = vextract.low.u32 %v3116
        %v3118 = vextract.high.u32 %v3116
        %v3119 = vmul.u32.u64.compose %v3115, %v3110
        %v3120 = vextract.low.u32 %v3119
        %v3121 = vextract.high.u32 %v3119
        %v3122 = vmul.u32 %v3115, %v3106
        %v3123 = vadd.s32 %v3118, %v3120
        %vm3124 = vc.u32 %v3118, %v3120
        %v3125 = vadd.s32 %v3121, 1
        %v3126 = vsel %vm3124, %v3125, %v3121
        %v3127 = vadd.s32 %v3122, %v3126
        %v3128 = vadd.s32 %v3127, 536870912
        %v3129 = vshrl.u32 %v3128, 30
        %v3130 = vshll.u32 %v3129, 30
        %v3131 = vsub.s32 %v3127, %v3130
        %vm3132 = vcmp.lt.s32.totalorder %v3131, 0
        %v3133 = vsub.s32 0, %v3131
        %v3134 = vsel %vm3132, %v3133, %v3131
        %v3135 = vclz %v3134
        %v3136 = vsub.s32 %v3135, 2
        %vm3137 = vcmp.gt.s32.totalorder 0, %v3136
        %v3138 = vsel %vm3137, 0, %v3136
        %v3139 = vsub.s32 32, %v3138
        %v3140 = vshll.u32 %v3131, %v3138
        %v3141 = vshrl.u32 %v3123, %v3139
        %v3142 = vor.u32 %v3140, %v3141
        %v3143 = vsub.s32 4294967266, %v3138
        %v3144 = vadd.s32 %v3143, 127
        %v3145 = vshll.u32 %v3144, 23
        %v3146 = vor.u32 4788187, %v3145
        %v3147 = vand.u32 2147483647, %v3146
        %v3149 = vcvt.s32.f32 %v3142
        %v3150 = vmul.f32 %v3149, %v3147
        %v3151 = vxor.u32 %v3150, 2147483648
        %v3152 = vsel %vm3069, %v3151, %v3150
        %v3153 = vsub.s32 4, %v3129
        %v3154 = vsel %vm3069, %v3153, %v3129
        %v3155 = vsel %vm3068, %v2021, %v3152
        %v3156 = vsel %vm3068, 0, %v3154
        %v3157 = vcosq.f32.pop %v3155
        %v3158 = vsinq.f32.pop %v3155
        %vm3159 = vweird.f32 %v2021
        %v3160 = vadd.s32 %v3156, 3
        %v3161 = vand.u32 %v3160, 3
        %vm3162 = vcmp.lt.s32.totalorder %v3161, 2
        %vm3163 = vcmp.eq.s32.totalorder %v3161, 0
        %v3164 = vxor.u32 %v3158, 2147483648
        %v3165 = vsel %vm3163, %v3157, %v3164
        %vm3166 = vcmp.eq.s32.totalorder %v3161, 2
        %v3167 = vxor.u32 %v3157, 2147483648
        %v3168 = vsel %vm3166, %v3167, %v3158
        %v3169 = vsel %vm3162, %v3165, %v3168
        %v3170 = vsel %vm3159, nan, %v3169
        %v3171 = vand.u32 2147483647, %v2022
        %vm3172 = vcmp.le.f32.partialorder %v3171, 0.7853982
        %vm3173 = vcmp.lt.s32.totalorder %v2022, 0
        %v3174 = vand.u32 %v2022, 2139095040
        %v3175 = vshrl.u32 %v3174, 23
        %v3176 = vsub.s32 %v3175, 127
        %v3177 = vand.u32 2147483647, %v2022
        %v3178 = vand.u32 %v3177, 8388607
        %v3179 = vor.u32 %v3178, 8388608
        %v3180 = vsub.s32 0, %v3179
        %v3181 = vadd.s32 %v3176, 1
        %vm3182 = vcmp.gt.s32.totalorder %v3181, 0
        %v3183 = vsel %vm3182, %v3181, 0
        %v3184 = vshrl.u32 %v3183, 5
        %v3185 = vand.u32 %v3183, 31
        %v3186 = vsub.s32 32, %v3185
        %v3187 = vshrl.u32 683565275, %v3186
        %v3188 = vshll.u32 683565275, %v3185
        %v3189 = vshrl.u32 2475754826, %v3186
        %v3190 = vor.u32 %v3188, %v3189
        %v3191 = vshll.u32 2475754826, %v3185
        %v3192 = vshrl.u32 2131351028, %v3186
        %v3193 = vor.u32 %v3191, %v3192
        %v3194 = vshll.u32 2131351028, %v3185
        %v3195 = vshrl.u32 2102212464, %v3186
        %v3196 = vor.u32 %v3194, %v3195
        %v3197 = vshll.u32 2102212464, %v3185
        %v3198 = vshrl.u32 920167782, %v3186
        %v3199 = vor.u32 %v3197, %v3198
        %v3200 = vshll.u32 920167782, %v3185
        %v3201 = vshrl.u32 1326507024, %v3186
        %v3202 = vor.u32 %v3200, %v3201
        %vm3203 = vcmp.lt.s32.totalorder %v3184, 1
        %vm3204 = vcmp.lt.s32.totalorder %v3184, 2
        %vm3205 = vcmp.lt.s32.totalorder %v3184, 3
        %vm3206 = vcmp.lt.s32.totalorder %v3184, 4
        %v3207 = vsel %vm3203, %v3187, %v3190
        %v3208 = vsel %vm3206, %v3196, 2102212464
        %v3209 = vsel %vm3205, %v3193, %v3208
        %v3210 = vsel %vm3204, %v3207, %v3209
        %v3211 = vsel %vm3203, %v3190, %v3193
        %v3212 = vsel %vm3206, %v3199, 920167782
        %v3213 = vsel %vm3205, %v3196, %v3212
        %v3214 = vsel %vm3204, %v3211, %v3213
        %v3215 = vsel %vm3203, %v3193, %v3196
        %v3216 = vsel %vm3206, %v3202, 1326507024
        %v3217 = vsel %vm3205, %v3199, %v3216
        %v3218 = vsel %vm3204, %v3215, %v3217
        %v3219 = vshll.u32 %v3179, 8
        %v3220 = vmul.u32.u64.compose %v3219, %v3218
        %v3221 = vextract.low.u32 %v3220
        %v3222 = vextract.high.u32 %v3220
        %v3223 = vmul.u32.u64.compose %v3219, %v3214
        %v3224 = vextract.low.u32 %v3223
        %v3225 = vextract.high.u32 %v3223
        %v3226 = vmul.u32 %v3219, %v3210
        %v3227 = vadd.s32 %v3222, %v3224
        %vm3228 = vc.u32 %v3222, %v3224
        %v3229 = vadd.s32 %v3225, 1
        %v3230 = vsel %vm3228, %v3229, %v3225
        %v3231 = vadd.s32 %v3226, %v3230
        %v3232 = vadd.s32 %v3231, 536870912
        %v3233 = vshrl.u32 %v3232, 30
        %v3234 = vshll.u32 %v3233, 30
        %v3235 = vsub.s32 %v3231, %v3234
        %vm3236 = vcmp.lt.s32.totalorder %v3235, 0
        %v3237 = vsub.s32 0, %v3235
        %v3238 = vsel %vm3236, %v3237, %v3235
        %v3239 = vclz %v3238
        %v3240 = vsub.s32 %v3239, 2
        %vm3241 = vcmp.gt.s32.totalorder 0, %v3240
        %v3242 = vsel %vm3241, 0, %v3240
        %v3243 = vsub.s32 32, %v3242
        %v3244 = vshll.u32 %v3235, %v3242
        %v3245 = vshrl.u32 %v3227, %v3243
        %v3246 = vor.u32 %v3244, %v3245
        %v3247 = vsub.s32 4294967266, %v3242
        %v3248 = vadd.s32 %v3247, 127
        %v3249 = vshll.u32 %v3248, 23
        %v3250 = vor.u32 4788187, %v3249
        %v3251 = vand.u32 2147483647, %v3250
        %v3253 = vcvt.s32.f32 %v3246
        %v3254 = vmul.f32 %v3253, %v3251
        %v3255 = vxor.u32 %v3254, 2147483648
        %v3256 = vsel %vm3173, %v3255, %v3254
        %v3257 = vsub.s32 4, %v3233
        %v3258 = vsel %vm3173, %v3257, %v3233
        %v3259 = vsel %vm3172, %v2022, %v3256
        %v3260 = vsel %vm3172, 0, %v3258
        %v3261 = vcosq.f32.pop %v3259
        %v3262 = vsinq.f32.pop %v3259
        %vm3263 = vweird.f32 %v2022
        %v3264 = vadd.s32 %v3260, 3
        %v3265 = vand.u32 %v3264, 3
        %vm3266 = vcmp.lt.s32.totalorder %v3265, 2
        %vm3267 = vcmp.eq.s32.totalorder %v3265, 0
        %v3268 = vxor.u32 %v3262, 2147483648
        %v3269 = vsel %vm3267, %v3261, %v3268
        %vm3270 = vcmp.eq.s32.totalorder %v3265, 2
        %v3271 = vxor.u32 %v3261, 2147483648
        %v3272 = vsel %vm3270, %v3271, %v3262
        %v3273 = vsel %vm3266, %v3269, %v3272
        %v3274 = vsel %vm3263, nan, %v3273
        %v3275 = vand.u32 2147483647, %v2023
        %vm3276 = vcmp.le.f32.partialorder %v3275, 0.7853982
        %vm3277 = vcmp.lt.s32.totalorder %v2023, 0
        %v3278 = vand.u32 %v2023, 2139095040
        %v3279 = vshrl.u32 %v3278, 23
        %v3280 = vsub.s32 %v3279, 127
        %v3281 = vand.u32 2147483647, %v2023
        %v3282 = vand.u32 %v3281, 8388607
        %v3283 = vor.u32 %v3282, 8388608
        %v3284 = vsub.s32 0, %v3283
        %v3285 = vadd.s32 %v3280, 1
        %vm3286 = vcmp.gt.s32.totalorder %v3285, 0
        %v3287 = vsel %vm3286, %v3285, 0
        %v3288 = vshrl.u32 %v3287, 5
        %v3289 = vand.u32 %v3287, 31
        %v3290 = vsub.s32 32, %v3289
        %v3291 = vshrl.u32 683565275, %v3290
        %v3292 = vshll.u32 683565275, %v3289
        %v3293 = vshrl.u32 2475754826, %v3290
        %v3294 = vor.u32 %v3292, %v3293
        %v3295 = vshll.u32 2475754826, %v3289
        %v3296 = vshrl.u32 2131351028, %v3290
        %v3297 = vor.u32 %v3295, %v3296
        %v3298 = vshll.u32 2131351028, %v3289
        %v3299 = vshrl.u32 2102212464, %v3290
        %v3300 = vor.u32 %v3298, %v3299
        %v3301 = vshll.u32 2102212464, %v3289
        %v3302 = vshrl.u32 920167782, %v3290
        %v3303 = vor.u32 %v3301, %v3302
        %v3304 = vshll.u32 920167782, %v3289
        %v3305 = vshrl.u32 1326507024, %v3290
        %v3306 = vor.u32 %v3304, %v3305
        %vm3307 = vcmp.lt.s32.totalorder %v3288, 1
        %vm3308 = vcmp.lt.s32.totalorder %v3288, 2
        %vm3309 = vcmp.lt.s32.totalorder %v3288, 3
        %vm3310 = vcmp.lt.s32.totalorder %v3288, 4
        %v3311 = vsel %vm3307, %v3291, %v3294
        %v3312 = vsel %vm3310, %v3300, 2102212464
        %v3313 = vsel %vm3309, %v3297, %v3312
        %v3314 = vsel %vm3308, %v3311, %v3313
        %v3315 = vsel %vm3307, %v3294, %v3297
        %v3316 = vsel %vm3310, %v3303, 920167782
        %v3317 = vsel %vm3309, %v3300, %v3316
        %v3318 = vsel %vm3308, %v3315, %v3317
        %v3319 = vsel %vm3307, %v3297, %v3300
        %v3320 = vsel %vm3310, %v3306, 1326507024
        %v3321 = vsel %vm3309, %v3303, %v3320
        %v3322 = vsel %vm3308, %v3319, %v3321
        %v3323 = vshll.u32 %v3283, 8
        %v3324 = vmul.u32.u64.compose %v3323, %v3322
        %v3325 = vextract.low.u32 %v3324
        %v3326 = vextract.high.u32 %v3324
        %v3327 = vmul.u32.u64.compose %v3323, %v3318
        %v3328 = vextract.low.u32 %v3327
        %v3329 = vextract.high.u32 %v3327
        %v3330 = vmul.u32 %v3323, %v3314
        %v3331 = vadd.s32 %v3326, %v3328
        %vm3332 = vc.u32 %v3326, %v3328
        %v3333 = vadd.s32 %v3329, 1
        %v3334 = vsel %vm3332, %v3333, %v3329
        %v3335 = vadd.s32 %v3330, %v3334
        %v3336 = vadd.s32 %v3335, 536870912
        %v3337 = vshrl.u32 %v3336, 30
        %v3338 = vshll.u32 %v3337, 30
        %v3339 = vsub.s32 %v3335, %v3338
        %vm3340 = vcmp.lt.s32.totalorder %v3339, 0
        %v3341 = vsub.s32 0, %v3339
        %v3342 = vsel %vm3340, %v3341, %v3339
        %v3343 = vclz %v3342
        %v3344 = vsub.s32 %v3343, 2
        %vm3345 = vcmp.gt.s32.totalorder 0, %v3344
        %v3346 = vsel %vm3345, 0, %v3344
        %v3347 = vsub.s32 32, %v3346
        %v3348 = vshll.u32 %v3339, %v3346
        %v3349 = vshrl.u32 %v3331, %v3347
        %v3350 = vor.u32 %v3348, %v3349
        %v3351 = vsub.s32 4294967266, %v3346
        %v3352 = vadd.s32 %v3351, 127
        %v3353 = vshll.u32 %v3352, 23
        %v3354 = vor.u32 4788187, %v3353
        %v3355 = vand.u32 2147483647, %v3354
        %v3357 = vcvt.s32.f32 %v3350
        %v3358 = vmul.f32 %v3357, %v3355
        %v3359 = vxor.u32 %v3358, 2147483648
        %v3360 = vsel %vm3277, %v3359, %v3358
        %v3361 = vsub.s32 4, %v3337
        %v3362 = vsel %vm3277, %v3361, %v3337
        %v3363 = vsel %vm3276, %v2023, %v3360
        %v3364 = vsel %vm3276, 0, %v3362
        %v3365 = vcosq.f32.pop %v3363
        %v3366 = vsinq.f32.pop %v3363
        %vm3367 = vweird.f32 %v2023
        %v3368 = vadd.s32 %v3364, 3
        %v3369 = vand.u32 %v3368, 3
        %vm3370 = vcmp.lt.s32.totalorder %v3369, 2
        %vm3371 = vcmp.eq.s32.totalorder %v3369, 0
        %v3372 = vxor.u32 %v3366, 2147483648
        %v3373 = vsel %vm3371, %v3365, %v3372
        %vm3374 = vcmp.eq.s32.totalorder %v3369, 2
        %v3375 = vxor.u32 %v3365, 2147483648
        %v3376 = vsel %vm3374, %v3375, %v3366
        %v3377 = vsel %vm3370, %v3373, %v3376
        %v3378 = vsel %vm3367, nan, %v3377
        %v3379 = vand.u32 2147483647, %v2024
        %vm3380 = vcmp.le.f32.partialorder %v3379, 0.7853982
        %vm3381 = vcmp.lt.s32.totalorder %v2024, 0
        %v3382 = vand.u32 %v2024, 2139095040
        %v3383 = vshrl.u32 %v3382, 23
        %v3384 = vsub.s32 %v3383, 127
        %v3385 = vand.u32 2147483647, %v2024
        %v3386 = vand.u32 %v3385, 8388607
        %v3387 = vor.u32 %v3386, 8388608
        %v3388 = vsub.s32 0, %v3387
        %v3389 = vadd.s32 %v3384, 1
        %vm3390 = vcmp.gt.s32.totalorder %v3389, 0
        %v3391 = vsel %vm3390, %v3389, 0
        %v3392 = vshrl.u32 %v3391, 5
        %v3393 = vand.u32 %v3391, 31
        %v3394 = vsub.s32 32, %v3393
        %v3395 = vshrl.u32 683565275, %v3394
        %v3396 = vshll.u32 683565275, %v3393
        %v3397 = vshrl.u32 2475754826, %v3394
        %v3398 = vor.u32 %v3396, %v3397
        %v3399 = vshll.u32 2475754826, %v3393
        %v3400 = vshrl.u32 2131351028, %v3394
        %v3401 = vor.u32 %v3399, %v3400
        %v3402 = vshll.u32 2131351028, %v3393
        %v3403 = vshrl.u32 2102212464, %v3394
        %v3404 = vor.u32 %v3402, %v3403
        %v3405 = vshll.u32 2102212464, %v3393
        %v3406 = vshrl.u32 920167782, %v3394
        %v3407 = vor.u32 %v3405, %v3406
        %v3408 = vshll.u32 920167782, %v3393
        %v3409 = vshrl.u32 1326507024, %v3394
        %v3410 = vor.u32 %v3408, %v3409
        %vm3411 = vcmp.lt.s32.totalorder %v3392, 1
        %vm3412 = vcmp.lt.s32.totalorder %v3392, 2
        %vm3413 = vcmp.lt.s32.totalorder %v3392, 3
        %vm3414 = vcmp.lt.s32.totalorder %v3392, 4
        %v3415 = vsel %vm3411, %v3395, %v3398
        %v3416 = vsel %vm3414, %v3404, 2102212464
        %v3417 = vsel %vm3413, %v3401, %v3416
        %v3418 = vsel %vm3412, %v3415, %v3417
        %v3419 = vsel %vm3411, %v3398, %v3401
        %v3420 = vsel %vm3414, %v3407, 920167782
        %v3421 = vsel %vm3413, %v3404, %v3420
        %v3422 = vsel %vm3412, %v3419, %v3421
        %v3423 = vsel %vm3411, %v3401, %v3404
        %v3424 = vsel %vm3414, %v3410, 1326507024
        %v3425 = vsel %vm3413, %v3407, %v3424
        %v3426 = vsel %vm3412, %v3423, %v3425
        %v3427 = vshll.u32 %v3387, 8
        %v3428 = vmul.u32.u64.compose %v3427, %v3426
        %v3429 = vextract.low.u32 %v3428
        %v3430 = vextract.high.u32 %v3428
        %v3431 = vmul.u32.u64.compose %v3427, %v3422
        %v3432 = vextract.low.u32 %v3431
        %v3433 = vextract.high.u32 %v3431
        %v3434 = vmul.u32 %v3427, %v3418
        %v3435 = vadd.s32 %v3430, %v3432
        %vm3436 = vc.u32 %v3430, %v3432
        %v3437 = vadd.s32 %v3433, 1
        %v3438 = vsel %vm3436, %v3437, %v3433
        %v3439 = vadd.s32 %v3434, %v3438
        %v3440 = vadd.s32 %v3439, 536870912
        %v3441 = vshrl.u32 %v3440, 30
        %v3442 = vshll.u32 %v3441, 30
        %v3443 = vsub.s32 %v3439, %v3442
        %vm3444 = vcmp.lt.s32.totalorder %v3443, 0
        %v3445 = vsub.s32 0, %v3443
        %v3446 = vsel %vm3444, %v3445, %v3443
        %v3447 = vclz %v3446
        %v3448 = vsub.s32 %v3447, 2
        %vm3449 = vcmp.gt.s32.totalorder 0, %v3448
        %v3450 = vsel %vm3449, 0, %v3448
        %v3451 = vsub.s32 32, %v3450
        %v3452 = vshll.u32 %v3443, %v3450
        %v3453 = vshrl.u32 %v3435, %v3451
        %v3454 = vor.u32 %v3452, %v3453
        %v3455 = vsub.s32 4294967266, %v3450
        %v3456 = vadd.s32 %v3455, 127
        %v3457 = vshll.u32 %v3456, 23
        %v3458 = vor.u32 4788187, %v3457
        %v3459 = vand.u32 2147483647, %v3458
        %v3461 = vcvt.s32.f32 %v3454
        %v3462 = vmul.f32 %v3461, %v3459
        %v3463 = vxor.u32 %v3462, 2147483648
        %v3464 = vsel %vm3381, %v3463, %v3462
        %v3465 = vsub.s32 4, %v3441
        %v3466 = vsel %vm3381, %v3465, %v3441
        %v3467 = vsel %vm3380, %v2024, %v3464
        %v3468 = vsel %vm3380, 0, %v3466
        %v3469 = vcosq.f32.pop %v3467
        %v3470 = vsinq.f32.pop %v3467
        %vm3471 = vweird.f32 %v2024
        %v3472 = vadd.s32 %v3468, 3
        %v3473 = vand.u32 %v3472, 3
        %vm3474 = vcmp.lt.s32.totalorder %v3473, 2
        %vm3475 = vcmp.eq.s32.totalorder %v3473, 0
        %v3476 = vxor.u32 %v3470, 2147483648
        %v3477 = vsel %vm3475, %v3469, %v3476
        %vm3478 = vcmp.eq.s32.totalorder %v3473, 2
        %v3479 = vxor.u32 %v3469, 2147483648
        %v3480 = vsel %vm3478, %v3479, %v3470
        %v3481 = vsel %vm3474, %v3477, %v3480
        %v3482 = vsel %vm3471, nan, %v3481
        %v3483 = vand.u32 2147483647, %v2025
        %vm3484 = vcmp.le.f32.partialorder %v3483, 0.7853982
        %vm3485 = vcmp.lt.s32.totalorder %v2025, 0
        %v3486 = vand.u32 %v2025, 2139095040
        %v3487 = vshrl.u32 %v3486, 23
        %v3488 = vsub.s32 %v3487, 127
        %v3489 = vand.u32 2147483647, %v2025
        %v3490 = vand.u32 %v3489, 8388607
        %v3491 = vor.u32 %v3490, 8388608
        %v3492 = vsub.s32 0, %v3491
        %v3493 = vadd.s32 %v3488, 1
        %vm3494 = vcmp.gt.s32.totalorder %v3493, 0
        %v3495 = vsel %vm3494, %v3493, 0
        %v3496 = vshrl.u32 %v3495, 5
        %v3497 = vand.u32 %v3495, 31
        %v3498 = vsub.s32 32, %v3497
        %v3499 = vshrl.u32 683565275, %v3498
        %v3500 = vshll.u32 683565275, %v3497
        %v3501 = vshrl.u32 2475754826, %v3498
        %v3502 = vor.u32 %v3500, %v3501
        %v3503 = vshll.u32 2475754826, %v3497
        %v3504 = vshrl.u32 2131351028, %v3498
        %v3505 = vor.u32 %v3503, %v3504
        %v3506 = vshll.u32 2131351028, %v3497
        %v3507 = vshrl.u32 2102212464, %v3498
        %v3508 = vor.u32 %v3506, %v3507
        %v3509 = vshll.u32 2102212464, %v3497
        %v3510 = vshrl.u32 920167782, %v3498
        %v3511 = vor.u32 %v3509, %v3510
        %v3512 = vshll.u32 920167782, %v3497
        %v3513 = vshrl.u32 1326507024, %v3498
        %v3514 = vor.u32 %v3512, %v3513
        %vm3515 = vcmp.lt.s32.totalorder %v3496, 1
        %vm3516 = vcmp.lt.s32.totalorder %v3496, 2
        %vm3517 = vcmp.lt.s32.totalorder %v3496, 3
        %vm3518 = vcmp.lt.s32.totalorder %v3496, 4
        %v3519 = vsel %vm3515, %v3499, %v3502
        %v3520 = vsel %vm3518, %v3508, 2102212464
        %v3521 = vsel %vm3517, %v3505, %v3520
        %v3522 = vsel %vm3516, %v3519, %v3521
        %v3523 = vsel %vm3515, %v3502, %v3505
        %v3524 = vsel %vm3518, %v3511, 920167782
        %v3525 = vsel %vm3517, %v3508, %v3524
        %v3526 = vsel %vm3516, %v3523, %v3525
        %v3527 = vsel %vm3515, %v3505, %v3508
        %v3528 = vsel %vm3518, %v3514, 1326507024
        %v3529 = vsel %vm3517, %v3511, %v3528
        %v3530 = vsel %vm3516, %v3527, %v3529
        %v3531 = vshll.u32 %v3491, 8
        %v3532 = vmul.u32.u64.compose %v3531, %v3530
        %v3533 = vextract.low.u32 %v3532
        %v3534 = vextract.high.u32 %v3532
        %v3535 = vmul.u32.u64.compose %v3531, %v3526
        %v3536 = vextract.low.u32 %v3535
        %v3537 = vextract.high.u32 %v3535
        %v3538 = vmul.u32 %v3531, %v3522
        %v3539 = vadd.s32 %v3534, %v3536
        %vm3540 = vc.u32 %v3534, %v3536
        %v3541 = vadd.s32 %v3537, 1
        %v3542 = vsel %vm3540, %v3541, %v3537
        %v3543 = vadd.s32 %v3538, %v3542
        %v3544 = vadd.s32 %v3543, 536870912
        %v3545 = vshrl.u32 %v3544, 30
        %v3546 = vshll.u32 %v3545, 30
        %v3547 = vsub.s32 %v3543, %v3546
        %vm3548 = vcmp.lt.s32.totalorder %v3547, 0
        %v3549 = vsub.s32 0, %v3547
        %v3550 = vsel %vm3548, %v3549, %v3547
        %v3551 = vclz %v3550
        %v3552 = vsub.s32 %v3551, 2
        %vm3553 = vcmp.gt.s32.totalorder 0, %v3552
        %v3554 = vsel %vm3553, 0, %v3552
        %v3555 = vsub.s32 32, %v3554
        %v3556 = vshll.u32 %v3547, %v3554
        %v3557 = vshrl.u32 %v3539, %v3555
        %v3558 = vor.u32 %v3556, %v3557
        %v3559 = vsub.s32 4294967266, %v3554
        %v3560 = vadd.s32 %v3559, 127
        %v3561 = vshll.u32 %v3560, 23
        %v3562 = vor.u32 4788187, %v3561
        %v3563 = vand.u32 2147483647, %v3562
        %v3565 = vcvt.s32.f32 %v3558
        %v3566 = vmul.f32 %v3565, %v3563
        %v3567 = vxor.u32 %v3566, 2147483648
        %v3568 = vsel %vm3485, %v3567, %v3566
        %v3569 = vsub.s32 4, %v3545
        %v3570 = vsel %vm3485, %v3569, %v3545
        %v3571 = vsel %vm3484, %v2025, %v3568
        %v3572 = vsel %vm3484, 0, %v3570
        %v3573 = vcosq.f32.pop %v3571
        %v3574 = vsinq.f32.pop %v3571
        %vm3575 = vweird.f32 %v2025
        %v3576 = vadd.s32 %v3572, 3
        %v3577 = vand.u32 %v3576, 3
        %vm3578 = vcmp.lt.s32.totalorder %v3577, 2
        %vm3579 = vcmp.eq.s32.totalorder %v3577, 0
        %v3580 = vxor.u32 %v3574, 2147483648
        %v3581 = vsel %vm3579, %v3573, %v3580
        %vm3582 = vcmp.eq.s32.totalorder %v3577, 2
        %v3583 = vxor.u32 %v3573, 2147483648
        %v3584 = vsel %vm3582, %v3583, %v3574
        %v3585 = vsel %vm3578, %v3581, %v3584
        %v3586 = vsel %vm3575, nan, %v3585
        %v3587 = vand.u32 2147483647, %v2026
        %vm3588 = vcmp.le.f32.partialorder %v3587, 0.7853982
        %vm3589 = vcmp.lt.s32.totalorder %v2026, 0
        %v3590 = vand.u32 %v2026, 2139095040
        %v3591 = vshrl.u32 %v3590, 23
        %v3592 = vsub.s32 %v3591, 127
        %v3593 = vand.u32 2147483647, %v2026
        %v3594 = vand.u32 %v3593, 8388607
        %v3595 = vor.u32 %v3594, 8388608
        %v3596 = vsub.s32 0, %v3595
        %v3597 = vadd.s32 %v3592, 1
        %vm3598 = vcmp.gt.s32.totalorder %v3597, 0
        %v3599 = vsel %vm3598, %v3597, 0
        %v3600 = vshrl.u32 %v3599, 5
        %v3601 = vand.u32 %v3599, 31
        %v3602 = vsub.s32 32, %v3601
        %v3603 = vshrl.u32 683565275, %v3602
        %v3604 = vshll.u32 683565275, %v3601
        %v3605 = vshrl.u32 2475754826, %v3602
        %v3606 = vor.u32 %v3604, %v3605
        %v3607 = vshll.u32 2475754826, %v3601
        %v3608 = vshrl.u32 2131351028, %v3602
        %v3609 = vor.u32 %v3607, %v3608
        %v3610 = vshll.u32 2131351028, %v3601
        %v3611 = vshrl.u32 2102212464, %v3602
        %v3612 = vor.u32 %v3610, %v3611
        %v3613 = vshll.u32 2102212464, %v3601
        %v3614 = vshrl.u32 920167782, %v3602
        %v3615 = vor.u32 %v3613, %v3614
        %v3616 = vshll.u32 920167782, %v3601
        %v3617 = vshrl.u32 1326507024, %v3602
        %v3618 = vor.u32 %v3616, %v3617
        %vm3619 = vcmp.lt.s32.totalorder %v3600, 1
        %vm3620 = vcmp.lt.s32.totalorder %v3600, 2
        %vm3621 = vcmp.lt.s32.totalorder %v3600, 3
        %vm3622 = vcmp.lt.s32.totalorder %v3600, 4
        %v3623 = vsel %vm3619, %v3603, %v3606
        %v3624 = vsel %vm3622, %v3612, 2102212464
        %v3625 = vsel %vm3621, %v3609, %v3624
        %v3626 = vsel %vm3620, %v3623, %v3625
        %v3627 = vsel %vm3619, %v3606, %v3609
        %v3628 = vsel %vm3622, %v3615, 920167782
        %v3629 = vsel %vm3621, %v3612, %v3628
        %v3630 = vsel %vm3620, %v3627, %v3629
        %v3631 = vsel %vm3619, %v3609, %v3612
        %v3632 = vsel %vm3622, %v3618, 1326507024
        %v3633 = vsel %vm3621, %v3615, %v3632
        %v3634 = vsel %vm3620, %v3631, %v3633
        %v3635 = vshll.u32 %v3595, 8
        %v3636 = vmul.u32.u64.compose %v3635, %v3634
        %v3637 = vextract.low.u32 %v3636
        %v3638 = vextract.high.u32 %v3636
        %v3639 = vmul.u32.u64.compose %v3635, %v3630
        %v3640 = vextract.low.u32 %v3639
        %v3641 = vextract.high.u32 %v3639
        %v3642 = vmul.u32 %v3635, %v3626
        %v3643 = vadd.s32 %v3638, %v3640
        %vm3644 = vc.u32 %v3638, %v3640
        %v3645 = vadd.s32 %v3641, 1
        %v3646 = vsel %vm3644, %v3645, %v3641
        %v3647 = vadd.s32 %v3642, %v3646
        %v3648 = vadd.s32 %v3647, 536870912
        %v3649 = vshrl.u32 %v3648, 30
        %v3650 = vshll.u32 %v3649, 30
        %v3651 = vsub.s32 %v3647, %v3650
        %vm3652 = vcmp.lt.s32.totalorder %v3651, 0
        %v3653 = vsub.s32 0, %v3651
        %v3654 = vsel %vm3652, %v3653, %v3651
        %v3655 = vclz %v3654
        %v3656 = vsub.s32 %v3655, 2
        %vm3657 = vcmp.gt.s32.totalorder 0, %v3656
        %v3658 = vsel %vm3657, 0, %v3656
        %v3659 = vsub.s32 32, %v3658
        %v3660 = vshll.u32 %v3651, %v3658
        %v3661 = vshrl.u32 %v3643, %v3659
        %v3662 = vor.u32 %v3660, %v3661
        %v3663 = vsub.s32 4294967266, %v3658
        %v3664 = vadd.s32 %v3663, 127
        %v3665 = vshll.u32 %v3664, 23
        %v3666 = vor.u32 4788187, %v3665
        %v3667 = vand.u32 2147483647, %v3666
        %v3669 = vcvt.s32.f32 %v3662
        %v3670 = vmul.f32 %v3669, %v3667
        %v3671 = vxor.u32 %v3670, 2147483648
        %v3672 = vsel %vm3589, %v3671, %v3670
        %v3673 = vsub.s32 4, %v3649
        %v3674 = vsel %vm3589, %v3673, %v3649
        %v3675 = vsel %vm3588, %v2026, %v3672
        %v3676 = vsel %vm3588, 0, %v3674
        %v3677 = vcosq.f32.pop %v3675
        %v3678 = vsinq.f32.pop %v3675
        %vm3679 = vweird.f32 %v2026
        %v3680 = vadd.s32 %v3676, 3
        %v3681 = vand.u32 %v3680, 3
        %vm3682 = vcmp.lt.s32.totalorder %v3681, 2
        %vm3683 = vcmp.eq.s32.totalorder %v3681, 0
        %v3684 = vxor.u32 %v3678, 2147483648
        %v3685 = vsel %vm3683, %v3677, %v3684
        %vm3686 = vcmp.eq.s32.totalorder %v3681, 2
        %v3687 = vxor.u32 %v3677, 2147483648
        %v3688 = vsel %vm3686, %v3687, %v3678
        %v3689 = vsel %vm3682, %v3685, %v3688
        %v3690 = vsel %vm3679, nan, %v3689
        %3691 = vst [vmem:[%s170 + $0x80] sm:$0xff] %v2130
        %3692 = vst [vmem:[%s170 + $0x88] sm:$0xff] %v2234
        %3693 = vst [vmem:[%s170 + $0x90] sm:$0xff] %v2338
        %3694 = vst [vmem:[%s170 + $0x98] sm:$0xff] %v2442
        %3695 = vst [vmem:[%s170 + $0xa0] sm:$0xff] %v2546
        %3696 = vst [vmem:[%s170 + $0xa8] sm:$0xff] %v2650
        %3697 = vst [vmem:[%s170 + $0xb0] sm:$0xff] %v2754
        %3698 = vst [vmem:[%s170 + $0xb8] sm:$0xff] %v2858
        %3699 = vst [vmem:[%s170 + $0xc0] sm:$0xff] %v2962
        %3700 = vst [vmem:[%s170 + $0xc8] sm:$0xff] %v3066
        %3701 = vst [vmem:[%s170 + $0xd0] sm:$0xff] %v3170
        %3702 = vst [vmem:[%s170 + $0xd8] sm:$0xff] %v3274
        %3703 = vst [vmem:[%s170 + $0xe0] sm:$0xff] %v3378
        %3704 = vst [vmem:[%s170 + $0xe8] sm:$0xff] %v3482
        %3705 = vst [vmem:[%s170 + $0xf0] sm:$0xff] %v3586
        %3706 = vst [vmem:[%s170 + $0xf8] sm:$0xff] %v3690
        %s3707 = sand.u32 %s91, 1
        %s3708 = scalar_lea.sflag [#allocation4], %s3707
        %s3709 = sand.u32 %s91, 1
        %s3710 = smul.addr %s3709, 256
        %s3711 = scalar_lea.vmem [#allocation5], %s3710
        // Predicated region
        $region33: #{tpu_custom_call.1} parent=27 // pred_check
          %p3712 = pneg %p101
        $region34: #{tpu_custom_call.1} parent=27 // pred_check_branch
          %3714 = sbr.rel (%p3712) target = $region36
        $region35: #{tpu_custom_call.1} parent=27 // pred_region
          %s3715 = smul.u32 2, %s22
          %s3717 = ssub.s32 4096, 4096
          %3718 = vsyncadd %s3708, %s3717
          %s3719 = smul.addr %s21, 32
          %s3720 = sadd.s32 %s3715, %s3719
          %s3721 = smul.addr %s3720, 128
          %s3722 = scalar_lea.hbm %s2, %s3721
          %s3723 = sshll.u32 %s3711, 4
          %s3724 = int_to_ptr.vmem [resolvable:$true] %s3723
          %3729 = dma.vmem_to_hbm [thread:$0]  %s3724, 4096, %s3722, %s3708, 256, 256, 16
        $region36: #{tpu_custom_call.1} parent=27 // pred_fallthru
          _
      $region28: #{tpu_custom_call.1} parent=5 // pred_fallthru
        _
      %p3730 = scmp.le.s32.totalorder 2, %s12
      // Predicated region
      $region37: #{tpu_custom_call.1} parent=5 // pred_check
        %p3731 = pneg %p3730
      $region38: #{tpu_custom_call.1} parent=5 // pred_check_branch
        %3733 = sbr.rel (%p3731) target = $region40
      $region39: #{tpu_custom_call.1} parent=5 // pred_region
        %s3734 = ssub.s32 %s12, 2
        // Predicated region
        $region41: #{tpu_custom_call.1} parent=39 // pred_check
          %p3735 = pneg %p107
        $region42: #{tpu_custom_call.1} parent=39 // pred_check_branch
          %3737 = sbr.rel (%p3735) target = $region44
        $region43: #{tpu_custom_call.1} parent=39 // pred_region
          %s3738 = sand.u32 %s92, 1
          %s3739 = scalar_lea.sflag [#allocation4], %s3738
          %s3740 = sand.u32 %s92, 1
          %s3741 = smul.addr %s3740, 256
          %s3742 = scalar_lea.vmem [#allocation5], %s3741
          %3743 = dma.done %s3739, 4096
        $region44: #{tpu_custom_call.1} parent=39 // pred_fallthru
          _
      $region40: #{tpu_custom_call.1} parent=5 // pred_fallthru
        _
    $region6: #{tpu_custom_call.1} parent=1 // loop_footer
      %s16 = sadd.s32 1, %s12
    $region7: #{tpu_custom_call.1} parent=1 // loop_footer_branch
      %11 = sbr.rel target = $region3
    $region8: #{tpu_custom_call.1} parent=1 // loop_exit
      _
    %3744 = vsyncpa [#allocation3], 1
    %s3745 = scalar_lea.sflag [#allocation3], 1
    %3746 = vsyncpa %s3745, 1
    %3747 = vsyncpa [#allocation4], 1
    %s3748 = scalar_lea.sflag [#allocation4], 1
    %3749 = vsyncpa %s3748, 1

</llo_original>
